<compile_context>
chip_gen: v7x
topology: tpu7x:2x2x1
jax: 0.10.0
libtpu: 0.0.40
codegen_flags: <defaults>
</compile_context>

<pallas_src>
import functools

import jax
import jax.numpy as jnp
import numpy as np
from jax.experimental import pallas as pl
from jax.experimental.pallas import tpu as pltpu


def _round_up(x, m):
    return ((x + m - 1) // m) * m


# ----------------------------- Pallas kernels ------------------------------ #

def _lstm_stack_kernel(x_ref, wih_ref, whh_ref, b_ref, hN_ref, cN_ref,
                       h_state, c_state, act, xg):
    """All LSTM layers over one (time-block, batch-block).

    x_ref   : (Tblk, Bblk, P)   bf16  time-major embedded inputs for this block
    wih_ref : (L, P, 4P)        bf16  input->gate weights (gates lane-aligned)
    whh_ref : (L, P, 4P)        bf16  hidden->gate weights
    b_ref   : (L, 1, 4P)        f32   b_ih + b_hh
    hN_ref  : (L, Bblk, P)      f32   final hidden state (written at last T block)
    cN_ref  : (L, Bblk, P)      f32   final cell state
    h_state : (L, Bblk, P)      f32   scratch: hidden carried across time blocks
    c_state : (L, Bblk, P)      f32   scratch: cell carried across time blocks
    act     : (Tblk, Bblk, P)   bf16  scratch: per-block activations (layer l -> l+1)
    xg      : (Tblk, Bblk, 4P)  f32   scratch: hoisted input projection
    """
    tblk, bblk, P = x_ref.shape
    num_layers = wih_ref.shape[0]
    t_idx = pl.program_id(1)

    @pl.when(t_idx == 0)
    def _init():
        h_state[...] = jnp.zeros_like(h_state)
        c_state[...] = jnp.zeros_like(c_state)

    unroll = True if tblk <= 16 else 8

    for l in range(num_layers):
        inp = x_ref[...] if l == 0 else act[...]          # (Tblk, Bblk, P) bf16
        whh = whh_ref[l]                                  # (P, 4P) bf16

        # Hoisted input projection: one big MXU matmul for the whole time block
        # (no sequential dependency), accumulated in f32, bias fused in.
        xg[...] = (
            jnp.dot(inp.reshape(tblk * bblk, P), wih_ref[l],
                    preferred_element_type=jnp.float32)
            + b_ref[l]
        ).reshape(tblk, bblk, 4 * P)

        def step(t, carry, l=l, whh=whh):
            h, c = carry                                   # f32 carries
            gates = xg[t] + jnp.dot(h.astype(jnp.bfloat16), whh,
                                    preferred_element_type=jnp.float32)
            i = jax.nn.sigmoid(gates[:, 0 * P:1 * P])      # lane-aligned slices
            f = jax.nn.sigmoid(gates[:, 1 * P:2 * P])
            g = jnp.tanh(gates[:, 2 * P:3 * P])
            o = jax.nn.sigmoid(gates[:, 3 * P:4 * P])
            c_new = f * c + i * g                          # cell update in f32
            h_new = o * jnp.tanh(c_new)
            if l < num_layers - 1:      # last layer: only the final step is needed
                act[t] = h_new.astype(jnp.bfloat16)
            return h_new, c_new

        hN, cN = jax.lax.fori_loop(0, tblk, step, (h_state[l], c_state[l]),
                                   unroll=unroll)
        h_state[l] = hN
        c_state[l] = cN

    @pl.when(t_idx == pl.num_programs(1) - 1)
    def _finalize():
        hN_ref[...] = h_state[...]
        cN_ref[...] = c_state[...]


def _fc_kernel(h_ref, w_ref, b_ref, o_ref):
    """Final linear layer tile: (Bpad, P) @ (P, Vblk) + (1, Vblk)."""
    o_ref[...] = (
        jnp.dot(h_ref[...], w_ref[...], preferred_element_type=jnp.float32)
        + b_ref[...]
    )


# ------------------------------ JAX wrappers ------------------------------- #

def lstm_stack(x_tm, wih, whh, b, *, bblk, tblk):
    T, Bpad, P = x_tm.shape
    L = wih.shape[0]
    n_b = Bpad // bblk
    n_t = T // tblk

    # explicit VMEM budget (re-derived per shape; capped at v7x's 64 MiB)
    vmem_need = (
        2 * tblk * bblk * P * 2            # x double-buffer (bf16)
        + 2 * L * P * 4 * P * 2            # wih + whh (bf16, resident)
        + L * 4 * P * 4                    # bias (f32)
        + 2 * 2 * L * bblk * P * 4         # hN/cN output buffers
        + 2 * L * bblk * P * 4             # h/c scratch
        + tblk * bblk * P * 2              # act scratch (bf16)
        + tblk * bblk * 4 * P * 4          # xg scratch (f32)
    )
    vmem_limit = int(min(max(vmem_need * 3 // 2 + (2 << 20), 32 << 20), 64 << 20))

    return pl.pallas_call(
        _lstm_stack_kernel,
        out_shape=(
            jax.ShapeDtypeStruct((L, Bpad, P), jnp.float32),
            jax.ShapeDtypeStruct((L, Bpad, P), jnp.float32),
        ),
        grid_spec=pltpu.PrefetchScalarGridSpec(
            num_scalar_prefetch=0,
            grid=(n_b, n_t),
            in_specs=[
                pl.BlockSpec((tblk, bblk, P), lambda bi, ti: (ti, bi, 0)),
                pl.BlockSpec((L, P, 4 * P), lambda bi, ti: (0, 0, 0)),
                pl.BlockSpec((L, P, 4 * P), lambda bi, ti: (0, 0, 0)),
                pl.BlockSpec((L, 1, 4 * P), lambda bi, ti: (0, 0, 0)),
            ],
            out_specs=(
                pl.BlockSpec((L, bblk, P), lambda bi, ti: (0, bi, 0)),
                pl.BlockSpec((L, bblk, P), lambda bi, ti: (0, bi, 0)),
            ),
            scratch_shapes=[
                pltpu.VMEM((L, bblk, P), jnp.float32),        # h_state
                pltpu.VMEM((L, bblk, P), jnp.float32),        # c_state
                pltpu.VMEM((tblk, bblk, P), jnp.bfloat16),    # act
                pltpu.VMEM((tblk, bblk, 4 * P), jnp.float32), # xg
            ],
        ),
        compiler_params=pltpu.CompilerParams(
            dimension_semantics=("parallel", "arbitrary"),
            vmem_limit_bytes=vmem_limit,
        ),
    )(x_tm, wih, whh, b)


def fc_layer(h_last, w_t, b, *, vblk):
    Bpad, P = h_last.shape
    Vpad = w_t.shape[1]
    n_v = Vpad // vblk
    return pl.pallas_call(
        _fc_kernel,
        out_shape=jax.ShapeDtypeStruct((Bpad, Vpad), jnp.float32),
        grid_spec=pltpu.PrefetchScalarGridSpec(
            num_scalar_prefetch=0,
            grid=(n_v,),
            in_specs=[
                pl.BlockSpec((Bpad, P), lambda v: (0, 0)),
                pl.BlockSpec((P, vblk), lambda v: (0, v)),
                pl.BlockSpec((1, vblk), lambda v: (0, v)),
            ],
            out_specs=pl.BlockSpec((Bpad, vblk), lambda v: (0, v)),
        ),
        compiler_params=pltpu.CompilerParams(
            dimension_semantics=("parallel",),
        ),
    )(h_last, w_t, b)


@functools.partial(jax.jit, static_argnames=("vocab_size", "hidden_dim"))
def lstm_language_model_forward(x_ids, kparams, *, vocab_size, hidden_dim):
    """Forward pass matching LSTMLanguageModel.forward(x) in eval mode.

    x_ids: (B, T) int32 token ids.
    Returns (logits (B, vocab), (h_n (L, B, H), c_n (L, B, H))).
    """
    B, T = x_ids.shape
    L, P, _ = kparams["wih"].shape
    Vpad = kparams["fc_w_t"].shape[1]

    Bpad = _round_up(B, 8)
    bblk = Bpad if Bpad <= 128 else 128
    Bpad = _round_up(Bpad, bblk)

    # time-block: largest divisor of T keeping the gate scratch modest.
    xg_budget = 8 << 20
    tblk = 1
    for cand in (128, 64, 32, 16, 8, 4, 2, 1):
        if T % cand == 0 and cand * bblk * 4 * P * 4 <= xg_budget:
            tblk = cand
            break

    # Embedding gather directly in time-major order (no big activation transpose).
    # TODO(synk): fusing this gather into the first-layer kernel via scalar-prefetch
    # row gather is possible but kept in JAX glue here.
    ids = jnp.pad(x_ids, ((0, Bpad - B), (0, 0)))            # pad batch with token 0
    x_tm = jnp.take(kparams["embedding"], ids.T, axis=0)     # (T, Bpad, P) bf16

    # TODO(synk): optional initial `hidden` argument not supported (zeros assumed).
    h_n_pad, c_n_pad = lstm_stack(x_tm, kparams["wih"], kparams["whh"],
                                  kparams["b"], bblk=bblk, tblk=tblk)

    # dropout(lstm_out) is identity in eval mode.
    # TODO(synk): training-mode dropout (stochastic mask) intentionally omitted.
    last_h = h_n_pad[L - 1].astype(jnp.bfloat16)             # == lstm_out[:, -1, :]

    vblk = next(c for c in (1024, 512, 256, 128) if Vpad % c == 0)
    logits_pad = fc_layer(last_h, kparams["fc_w_t"], kparams["fc_b"], vblk=vblk)

    logits = logits_pad[:B, :vocab_size]
    h_n = h_n_pad[:, :B, :hidden_dim]
    c_n = c_n_pad[:, :B, :hidden_dim]
    return logits, (h_n, c_n)


# --------------------------- parameter construction ------------------------ #

def init_params(key, vocab_size, embedding_dim, hidden_dim, num_layers):
    """PyTorch-layout f32 parameters (default nn.Embedding / nn.LSTM / nn.Linear init)."""
    keys = jax.random.split(key, 3 + 4 * num_layers)
    k_emb, k_fcw, k_fcb = keys[0], keys[1], keys[2]
    lstm_keys = keys[3:]

    params = {}
    params["embedding"] = jax.random.normal(
        k_emb, (vocab_size, embedding_dim), jnp.float32)

    bound = 1.0 / np.sqrt(hidden_dim)
    layers = []
    for layer in range(num_layers):
        din = embedding_dim if layer == 0 else hidden_dim
        kw_ih, kw_hh, kb_ih, kb_hh = lstm_keys[4 * layer: 4 * layer + 4]
        layers.append({
            "w_ih": jax.random.uniform(kw_ih, (4 * hidden_dim, din), jnp.float32, -bound, bound),
            "w_hh": jax.random.uniform(kw_hh, (4 * hidden_dim, hidden_dim), jnp.float32, -bound, bound),
            "b_ih": jax.random.uniform(kb_ih, (4 * hidden_dim,), jnp.float32, -bound, bound),
            "b_hh": jax.random.uniform(kb_hh, (4 * hidden_dim,), jnp.float32, -bound, bound),
        })
    params["lstm_layers"] = layers

    fc_bound = 1.0 / np.sqrt(hidden_dim)
    params["fc_w"] = jax.random.uniform(
        k_fcw, (vocab_size, hidden_dim), jnp.float32, -fc_bound, fc_bound)
    params["fc_b"] = jax.random.uniform(
        k_fcb, (vocab_size,), jnp.float32, -fc_bound, fc_bound)
    return params


def prepare_kernel_params(params, vocab_size, embedding_dim, hidden_dim):
    """Pad feature dims to multiples of 128 (lane-aligned gate slots) and cast
    MXU operands to bf16.  Padded columns/rows are zero, which keeps padded
    hidden-state columns exactly zero through the recurrence."""
    E, H, V = embedding_dim, hidden_dim, vocab_size
    P = max(_round_up(E, 128), _round_up(H, 128))
    Vpad = _round_up(V, 128)
    L = len(params["lstm_layers"])

    emb = jnp.zeros((V, P), jnp.float32).at[:, :E].set(params["embedding"])

    wih = jnp.zeros((L, P, 4 * P), jnp.float32)
    whh = jnp.zeros((L, P, 4 * P), jnp.float32)
    b = jnp.zeros((L, 1, 4 * P), jnp.float32)
    for l, lp in enumerate(params["lstm_layers"]):
        w_ih_t = lp["w_ih"].T            # (Din, 4H), PyTorch gate order i,f,g,o
        w_hh_t = lp["w_hh"].T            # (H, 4H)
        bias = lp["b_ih"] + lp["b_hh"]   # (4H,)
        din = w_ih_t.shape[0]
        for k in range(4):               # scatter each gate into a lane-aligned P slot
            wih = wih.at[l, :din, k * P:k * P + H].set(w_ih_t[:, k * H:(k + 1) * H])
            whh = whh.at[l, :H, k * P:k * P + H].set(w_hh_t[:, k * H:(k + 1) * H])
            b = b.at[l, 0, k * P:k * P + H].set(bias[k * H:(k + 1) * H])

    fc_w_t = jnp.zeros((P, Vpad), jnp.float32).at[:H, :V].set(params["fc_w"].T)
    fc_b = jnp.zeros((1, Vpad), jnp.float32).at[0, :V].set(params["fc_b"])

    return {
        "embedding": emb.astype(jnp.bfloat16),
        "wih": wih.astype(jnp.bfloat16),
        "whh": whh.astype(jnp.bfloat16),
        "b": b,                                   # bias / cell update stay f32
        "fc_w_t": fc_w_t.astype(jnp.bfloat16),
        "fc_b": fc_b,
    }


# ------------------------------ pure-JAX reference -------------------------- #

def reference_forward(x_ids, params):
    emb = jnp.take(params["embedding"], x_ids, axis=0)  # (B, T, E)
    x = emb
    h_list, c_list = [], []
    for lp in params["lstm_layers"]:
        B, T, _ = x.shape
        H = lp["w_hh"].shape[1]
        h = jnp.zeros((B, H), jnp.float32)
        c = jnp.zeros((B, H), jnp.float32)
        ys = []
        for t in range(T):
            gates = (x[:, t, :] @ lp["w_ih"].T + h @ lp["w_hh"].T
                     + lp["b_ih"] + lp["b_hh"])
            i = jax.nn.sigmoid(gates[:, 0 * H:1 * H])
            f = jax.nn.sigmoid(gates[:, 1 * H:2 * H])
            g = jnp.tanh(gates[:, 2 * H:3 * H])
            o = jax.nn.sigmoid(gates[:, 3 * H:4 * H])
            c = f * c + i * g
            h = o * jnp.tanh(c)
            ys.append(h)
        x = jnp.stack(ys, axis=1)
        h_list.append(h)
        c_list.append(c)
    logits = x[:, -1, :] @ params["fc_w"].T + params["fc_b"]
    return logits, (jnp.stack(h_list, 0), jnp.stack(c_list, 0))


# ----------------------------------- main ----------------------------------- #

if __name__ == "__main__":
    vocab_size = 64
    embedding_dim = 32
    hidden_dim = 32
    num_layers = 2
    batch = 2
    seq = 8

    root = jax.random.PRNGKey(0)
    k_params, k_ids = jax.random.split(root)

    params = init_params(k_params, vocab_size, embedding_dim, hidden_dim, num_layers)
    kparams = prepare_kernel_params(params, vocab_size, embedding_dim, hidden_dim)
    x_ids = jax.random.randint(k_ids, (batch, seq), 0, vocab_size, dtype=jnp.int32)

    logits, (h_n, c_n) = lstm_language_model_forward(
        x_ids, kparams, vocab_size=vocab_size, hidden_dim=hidden_dim)
    jax.block_until_ready((logits, h_n, c_n))

    ref_logits, (ref_h, ref_c) = reference_forward(x_ids, params)

    assert logits.shape == (batch, vocab_size)
    assert h_n.shape == (num_layers, batch, hidden_dim)
    assert c_n.shape == (num_layers, batch, hidden_dim)
    # bf16 MXU operands -> loosened tolerance vs the pure-f32 reference.
    np.testing.assert_allclose(np.asarray(logits), np.asarray(ref_logits), rtol=5e-2, atol=5e-2)
    np.testing.assert_allclose(np.asarray(h_n), np.asarray(ref_h), rtol=5e-2, atol=5e-2)
    np.testing.assert_allclose(np.asarray(c_n), np.asarray(ref_c), rtol=5e-2, atol=5e-2)

    print("KERNEL_OK")
</pallas_src>

<mosaic_0001>
module attributes {stable_mosaic.version = 11 : i64} {
  func.func @_fc_kernel(%arg0: i32, %arg1: memref<8x128xbf16, #tpu.memory_space<vmem>>, %arg2: memref<128x128xbf16, #tpu.memory_space<vmem>>, %arg3: memref<1x128xf32, #tpu.memory_space<vmem>>, %arg4: memref<8x128xf32, #tpu.memory_space<vmem>>) attributes {dimension_semantics = [#tpu.dimension_semantics<parallel>], iteration_bounds = array<i64: 1>, scalar_prefetch = 0 : i64, scratch_operands = 0 : i64, tpu.core_type = #tpu.core_type<tc>, window_params = [{pipeline_mode = #tpu.pipeline_mode<synchronous>, transform_indices = @transform_0, window_bounds = array<i64: 8, 128>}, {transform_indices = @transform_1, window_bounds = array<i64: 128, 128>}, {transform_indices = @transform_2, window_bounds = array<i64: 1, 128>}, {transform_indices = @transform_3, window_bounds = array<i64: 8, 128>}]} {
    %c0 = arith.constant 0 : index
    %c0_0 = arith.constant 0 : index
    %0 = vector.load %arg1[%c0, %c0_0] : memref<8x128xbf16, #tpu.memory_space<vmem>>, vector<8x128xbf16>
    %c0_1 = arith.constant 0 : index
    %c0_2 = arith.constant 0 : index
    %1 = vector.load %arg2[%c0_1, %c0_2] : memref<128x128xbf16, #tpu.memory_space<vmem>>, vector<128x128xbf16>
    %cst = arith.constant dense<0.000000e+00> : vector<8x128xf32>
    %2 = tpu.matmul %0, %1, %cst {dimension_numbers = #tpu.dot_dimension_numbers<[1], [0], [0], [1], [0, 0, 1, 1], [], []>} : vector<8x128xbf16>, vector<128x128xbf16>, vector<8x128xf32> -> vector<8x128xf32>
    %c0_3 = arith.constant 0 : index
    %c0_4 = arith.constant 0 : index
    %3 = vector.load %arg3[%c0_3, %c0_4] : memref<1x128xf32, #tpu.memory_space<vmem>>, vector<1x128xf32>
    %4 = vector.broadcast %3 : vector<1x128xf32> to vector<8x128xf32>
    %5 = arith.addf %2, %4 : vector<8x128xf32>
    %c0_5 = arith.constant 0 : index
    %c0_6 = arith.constant 0 : index
    %6 = vector.load %arg4[%c0_5, %c0_6] : memref<8x128xf32, #tpu.memory_space<vmem>>, vector<8x128xf32>
    tpu.vector_store %arg4[%c0_5, %c0_6], %5 {strides = array<i32>} : memref<8x128xf32, #tpu.memory_space<vmem>>, vector<8x128xf32>,
    return
  }
  func.func @transform_0(%arg0: i32) -> (i32, i32) {
    %c0_i32 = arith.constant 0 : i32
    %c0_i32_0 = arith.constant 0 : i32
    %c0_i32_1 = arith.constant 0 : i32
    return %c0_i32, %c0_i32_0 : i32, i32
  }
  func.func @transform_1(%arg0: i32) -> (i32, i32) {
    %c0_i32 = arith.constant 0 : i32
    %c0_i32_0 = arith.constant 0 : i32
    return %c0_i32, %arg0 : i32, i32
  }
  func.func @transform_2(%arg0: i32) -> (i32, i32) {
    %c0_i32 = arith.constant 0 : i32
    %c0_i32_0 = arith.constant 0 : i32
    return %c0_i32, %arg0 : i32, i32
  }
  func.func @transform_3(%arg0: i32) -> (i32, i32) {
    %c0_i32 = arith.constant 0 : i32
    %c0_i32_0 = arith.constant 0 : i32
    return %c0_i32, %arg0 : i32, i32
  }
}

module attributes {stable_mosaic.version = 11 : i64} {
  func.func @_lstm_stack_kernel(%arg0: i32, %arg1: i32, %arg2: memref<8x8x128xbf16, #tpu.memory_space<vmem>>, %arg3: memref<2x128x512xbf16, #tpu.memory_space<vmem>>, %arg4: memref<2x128x512xbf16, #tpu.memory_space<vmem>>, %arg5: memref<2x1x512xf32, #tpu.memory_space<vmem>>, %arg6: memref<2x8x128xf32, #tpu.memory_space<vmem>>, %arg7: memref<2x8x128xf32, #tpu.memory_space<vmem>>, %arg8: memref<2x8x128xf32, #tpu.memory_space<vmem>>, %arg9: memref<2x8x128xf32, #tpu.memory_space<vmem>>, %arg10: memref<8x8x128xbf16, #tpu.memory_space<vmem>>, %arg11: memref<8x8x512xf32, #tpu.memory_space<vmem>>) attributes {dimension_semantics = [#tpu.dimension_semantics<parallel>, #tpu.dimension_semantics<arbitrary>], iteration_bounds = array<i64: 1, 1>, scalar_prefetch = 0 : i64, scratch_operands = 4 : i64, tpu.core_type = #tpu.core_type<tc>, window_params = [{transform_indices = @transform_0, window_bounds = array<i64: 8, 8, 128>}, {pipeline_mode = #tpu.pipeline_mode<synchronous>, transform_indices = @transform_1, window_bounds = array<i64: 2, 128, 512>}, {pipeline_mode = #tpu.pipeline_mode<synchronous>, transform_indices = @transform_2, window_bounds = array<i64: 2, 128, 512>}, {pipeline_mode = #tpu.pipeline_mode<synchronous>, transform_indices = @transform_3, window_bounds = array<i64: 2, 1, 512>}, {transform_indices = @transform_4, window_bounds = array<i64: 2, 8, 128>}, {transform_indices = @transform_5, window_bounds = array<i64: 2, 8, 128>}]} {
    %c0_i32 = arith.constant 0 : i32
    %0 = arith.cmpi eq, %arg1, %c0_i32 : i32
    %1 = arith.extui %0 : i1 to i32
    %c0_i32_0 = arith.constant 0 : i32
    %2 = arith.cmpi ne, %1, %c0_i32_0 : i32
    scf.if %2 {
      %cst_178 = arith.constant 0.000000e+00 : f32
      %588 = vector.broadcast %cst_178 : f32 to vector<2x8x128xf32>
      %c0_179 = arith.constant 0 : index
      %c0_180 = arith.constant 0 : index
      %c0_181 = arith.constant 0 : index
      %589 = vector.load %arg8[%c0_179, %c0_180, %c0_181] : memref<2x8x128xf32, #tpu.memory_space<vmem>>, vector<2x8x128xf32>
      tpu.vector_store %arg8[%c0_179, %c0_180, %c0_181], %588 {strides = array<i32>} : memref<2x8x128xf32, #tpu.memory_space<vmem>>, vector<2x8x128xf32>,
      %cst_182 = arith.constant 0.000000e+00 : f32
      %590 = vector.broadcast %cst_182 : f32 to vector<2x8x128xf32>
      %c0_183 = arith.constant 0 : index
      %c0_184 = arith.constant 0 : index
      %c0_185 = arith.constant 0 : index
      %591 = vector.load %arg9[%c0_183, %c0_184, %c0_185] : memref<2x8x128xf32, #tpu.memory_space<vmem>>, vector<2x8x128xf32>
      tpu.vector_store %arg9[%c0_183, %c0_184, %c0_185], %590 {strides = array<i32>} : memref<2x8x128xf32, #tpu.memory_space<vmem>>, vector<2x8x128xf32>,
    } else {
    }
    %c0 = arith.constant 0 : index
    %c0_1 = arith.constant 0 : index
    %c0_2 = arith.constant 0 : index
    %3 = vector.load %arg2[%c0, %c0_1, %c0_2] : memref<8x8x128xbf16, #tpu.memory_space<vmem>>, vector<8x8x128xbf16>
    %c0_3 = arith.constant 0 : index
    %c0_4 = arith.constant 0 : index
    %c0_5 = arith.constant 0 : index
    %4 = vector.load %arg4[%c0_3, %c0_4, %c0_5] : memref<2x128x512xbf16, #tpu.memory_space<vmem>>, vector<1x128x512xbf16>
    %5 = vector.shape_cast %4 : vector<1x128x512xbf16> to vector<128x512xbf16>
    %6 = vector.shape_cast %3 : vector<8x8x128xbf16> to vector<64x128xbf16>
    %c0_6 = arith.constant 0 : index
    %c0_7 = arith.constant 0 : index
    %c0_8 = arith.constant 0 : index
    %7 = vector.load %arg3[%c0_6, %c0_7, %c0_8] : memref<2x128x512xbf16, #tpu.memory_space<vmem>>, vector<1x128x512xbf16>
    %8 = vector.shape_cast %7 : vector<1x128x512xbf16> to vector<128x512xbf16>
    %cst = arith.constant dense<0.000000e+00> : vector<64x512xf32>
    %9 = tpu.matmul %6, %8, %cst {dimension_numbers = #tpu.dot_dimension_numbers<[1], [0], [0], [1], [0, 0, 1, 1], [], []>} : vector<64x128xbf16>, vector<128x512xbf16>, vector<64x512xf32> -> vector<64x512xf32>
    %c0_9 = arith.constant 0 : index
    %c0_10 = arith.constant 0 : index
    %c0_11 = arith.constant 0 : index
    %10 = vector.load %arg5[%c0_9, %c0_10, %c0_11] : memref<2x1x512xf32, #tpu.memory_space<vmem>>, vector<1x1x512xf32>
    %11 = vector.shape_cast %10 : vector<1x1x512xf32> to vector<1x512xf32>
    %12 = vector.broadcast %11 : vector<1x512xf32> to vector<64x512xf32>
    %13 = arith.addf %9, %12 : vector<64x512xf32>
    %14 = vector.shape_cast %13 : vector<64x512xf32> to vector<8x8x512xf32>
    %c0_12 = arith.constant 0 : index
    %c0_13 = arith.constant 0 : index
    %c0_14 = arith.constant 0 : index
    %15 = vector.load %arg11[%c0_12, %c0_13, %c0_14] : memref<8x8x512xf32, #tpu.memory_space<vmem>>, vector<8x8x512xf32>
    tpu.vector_store %arg11[%c0_12, %c0_13, %c0_14], %14 {strides = array<i32>} : memref<8x8x512xf32, #tpu.memory_space<vmem>>, vector<8x8x512xf32>,
    %c0_15 = arith.constant 0 : index
    %c0_16 = arith.constant 0 : index
    %c0_17 = arith.constant 0 : index
    %16 = vector.load %arg8[%c0_15, %c0_16, %c0_17] : memref<2x8x128xf32, #tpu.memory_space<vmem>>, vector<1x8x128xf32>
    %17 = vector.shape_cast %16 : vector<1x8x128xf32> to vector<8x128xf32>
    %c0_18 = arith.constant 0 : index
    %c0_19 = arith.constant 0 : index
    %c0_20 = arith.constant 0 : index
    %18 = vector.load %arg9[%c0_18, %c0_19, %c0_20] : memref<2x8x128xf32, #tpu.memory_space<vmem>>, vector<1x8x128xf32>
    %19 = vector.shape_cast %18 : vector<1x8x128xf32> to vector<8x128xf32>
    %c0_i32_21 = arith.constant 0 : i32
    %20 = arith.index_cast %c0_i32_21 : i32 to index
    %c0_22 = arith.constant 0 : index
    %c0_23 = arith.constant 0 : index
    %21 = vector.load %arg11[%20, %c0_22, %c0_23] : memref<8x8x512xf32, #tpu.memory_space<vmem>>, vector<1x8x512xf32>
    %22 = vector.shape_cast %21 : vector<1x8x512xf32> to vector<8x512xf32>
    %23 = arith.truncf %17 : vector<8x128xf32> to vector<8x128xbf16>
    %cst_24 = arith.constant dense<0.000000e+00> : vector<8x512xf32>
    %24 = tpu.matmul %23, %5, %cst_24 {dimension_numbers = #tpu.dot_dimension_numbers<[1], [0], [0], [1], [0, 0, 1, 1], [], []>} : vector<8x128xbf16>, vector<128x512xbf16>, vector<8x512xf32> -> vector<8x512xf32>
    %25 = arith.addf %22, %24 : vector<8x512xf32>
    %26 = vector.extract_strided_slice %25 {offsets = [0, 0], sizes = [8, 128], strides = [1, 1]} : vector<8x512xf32> to vector<8x128xf32>
    %27 = arith.negf %26 : vector<8x128xf32>
    %28 = math.exp %27 : vector<8x128xf32>
    %cst_25 = arith.constant 1.000000e+00 : f32
    %29 = vector.broadcast %cst_25 : f32 to vector<8x128xf32>
    %30 = arith.addf %29, %28 : vector<8x128xf32>
    %31 = arith.divf %29, %30 : vector<8x128xf32>
    %32 = vector.extract_strided_slice %25 {offsets = [0, 128], sizes = [8, 128], strides = [1, 1]} : vector<8x512xf32> to vector<8x128xf32>
    %33 = arith.negf %32 : vector<8x128xf32>
    %34 = math.exp %33 : vector<8x128xf32>
    %cst_26 = arith.constant 1.000000e+00 : f32
    %35 = vector.broadcast %cst_26 : f32 to vector<8x128xf32>
    %36 = arith.addf %35, %34 : vector<8x128xf32>
    %37 = arith.divf %35, %36 : vector<8x128xf32>
    %38 = vector.extract_strided_slice %25 {offsets = [0, 256], sizes = [8, 128], strides = [1, 1]} : vector<8x512xf32> to vector<8x128xf32>
    %39 = math.tanh %38 : vector<8x128xf32>
    %40 = vector.extract_strided_slice %25 {offsets = [0, 384], sizes = [8, 128], strides = [1, 1]} : vector<8x512xf32> to vector<8x128xf32>
    %41 = arith.negf %40 : vector<8x128xf32>
    %42 = math.exp %41 : vector<8x128xf32>
    %cst_27 = arith.constant 1.000000e+00 : f32
    %43 = vector.broadcast %cst_27 : f32 to vector<8x128xf32>
    %44 = arith.addf %43, %42 : vector<8x128xf32>
    %45 = arith.divf %43, %44 : vector<8x128xf32>
    %46 = arith.mulf %37, %19 : vector<8x128xf32>
    %47 = arith.mulf %31, %39 : vector<8x128xf32>
    %48 = arith.addf %46, %47 : vector<8x128xf32>
    %49 = math.tanh %48 : vector<8x128xf32>
    %50 = arith.mulf %45, %49 : vector<8x128xf32>
    %51 = arith.truncf %50 : vector<8x128xf32> to vector<8x128xbf16>
    %52 = arith.index_cast %c0_i32_21 : i32 to index
    %c0_28 = arith.constant 0 : index
    %c0_29 = arith.constant 0 : index
    %53 = vector.load %arg10[%52, %c0_28, %c0_29] : memref<8x8x128xbf16, #tpu.memory_space<vmem>>, vector<1x8x128xbf16>
    %54 = vector.shape_cast %53 : vector<1x8x128xbf16> to vector<8x128xbf16>
    %55 = vector.shape_cast %51 : vector<8x128xbf16> to vector<1x8x128xbf16>
    tpu.vector_store %arg10[%52, %c0_28, %c0_29], %55 {strides = array<i32>} : memref<8x8x128xbf16, #tpu.memory_space<vmem>>, vector<1x8x128xbf16>,
    %c1_i32 = arith.constant 1 : i32
    %56 = arith.index_cast %c1_i32 : i32 to index
    %c0_30 = arith.constant 0 : index
    %c0_31 = arith.constant 0 : index
    %57 = vector.load %arg11[%56, %c0_30, %c0_31] : memref<8x8x512xf32, #tpu.memory_space<vmem>>, vector<1x8x512xf32>
    %58 = vector.shape_cast %57 : vector<1x8x512xf32> to vector<8x512xf32>
    %59 = arith.truncf %50 : vector<8x128xf32> to vector<8x128xbf16>
    %cst_32 = arith.constant dense<0.000000e+00> : vector<8x512xf32>
    %60 = tpu.matmul %59, %5, %cst_32 {dimension_numbers = #tpu.dot_dimension_numbers<[1], [0], [0], [1], [0, 0, 1, 1], [], []>} : vector<8x128xbf16>, vector<128x512xbf16>, vector<8x512xf32> -> vector<8x512xf32>
    %61 = arith.addf %58, %60 : vector<8x512xf32>
    %62 = vector.extract_strided_slice %61 {offsets = [0, 0], sizes = [8, 128], strides = [1, 1]} : vector<8x512xf32> to vector<8x128xf32>
    %63 = arith.negf %62 : vector<8x128xf32>
    %64 = math.exp %63 : vector<8x128xf32>
    %cst_33 = arith.constant 1.000000e+00 : f32
    %65 = vector.broadcast %cst_33 : f32 to vector<8x128xf32>
    %66 = arith.addf %65, %64 : vector<8x128xf32>
    %67 = arith.divf %65, %66 : vector<8x128xf32>
    %68 = vector.extract_strided_slice %61 {offsets = [0, 128], sizes = [8, 128], strides = [1, 1]} : vector<8x512xf32> to vector<8x128xf32>
    %69 = arith.negf %68 : vector<8x128xf32>
    %70 = math.exp %69 : vector<8x128xf32>
    %cst_34 = arith.constant 1.000000e+00 : f32
    %71 = vector.broadcast %cst_34 : f32 to vector<8x128xf32>
    %72 = arith.addf %71, %70 : vector<8x128xf32>
    %73 = arith.divf %71, %72 : vector<8x128xf32>
    %74 = vector.extract_strided_slice %61 {offsets = [0, 256], sizes = [8, 128], strides = [1, 1]} : vector<8x512xf32> to vector<8x128xf32>
    %75 = math.tanh %74 : vector<8x128xf32>
    %76 = vector.extract_strided_slice %61 {offsets = [0, 384], sizes = [8, 128], strides = [1, 1]} : vector<8x512xf32> to vector<8x128xf32>
    %77 = arith.negf %76 : vector<8x128xf32>
    %78 = math.exp %77 : vector<8x128xf32>
    %cst_35 = arith.constant 1.000000e+00 : f32
    %79 = vector.broadcast %cst_35 : f32 to vector<8x128xf32>
    %80 = arith.addf %79, %78 : vector<8x128xf32>
    %81 = arith.divf %79, %80 : vector<8x128xf32>
    %82 = arith.mulf %73, %48 : vector<8x128xf32>
    %83 = arith.mulf %67, %75 : vector<8x128xf32>
    %84 = arith.addf %82, %83 : vector<8x128xf32>
    %85 = math.tanh %84 : vector<8x128xf32>
    %86 = arith.mulf %81, %85 : vector<8x128xf32>
    %87 = arith.truncf %86 : vector<8x128xf32> to vector<8x128xbf16>
    %88 = arith.index_cast %c1_i32 : i32 to index
    %c0_36 = arith.constant 0 : index
    %c0_37 = arith.constant 0 : index
    %89 = vector.load %arg10[%88, %c0_36, %c0_37] : memref<8x8x128xbf16, #tpu.memory_space<vmem>>, vector<1x8x128xbf16>
    %90 = vector.shape_cast %89 : vector<1x8x128xbf16> to vector<8x128xbf16>
    %91 = vector.shape_cast %87 : vector<8x128xbf16> to vector<1x8x128xbf16>
    tpu.vector_store %arg10[%88, %c0_36, %c0_37], %91 {strides = array<i32>} : memref<8x8x128xbf16, #tpu.memory_space<vmem>>, vector<1x8x128xbf16>,
    %c2_i32 = arith.constant 2 : i32
    %92 = arith.index_cast %c2_i32 : i32 to index
    %c0_38 = arith.constant 0 : index
    %c0_39 = arith.constant 0 : index
    %93 = vector.load %arg11[%92, %c0_38, %c0_39] : memref<8x8x512xf32, #tpu.memory_space<vmem>>, vector<1x8x512xf32>
    %94 = vector.shape_cast %93 : vector<1x8x512xf32> to vector<8x512xf32>
    %95 = arith.truncf %86 : vector<8x128xf32> to vector<8x128xbf16>
    %cst_40 = arith.constant dense<0.000000e+00> : vector<8x512xf32>
    %96 = tpu.matmul %95, %5, %cst_40 {dimension_numbers = #tpu.dot_dimension_numbers<[1], [0], [0], [1], [0, 0, 1, 1], [], []>} : vector<8x128xbf16>, vector<128x512xbf16>, vector<8x512xf32> -> vector<8x512xf32>
    %97 = arith.addf %94, %96 : vector<8x512xf32>
    %98 = vector.extract_strided_slice %97 {offsets = [0, 0], sizes = [8, 128], strides = [1, 1]} : vector<8x512xf32> to vector<8x128xf32>
    %99 = arith.negf %98 : vector<8x128xf32>
    %100 = math.exp %99 : vector<8x128xf32>
    %cst_41 = arith.constant 1.000000e+00 : f32
    %101 = vector.broadcast %cst_41 : f32 to vector<8x128xf32>
    %102 = arith.addf %101, %100 : vector<8x128xf32>
    %103 = arith.divf %101, %102 : vector<8x128xf32>
    %104 = vector.extract_strided_slice %97 {offsets = [0, 128], sizes = [8, 128], strides = [1, 1]} : vector<8x512xf32> to vector<8x128xf32>
    %105 = arith.negf %104 : vector<8x128xf32>
    %106 = math.exp %105 : vector<8x128xf32>
    %cst_42 = arith.constant 1.000000e+00 : f32
    %107 = vector.broadcast %cst_42 : f32 to vector<8x128xf32>
    %108 = arith.addf %107, %106 : vector<8x128xf32>
    %109 = arith.divf %107, %108 : vector<8x128xf32>
    %110 = vector.extract_strided_slice %97 {offsets = [0, 256], sizes = [8, 128], strides = [1, 1]} : vector<8x512xf32> to vector<8x128xf32>
    %111 = math.tanh %110 : vector<8x128xf32>
    %112 = vector.extract_strided_slice %97 {offsets = [0, 384], sizes = [8, 128], strides = [1, 1]} : vector<8x512xf32> to vector<8x128xf32>
    %113 = arith.negf %112 : vector<8x128xf32>
    %114 = math.exp %113 : vector<8x128xf32>
    %cst_43 = arith.constant 1.000000e+00 : f32
    %115 = vector.broadcast %cst_43 : f32 to vector<8x128xf32>
    %116 = arith.addf %115, %114 : vector<8x128xf32>
    %117 = arith.divf %115, %116 : vector<8x128xf32>
    %118 = arith.mulf %109, %84 : vector<8x128xf32>
    %119 = arith.mulf %103, %111 : vector<8x128xf32>
    %120 = arith.addf %118, %119 : vector<8x128xf32>
    %121 = math.tanh %120 : vector<8x128xf32>
    %122 = arith.mulf %117, %121 : vector<8x128xf32>
    %123 = arith.truncf %122 : vector<8x128xf32> to vector<8x128xbf16>
    %124 = arith.index_cast %c2_i32 : i32 to index
    %c0_44 = arith.constant 0 : index
    %c0_45 = arith.constant 0 : index
    %125 = vector.load %arg10[%124, %c0_44, %c0_45] : memref<8x8x128xbf16, #tpu.memory_space<vmem>>, vector<1x8x128xbf16>
    %126 = vector.shape_cast %125 : vector<1x8x128xbf16> to vector<8x128xbf16>
    %127 = vector.shape_cast %123 : vector<8x128xbf16> to vector<1x8x128xbf16>
    tpu.vector_store %arg10[%124, %c0_44, %c0_45], %127 {strides = array<i32>} : memref<8x8x128xbf16, #tpu.memory_space<vmem>>, vector<1x8x128xbf16>,
    %c3_i32 = arith.constant 3 : i32
    %128 = arith.index_cast %c3_i32 : i32 to index
    %c0_46 = arith.constant 0 : index
    %c0_47 = arith.constant 0 : index
    %129 = vector.load %arg11[%128, %c0_46, %c0_47] : memref<8x8x512xf32, #tpu.memory_space<vmem>>, vector<1x8x512xf32>
    %130 = vector.shape_cast %129 : vector<1x8x512xf32> to vector<8x512xf32>
    %131 = arith.truncf %122 : vector<8x128xf32> to vector<8x128xbf16>
    %cst_48 = arith.constant dense<0.000000e+00> : vector<8x512xf32>
    %132 = tpu.matmul %131, %5, %cst_48 {dimension_numbers = #tpu.dot_dimension_numbers<[1], [0], [0], [1], [0, 0, 1, 1], [], []>} : vector<8x128xbf16>, vector<128x512xbf16>, vector<8x512xf32> -> vector<8x512xf32>
    %133 = arith.addf %130, %132 : vector<8x512xf32>
    %134 = vector.extract_strided_slice %133 {offsets = [0, 0], sizes = [8, 128], strides = [1, 1]} : vector<8x512xf32> to vector<8x128xf32>
    %135 = arith.negf %134 : vector<8x128xf32>
    %136 = math.exp %135 : vector<8x128xf32>
    %cst_49 = arith.constant 1.000000e+00 : f32
    %137 = vector.broadcast %cst_49 : f32 to vector<8x128xf32>
    %138 = arith.addf %137, %136 : vector<8x128xf32>
    %139 = arith.divf %137, %138 : vector<8x128xf32>
    %140 = vector.extract_strided_slice %133 {offsets = [0, 128], sizes = [8, 128], strides = [1, 1]} : vector<8x512xf32> to vector<8x128xf32>
    %141 = arith.negf %140 : vector<8x128xf32>
    %142 = math.exp %141 : vector<8x128xf32>
    %cst_50 = arith.constant 1.000000e+00 : f32
    %143 = vector.broadcast %cst_50 : f32 to vector<8x128xf32>
    %144 = arith.addf %143, %142 : vector<8x128xf32>
    %145 = arith.divf %143, %144 : vector<8x128xf32>
    %146 = vector.extract_strided_slice %133 {offsets = [0, 256], sizes = [8, 128], strides = [1, 1]} : vector<8x512xf32> to vector<8x128xf32>
    %147 = math.tanh %146 : vector<8x128xf32>
    %148 = vector.extract_strided_slice %133 {offsets = [0, 384], sizes = [8, 128], strides = [1, 1]} : vector<8x512xf32> to vector<8x128xf32>
    %149 = arith.negf %148 : vector<8x128xf32>
    %150 = math.exp %149 : vector<8x128xf32>
    %cst_51 = arith.constant 1.000000e+00 : f32
    %151 = vector.broadcast %cst_51 : f32 to vector<8x128xf32>
    %152 = arith.addf %151, %150 : vector<8x128xf32>
    %153 = arith.divf %151, %152 : vector<8x128xf32>
    %154 = arith.mulf %145, %120 : vector<8x128xf32>
    %155 = arith.mulf %139, %147 : vector<8x128xf32>
    %156 = arith.addf %154, %155 : vector<8x128xf32>
    %157 = math.tanh %156 : vector<8x128xf32>
    %158 = arith.mulf %153, %157 : vector<8x128xf32>
    %159 = arith.truncf %158 : vector<8x128xf32> to vector<8x128xbf16>
    %160 = arith.index_cast %c3_i32 : i32 to index
    %c0_52 = arith.constant 0 : index
    %c0_53 = arith.constant 0 : index
    %161 = vector.load %arg10[%160, %c0_52, %c0_53] : memref<8x8x128xbf16, #tpu.memory_space<vmem>>, vector<1x8x128xbf16>
    %162 = vector.shape_cast %161 : vector<1x8x128xbf16> to vector<8x128xbf16>
    %163 = vector.shape_cast %159 : vector<8x128xbf16> to vector<1x8x128xbf16>
    tpu.vector_store %arg10[%160, %c0_52, %c0_53], %163 {strides = array<i32>} : memref<8x8x128xbf16, #tpu.memory_space<vmem>>, vector<1x8x128xbf16>,
    %c4_i32 = arith.constant 4 : i32
    %164 = arith.index_cast %c4_i32 : i32 to index
    %c0_54 = arith.constant 0 : index
    %c0_55 = arith.constant 0 : index
    %165 = vector.load %arg11[%164, %c0_54, %c0_55] : memref<8x8x512xf32, #tpu.memory_space<vmem>>, vector<1x8x512xf32>
    %166 = vector.shape_cast %165 : vector<1x8x512xf32> to vector<8x512xf32>
    %167 = arith.truncf %158 : vector<8x128xf32> to vector<8x128xbf16>
    %cst_56 = arith.constant dense<0.000000e+00> : vector<8x512xf32>
    %168 = tpu.matmul %167, %5, %cst_56 {dimension_numbers = #tpu.dot_dimension_numbers<[1], [0], [0], [1], [0, 0, 1, 1], [], []>} : vector<8x128xbf16>, vector<128x512xbf16>, vector<8x512xf32> -> vector<8x512xf32>
    %169 = arith.addf %166, %168 : vector<8x512xf32>
    %170 = vector.extract_strided_slice %169 {offsets = [0, 0], sizes = [8, 128], strides = [1, 1]} : vector<8x512xf32> to vector<8x128xf32>
    %171 = arith.negf %170 : vector<8x128xf32>
    %172 = math.exp %171 : vector<8x128xf32>
    %cst_57 = arith.constant 1.000000e+00 : f32
    %173 = vector.broadcast %cst_57 : f32 to vector<8x128xf32>
    %174 = arith.addf %173, %172 : vector<8x128xf32>
    %175 = arith.divf %173, %174 : vector<8x128xf32>
    %176 = vector.extract_strided_slice %169 {offsets = [0, 128], sizes = [8, 128], strides = [1, 1]} : vector<8x512xf32> to vector<8x128xf32>
    %177 = arith.negf %176 : vector<8x128xf32>
    %178 = math.exp %177 : vector<8x128xf32>
    %cst_58 = arith.constant 1.000000e+00 : f32
    %179 = vector.broadcast %cst_58 : f32 to vector<8x128xf32>
    %180 = arith.addf %179, %178 : vector<8x128xf32>
    %181 = arith.divf %179, %180 : vector<8x128xf32>
    %182 = vector.extract_strided_slice %169 {offsets = [0, 256], sizes = [8, 128], strides = [1, 1]} : vector<8x512xf32> to vector<8x128xf32>
    %183 = math.tanh %182 : vector<8x128xf32>
    %184 = vector.extract_strided_slice %169 {offsets = [0, 384], sizes = [8, 128], strides = [1, 1]} : vector<8x512xf32> to vector<8x128xf32>
    %185 = arith.negf %184 : vector<8x128xf32>
    %186 = math.exp %185 : vector<8x128xf32>
    %cst_59 = arith.constant 1.000000e+00 : f32
    %187 = vector.broadcast %cst_59 : f32 to vector<8x128xf32>
    %188 = arith.addf %187, %186 : vector<8x128xf32>
    %189 = arith.divf %187, %188 : vector<8x128xf32>
    %190 = arith.mulf %181, %156 : vector<8x128xf32>
    %191 = arith.mulf %175, %183 : vector<8x128xf32>
    %192 = arith.addf %190, %191 : vector<8x128xf32>
    %193 = math.tanh %192 : vector<8x128xf32>
    %194 = arith.mulf %189, %193 : vector<8x128xf32>
    %195 = arith.truncf %194 : vector<8x128xf32> to vector<8x128xbf16>
    %196 = arith.index_cast %c4_i32 : i32 to index
    %c0_60 = arith.constant 0 : index
    %c0_61 = arith.constant 0 : index
    %197 = vector.load %arg10[%196, %c0_60, %c0_61] : memref<8x8x128xbf16, #tpu.memory_space<vmem>>, vector<1x8x128xbf16>
    %198 = vector.shape_cast %197 : vector<1x8x128xbf16> to vector<8x128xbf16>
    %199 = vector.shape_cast %195 : vector<8x128xbf16> to vector<1x8x128xbf16>
    tpu.vector_store %arg10[%196, %c0_60, %c0_61], %199 {strides = array<i32>} : memref<8x8x128xbf16, #tpu.memory_space<vmem>>, vector<1x8x128xbf16>,
    %c5_i32 = arith.constant 5 : i32
    %200 = arith.index_cast %c5_i32 : i32 to index
    %c0_62 = arith.constant 0 : index
    %c0_63 = arith.constant 0 : index
    %201 = vector.load %arg11[%200, %c0_62, %c0_63] : memref<8x8x512xf32, #tpu.memory_space<vmem>>, vector<1x8x512xf32>
    %202 = vector.shape_cast %201 : vector<1x8x512xf32> to vector<8x512xf32>
    %203 = arith.truncf %194 : vector<8x128xf32> to vector<8x128xbf16>
    %cst_64 = arith.constant dense<0.000000e+00> : vector<8x512xf32>
    %204 = tpu.matmul %203, %5, %cst_64 {dimension_numbers = #tpu.dot_dimension_numbers<[1], [0], [0], [1], [0, 0, 1, 1], [], []>} : vector<8x128xbf16>, vector<128x512xbf16>, vector<8x512xf32> -> vector<8x512xf32>
    %205 = arith.addf %202, %204 : vector<8x512xf32>
    %206 = vector.extract_strided_slice %205 {offsets = [0, 0], sizes = [8, 128], strides = [1, 1]} : vector<8x512xf32> to vector<8x128xf32>
    %207 = arith.negf %206 : vector<8x128xf32>
    %208 = math.exp %207 : vector<8x128xf32>
    %cst_65 = arith.constant 1.000000e+00 : f32
    %209 = vector.broadcast %cst_65 : f32 to vector<8x128xf32>
    %210 = arith.addf %209, %208 : vector<8x128xf32>
    %211 = arith.divf %209, %210 : vector<8x128xf32>
    %212 = vector.extract_strided_slice %205 {offsets = [0, 128], sizes = [8, 128], strides = [1, 1]} : vector<8x512xf32> to vector<8x128xf32>
    %213 = arith.negf %212 : vector<8x128xf32>
    %214 = math.exp %213 : vector<8x128xf32>
    %cst_66 = arith.constant 1.000000e+00 : f32
    %215 = vector.broadcast %cst_66 : f32 to vector<8x128xf32>
    %216 = arith.addf %215, %214 : vector<8x128xf32>
    %217 = arith.divf %215, %216 : vector<8x128xf32>
    %218 = vector.extract_strided_slice %205 {offsets = [0, 256], sizes = [8, 128], strides = [1, 1]} : vector<8x512xf32> to vector<8x128xf32>
    %219 = math.tanh %218 : vector<8x128xf32>
    %220 = vector.extract_strided_slice %205 {offsets = [0, 384], sizes = [8, 128], strides = [1, 1]} : vector<8x512xf32> to vector<8x128xf32>
    %221 = arith.negf %220 : vector<8x128xf32>
    %222 = math.exp %221 : vector<8x128xf32>
    %cst_67 = arith.constant 1.000000e+00 : f32
    %223 = vector.broadcast %cst_67 : f32 to vector<8x128xf32>
    %224 = arith.addf %223, %222 : vector<8x128xf32>
    %225 = arith.divf %223, %224 : vector<8x128xf32>
    %226 = arith.mulf %217, %192 : vector<8x128xf32>
    %227 = arith.mulf %211, %219 : vector<8x128xf32>
    %228 = arith.addf %226, %227 : vector<8x128xf32>
    %229 = math.tanh %228 : vector<8x128xf32>
    %230 = arith.mulf %225, %229 : vector<8x128xf32>
    %231 = arith.truncf %230 : vector<8x128xf32> to vector<8x128xbf16>
    %232 = arith.index_cast %c5_i32 : i32 to index
    %c0_68 = arith.constant 0 : index
    %c0_69 = arith.constant 0 : index
    %233 = vector.load %arg10[%232, %c0_68, %c0_69] : memref<8x8x128xbf16, #tpu.memory_space<vmem>>, vector<1x8x128xbf16>
    %234 = vector.shape_cast %233 : vector<1x8x128xbf16> to vector<8x128xbf16>
    %235 = vector.shape_cast %231 : vector<8x128xbf16> to vector<1x8x128xbf16>
    tpu.vector_store %arg10[%232, %c0_68, %c0_69], %235 {strides = array<i32>} : memref<8x8x128xbf16, #tpu.memory_space<vmem>>, vector<1x8x128xbf16>,
    %c6_i32 = arith.constant 6 : i32
    %236 = arith.index_cast %c6_i32 : i32 to index
    %c0_70 = arith.constant 0 : index
    %c0_71 = arith.constant 0 : index
    %237 = vector.load %arg11[%236, %c0_70, %c0_71] : memref<8x8x512xf32, #tpu.memory_space<vmem>>, vector<1x8x512xf32>
    %238 = vector.shape_cast %237 : vector<1x8x512xf32> to vector<8x512xf32>
    %239 = arith.truncf %230 : vector<8x128xf32> to vector<8x128xbf16>
    %cst_72 = arith.constant dense<0.000000e+00> : vector<8x512xf32>
    %240 = tpu.matmul %239, %5, %cst_72 {dimension_numbers = #tpu.dot_dimension_numbers<[1], [0], [0], [1], [0, 0, 1, 1], [], []>} : vector<8x128xbf16>, vector<128x512xbf16>, vector<8x512xf32> -> vector<8x512xf32>
    %241 = arith.addf %238, %240 : vector<8x512xf32>
    %242 = vector.extract_strided_slice %241 {offsets = [0, 0], sizes = [8, 128], strides = [1, 1]} : vector<8x512xf32> to vector<8x128xf32>
    %243 = arith.negf %242 : vector<8x128xf32>
    %244 = math.exp %243 : vector<8x128xf32>
    %cst_73 = arith.constant 1.000000e+00 : f32
    %245 = vector.broadcast %cst_73 : f32 to vector<8x128xf32>
    %246 = arith.addf %245, %244 : vector<8x128xf32>
    %247 = arith.divf %245, %246 : vector<8x128xf32>
    %248 = vector.extract_strided_slice %241 {offsets = [0, 128], sizes = [8, 128], strides = [1, 1]} : vector<8x512xf32> to vector<8x128xf32>
    %249 = arith.negf %248 : vector<8x128xf32>
    %250 = math.exp %249 : vector<8x128xf32>
    %cst_74 = arith.constant 1.000000e+00 : f32
    %251 = vector.broadcast %cst_74 : f32 to vector<8x128xf32>
    %252 = arith.addf %251, %250 : vector<8x128xf32>
    %253 = arith.divf %251, %252 : vector<8x128xf32>
    %254 = vector.extract_strided_slice %241 {offsets = [0, 256], sizes = [8, 128], strides = [1, 1]} : vector<8x512xf32> to vector<8x128xf32>
    %255 = math.tanh %254 : vector<8x128xf32>
    %256 = vector.extract_strided_slice %241 {offsets = [0, 384], sizes = [8, 128], strides = [1, 1]} : vector<8x512xf32> to vector<8x128xf32>
    %257 = arith.negf %256 : vector<8x128xf32>
    %258 = math.exp %257 : vector<8x128xf32>
    %cst_75 = arith.constant 1.000000e+00 : f32
    %259 = vector.broadcast %cst_75 : f32 to vector<8x128xf32>
    %260 = arith.addf %259, %258 : vector<8x128xf32>
    %261 = arith.divf %259, %260 : vector<8x128xf32>
    %262 = arith.mulf %253, %228 : vector<8x128xf32>
    %263 = arith.mulf %247, %255 : vector<8x128xf32>
    %264 = arith.addf %262, %263 : vector<8x128xf32>
    %265 = math.tanh %264 : vector<8x128xf32>
    %266 = arith.mulf %261, %265 : vector<8x128xf32>
    %267 = arith.truncf %266 : vector<8x128xf32> to vector<8x128xbf16>
    %268 = arith.index_cast %c6_i32 : i32 to index
    %c0_76 = arith.constant 0 : index
    %c0_77 = arith.constant 0 : index
    %269 = vector.load %arg10[%268, %c0_76, %c0_77] : memref<8x8x128xbf16, #tpu.memory_space<vmem>>, vector<1x8x128xbf16>
    %270 = vector.shape_cast %269 : vector<1x8x128xbf16> to vector<8x128xbf16>
    %271 = vector.shape_cast %267 : vector<8x128xbf16> to vector<1x8x128xbf16>
    tpu.vector_store %arg10[%268, %c0_76, %c0_77], %271 {strides = array<i32>} : memref<8x8x128xbf16, #tpu.memory_space<vmem>>, vector<1x8x128xbf16>,
    %c7_i32 = arith.constant 7 : i32
    %272 = arith.index_cast %c7_i32 : i32 to index
    %c0_78 = arith.constant 0 : index
    %c0_79 = arith.constant 0 : index
    %273 = vector.load %arg11[%272, %c0_78, %c0_79] : memref<8x8x512xf32, #tpu.memory_space<vmem>>, vector<1x8x512xf32>
    %274 = vector.shape_cast %273 : vector<1x8x512xf32> to vector<8x512xf32>
    %275 = arith.truncf %266 : vector<8x128xf32> to vector<8x128xbf16>
    %cst_80 = arith.constant dense<0.000000e+00> : vector<8x512xf32>
    %276 = tpu.matmul %275, %5, %cst_80 {dimension_numbers = #tpu.dot_dimension_numbers<[1], [0], [0], [1], [0, 0, 1, 1], [], []>} : vector<8x128xbf16>, vector<128x512xbf16>, vector<8x512xf32> -> vector<8x512xf32>
    %277 = arith.addf %274, %276 : vector<8x512xf32>
    %278 = vector.extract_strided_slice %277 {offsets = [0, 0], sizes = [8, 128], strides = [1, 1]} : vector<8x512xf32> to vector<8x128xf32>
    %279 = arith.negf %278 : vector<8x128xf32>
    %280 = math.exp %279 : vector<8x128xf32>
    %cst_81 = arith.constant 1.000000e+00 : f32
    %281 = vector.broadcast %cst_81 : f32 to vector<8x128xf32>
    %282 = arith.addf %281, %280 : vector<8x128xf32>
    %283 = arith.divf %281, %282 : vector<8x128xf32>
    %284 = vector.extract_strided_slice %277 {offsets = [0, 128], sizes = [8, 128], strides = [1, 1]} : vector<8x512xf32> to vector<8x128xf32>
    %285 = arith.negf %284 : vector<8x128xf32>
    %286 = math.exp %285 : vector<8x128xf32>
    %cst_82 = arith.constant 1.000000e+00 : f32
    %287 = vector.broadcast %cst_82 : f32 to vector<8x128xf32>
    %288 = arith.addf %287, %286 : vector<8x128xf32>
    %289 = arith.divf %287, %288 : vector<8x128xf32>
    %290 = vector.extract_strided_slice %277 {offsets = [0, 256], sizes = [8, 128], strides = [1, 1]} : vector<8x512xf32> to vector<8x128xf32>
    %291 = math.tanh %290 : vector<8x128xf32>
    %292 = vector.extract_strided_slice %277 {offsets = [0, 384], sizes = [8, 128], strides = [1, 1]} : vector<8x512xf32> to vector<8x128xf32>
    %293 = arith.negf %292 : vector<8x128xf32>
    %294 = math.exp %293 : vector<8x128xf32>
    %cst_83 = arith.constant 1.000000e+00 : f32
    %295 = vector.broadcast %cst_83 : f32 to vector<8x128xf32>
    %296 = arith.addf %295, %294 : vector<8x128xf32>
    %297 = arith.divf %295, %296 : vector<8x128xf32>
    %298 = arith.mulf %289, %264 : vector<8x128xf32>
    %299 = arith.mulf %283, %291 : vector<8x128xf32>
    %300 = arith.addf %298, %299 : vector<8x128xf32>
    %301 = math.tanh %300 : vector<8x128xf32>
    %302 = arith.mulf %297, %301 : vector<8x128xf32>
    %303 = arith.truncf %302 : vector<8x128xf32> to vector<8x128xbf16>
    %304 = arith.index_cast %c7_i32 : i32 to index
    %c0_84 = arith.constant 0 : index
    %c0_85 = arith.constant 0 : index
    %305 = vector.load %arg10[%304, %c0_84, %c0_85] : memref<8x8x128xbf16, #tpu.memory_space<vmem>>, vector<1x8x128xbf16>
    %306 = vector.shape_cast %305 : vector<1x8x128xbf16> to vector<8x128xbf16>
    %307 = vector.shape_cast %303 : vector<8x128xbf16> to vector<1x8x128xbf16>
    tpu.vector_store %arg10[%304, %c0_84, %c0_85], %307 {strides = array<i32>} : memref<8x8x128xbf16, #tpu.memory_space<vmem>>, vector<1x8x128xbf16>,
    %c8_i32 = arith.constant 8 : i32
    %c0_86 = arith.constant 0 : index
    %c0_87 = arith.constant 0 : index
    %c0_88 = arith.constant 0 : index
    %308 = vector.load %arg8[%c0_86, %c0_87, %c0_88] : memref<2x8x128xf32, #tpu.memory_space<vmem>>, vector<1x8x128xf32>
    %309 = vector.shape_cast %308 : vector<1x8x128xf32> to vector<8x128xf32>
    %310 = vector.shape_cast %302 : vector<8x128xf32> to vector<1x8x128xf32>
    tpu.vector_store %arg8[%c0_86, %c0_87, %c0_88], %310 {strides = array<i32>} : memref<2x8x128xf32, #tpu.memory_space<vmem>>, vector<1x8x128xf32>,
    %c0_89 = arith.constant 0 : index
    %c0_90 = arith.constant 0 : index
    %c0_91 = arith.constant 0 : index
    %311 = vector.load %arg9[%c0_89, %c0_90, %c0_91] : memref<2x8x128xf32, #tpu.memory_space<vmem>>, vector<1x8x128xf32>
    %312 = vector.shape_cast %311 : vector<1x8x128xf32> to vector<8x128xf32>
    %313 = vector.shape_cast %300 : vector<8x128xf32> to vector<1x8x128xf32>
    tpu.vector_store %arg9[%c0_89, %c0_90, %c0_91], %313 {strides = array<i32>} : memref<2x8x128xf32, #tpu.memory_space<vmem>>, vector<1x8x128xf32>,
    %c0_92 = arith.constant 0 : index
    %c0_93 = arith.constant 0 : index
    %c0_94 = arith.constant 0 : index
    %314 = vector.load %arg10[%c0_92, %c0_93, %c0_94] : memref<8x8x128xbf16, #tpu.memory_space<vmem>>, vector<8x8x128xbf16>
    %c1 = arith.constant 1 : index
    %c0_95 = arith.constant 0 : index
    %c0_96 = arith.constant 0 : index
    %315 = vector.load %arg4[%c1, %c0_95, %c0_96] : memref<2x128x512xbf16, #tpu.memory_space<vmem>>, vector<1x128x512xbf16>
    %316 = vector.shape_cast %315 : vector<1x128x512xbf16> to vector<128x512xbf16>
    %317 = vector.shape_cast %314 : vector<8x8x128xbf16> to vector<64x128xbf16>
    %c1_97 = arith.constant 1 : index
    %c0_98 = arith.constant 0 : index
    %c0_99 = arith.constant 0 : index
    %318 = vector.load %arg3[%c1_97, %c0_98, %c0_99] : memref<2x128x512xbf16, #tpu.memory_space<vmem>>, vector<1x128x512xbf16>
    %319 = vector.shape_cast %318 : vector<1x128x512xbf16> to vector<128x512xbf16>
    %cst_100 = arith.constant dense<0.000000e+00> : vector<64x512xf32>
    %320 = tpu.matmul %317, %319, %cst_100 {dimension_numbers = #tpu.dot_dimension_numbers<[1], [0], [0], [1], [0, 0, 1, 1], [], []>} : vector<64x128xbf16>, vector<128x512xbf16>, vector<64x512xf32> -> vector<64x512xf32>
    %c1_101 = arith.constant 1 : index
    %c0_102 = arith.constant 0 : index
    %c0_103 = arith.constant 0 : index
    %321 = vector.load %arg5[%c1_101, %c0_102, %c0_103] : memref<2x1x512xf32, #tpu.memory_space<vmem>>, vector<1x1x512xf32>
    %322 = vector.shape_cast %321 : vector<1x1x512xf32> to vector<1x512xf32>
    %323 = vector.broadcast %322 : vector<1x512xf32> to vector<64x512xf32>
    %324 = arith.addf %320, %323 : vector<64x512xf32>
    %325 = vector.shape_cast %324 : vector<64x512xf32> to vector<8x8x512xf32>
    %c0_104 = arith.constant 0 : index
    %c0_105 = arith.constant 0 : index
    %c0_106 = arith.constant 0 : index
    %326 = vector.load %arg11[%c0_104, %c0_105, %c0_106] : memref<8x8x512xf32, #tpu.memory_space<vmem>>, vector<8x8x512xf32>
    tpu.vector_store %arg11[%c0_104, %c0_105, %c0_106], %325 {strides = array<i32>} : memref<8x8x512xf32, #tpu.memory_space<vmem>>, vector<8x8x512xf32>,
    %c1_107 = arith.constant 1 : index
    %c0_108 = arith.constant 0 : index
    %c0_109 = arith.constant 0 : index
    %327 = vector.load %arg8[%c1_107, %c0_108, %c0_109] : memref<2x8x128xf32, #tpu.memory_space<vmem>>, vector<1x8x128xf32>
    %328 = vector.shape_cast %327 : vector<1x8x128xf32> to vector<8x128xf32>
    %c1_110 = arith.constant 1 : index
    %c0_111 = arith.constant 0 : index
    %c0_112 = arith.constant 0 : index
    %329 = vector.load %arg9[%c1_110, %c0_111, %c0_112] : memref<2x8x128xf32, #tpu.memory_space<vmem>>, vector<1x8x128xf32>
    %330 = vector.shape_cast %329 : vector<1x8x128xf32> to vector<8x128xf32>
    %c0_i32_113 = arith.constant 0 : i32
    %331 = arith.index_cast %c0_i32_113 : i32 to index
    %c0_114 = arith.constant 0 : index
    %c0_115 = arith.constant 0 : index
    %332 = vector.load %arg11[%331, %c0_114, %c0_115] : memref<8x8x512xf32, #tpu.memory_space<vmem>>, vector<1x8x512xf32>
    %333 = vector.shape_cast %332 : vector<1x8x512xf32> to vector<8x512xf32>
    %334 = arith.truncf %328 : vector<8x128xf32> to vector<8x128xbf16>
    %cst_116 = arith.constant dense<0.000000e+00> : vector<8x512xf32>
    %335 = tpu.matmul %334, %316, %cst_116 {dimension_numbers = #tpu.dot_dimension_numbers<[1], [0], [0], [1], [0, 0, 1, 1], [], []>} : vector<8x128xbf16>, vector<128x512xbf16>, vector<8x512xf32> -> vector<8x512xf32>
    %336 = arith.addf %333, %335 : vector<8x512xf32>
    %337 = vector.extract_strided_slice %336 {offsets = [0, 0], sizes = [8, 128], strides = [1, 1]} : vector<8x512xf32> to vector<8x128xf32>
    %338 = arith.negf %337 : vector<8x128xf32>
    %339 = math.exp %338 : vector<8x128xf32>
    %cst_117 = arith.constant 1.000000e+00 : f32
    %340 = vector.broadcast %cst_117 : f32 to vector<8x128xf32>
    %341 = arith.addf %340, %339 : vector<8x128xf32>
    %342 = arith.divf %340, %341 : vector<8x128xf32>
    %343 = vector.extract_strided_slice %336 {offsets = [0, 128], sizes = [8, 128], strides = [1, 1]} : vector<8x512xf32> to vector<8x128xf32>
    %344 = arith.negf %343 : vector<8x128xf32>
    %345 = math.exp %344 : vector<8x128xf32>
    %cst_118 = arith.constant 1.000000e+00 : f32
    %346 = vector.broadcast %cst_118 : f32 to vector<8x128xf32>
    %347 = arith.addf %346, %345 : vector<8x128xf32>
    %348 = arith.divf %346, %347 : vector<8x128xf32>
    %349 = vector.extract_strided_slice %336 {offsets = [0, 256], sizes = [8, 128], strides = [1, 1]} : vector<8x512xf32> to vector<8x128xf32>
    %350 = math.tanh %349 : vector<8x128xf32>
    %351 = vector.extract_strided_slice %336 {offsets = [0, 384], sizes = [8, 128], strides = [1, 1]} : vector<8x512xf32> to vector<8x128xf32>
    %352 = arith.negf %351 : vector<8x128xf32>
    %353 = math.exp %352 : vector<8x128xf32>
    %cst_119 = arith.constant 1.000000e+00 : f32
    %354 = vector.broadcast %cst_119 : f32 to vector<8x128xf32>
    %355 = arith.addf %354, %353 : vector<8x128xf32>
    %356 = arith.divf %354, %355 : vector<8x128xf32>
    %357 = arith.mulf %348, %330 : vector<8x128xf32>
    %358 = arith.mulf %342, %350 : vector<8x128xf32>
    %359 = arith.addf %357, %358 : vector<8x128xf32>
    %360 = math.tanh %359 : vector<8x128xf32>
    %361 = arith.mulf %356, %360 : vector<8x128xf32>
    %c1_i32_120 = arith.constant 1 : i32
    %362 = arith.index_cast %c1_i32_120 : i32 to index
    %c0_121 = arith.constant 0 : index
    %c0_122 = arith.constant 0 : index
    %363 = vector.load %arg11[%362, %c0_121, %c0_122] : memref<8x8x512xf32, #tpu.memory_space<vmem>>, vector<1x8x512xf32>
    %364 = vector.shape_cast %363 : vector<1x8x512xf32> to vector<8x512xf32>
    %365 = arith.truncf %361 : vector<8x128xf32> to vector<8x128xbf16>
    %cst_123 = arith.constant dense<0.000000e+00> : vector<8x512xf32>
    %366 = tpu.matmul %365, %316, %cst_123 {dimension_numbers = #tpu.dot_dimension_numbers<[1], [0], [0], [1], [0, 0, 1, 1], [], []>} : vector<8x128xbf16>, vector<128x512xbf16>, vector<8x512xf32> -> vector<8x512xf32>
    %367 = arith.addf %364, %366 : vector<8x512xf32>
    %368 = vector.extract_strided_slice %367 {offsets = [0, 0], sizes = [8, 128], strides = [1, 1]} : vector<8x512xf32> to vector<8x128xf32>
    %369 = arith.negf %368 : vector<8x128xf32>
    %370 = math.exp %369 : vector<8x128xf32>
    %cst_124 = arith.constant 1.000000e+00 : f32
    %371 = vector.broadcast %cst_124 : f32 to vector<8x128xf32>
    %372 = arith.addf %371, %370 : vector<8x128xf32>
    %373 = arith.divf %371, %372 : vector<8x128xf32>
    %374 = vector.extract_strided_slice %367 {offsets = [0, 128], sizes = [8, 128], strides = [1, 1]} : vector<8x512xf32> to vector<8x128xf32>
    %375 = arith.negf %374 : vector<8x128xf32>
    %376 = math.exp %375 : vector<8x128xf32>
    %cst_125 = arith.constant 1.000000e+00 : f32
    %377 = vector.broadcast %cst_125 : f32 to vector<8x128xf32>
    %378 = arith.addf %377, %376 : vector<8x128xf32>
    %379 = arith.divf %377, %378 : vector<8x128xf32>
    %380 = vector.extract_strided_slice %367 {offsets = [0, 256], sizes = [8, 128], strides = [1, 1]} : vector<8x512xf32> to vector<8x128xf32>
    %381 = math.tanh %380 : vector<8x128xf32>
    %382 = vector.extract_strided_slice %367 {offsets = [0, 384], sizes = [8, 128], strides = [1, 1]} : vector<8x512xf32> to vector<8x128xf32>
    %383 = arith.negf %382 : vector<8x128xf32>
    %384 = math.exp %383 : vector<8x128xf32>
    %cst_126 = arith.constant 1.000000e+00 : f32
    %385 = vector.broadcast %cst_126 : f32 to vector<8x128xf32>
    %386 = arith.addf %385, %384 : vector<8x128xf32>
    %387 = arith.divf %385, %386 : vector<8x128xf32>
    %388 = arith.mulf %379, %359 : vector<8x128xf32>
    %389 = arith.mulf %373, %381 : vector<8x128xf32>
    %390 = arith.addf %388, %389 : vector<8x128xf32>
    %391 = math.tanh %390 : vector<8x128xf32>
    %392 = arith.mulf %387, %391 : vector<8x128xf32>
    %c2_i32_127 = arith.constant 2 : i32
    %393 = arith.index_cast %c2_i32_127 : i32 to index
    %c0_128 = arith.constant 0 : index
    %c0_129 = arith.constant 0 : index
    %394 = vector.load %arg11[%393, %c0_128, %c0_129] : memref<8x8x512xf32, #tpu.memory_space<vmem>>, vector<1x8x512xf32>
    %395 = vector.shape_cast %394 : vector<1x8x512xf32> to vector<8x512xf32>
    %396 = arith.truncf %392 : vector<8x128xf32> to vector<8x128xbf16>
    %cst_130 = arith.constant dense<0.000000e+00> : vector<8x512xf32>
    %397 = tpu.matmul %396, %316, %cst_130 {dimension_numbers = #tpu.dot_dimension_numbers<[1], [0], [0], [1], [0, 0, 1, 1], [], []>} : vector<8x128xbf16>, vector<128x512xbf16>, vector<8x512xf32> -> vector<8x512xf32>
    %398 = arith.addf %395, %397 : vector<8x512xf32>
    %399 = vector.extract_strided_slice %398 {offsets = [0, 0], sizes = [8, 128], strides = [1, 1]} : vector<8x512xf32> to vector<8x128xf32>
    %400 = arith.negf %399 : vector<8x128xf32>
    %401 = math.exp %400 : vector<8x128xf32>
    %cst_131 = arith.constant 1.000000e+00 : f32
    %402 = vector.broadcast %cst_131 : f32 to vector<8x128xf32>
    %403 = arith.addf %402, %401 : vector<8x128xf32>
    %404 = arith.divf %402, %403 : vector<8x128xf32>
    %405 = vector.extract_strided_slice %398 {offsets = [0, 128], sizes = [8, 128], strides = [1, 1]} : vector<8x512xf32> to vector<8x128xf32>
    %406 = arith.negf %405 : vector<8x128xf32>
    %407 = math.exp %406 : vector<8x128xf32>
    %cst_132 = arith.constant 1.000000e+00 : f32
    %408 = vector.broadcast %cst_132 : f32 to vector<8x128xf32>
    %409 = arith.addf %408, %407 : vector<8x128xf32>
    %410 = arith.divf %408, %409 : vector<8x128xf32>
    %411 = vector.extract_strided_slice %398 {offsets = [0, 256], sizes = [8, 128], strides = [1, 1]} : vector<8x512xf32> to vector<8x128xf32>
    %412 = math.tanh %411 : vector<8x128xf32>
    %413 = vector.extract_strided_slice %398 {offsets = [0, 384], sizes = [8, 128], strides = [1, 1]} : vector<8x512xf32> to vector<8x128xf32>
    %414 = arith.negf %413 : vector<8x128xf32>
    %415 = math.exp %414 : vector<8x128xf32>
    %cst_133 = arith.constant 1.000000e+00 : f32
    %416 = vector.broadcast %cst_133 : f32 to vector<8x128xf32>
    %417 = arith.addf %416, %415 : vector<8x128xf32>
    %418 = arith.divf %416, %417 : vector<8x128xf32>
    %419 = arith.mulf %410, %390 : vector<8x128xf32>
    %420 = arith.mulf %404, %412 : vector<8x128xf32>
    %421 = arith.addf %419, %420 : vector<8x128xf32>
    %422 = math.tanh %421 : vector<8x128xf32>
    %423 = arith.mulf %418, %422 : vector<8x128xf32>
    %c3_i32_134 = arith.constant 3 : i32
    %424 = arith.index_cast %c3_i32_134 : i32 to index
    %c0_135 = arith.constant 0 : index
    %c0_136 = arith.constant 0 : index
    %425 = vector.load %arg11[%424, %c0_135, %c0_136] : memref<8x8x512xf32, #tpu.memory_space<vmem>>, vector<1x8x512xf32>
    %426 = vector.shape_cast %425 : vector<1x8x512xf32> to vector<8x512xf32>
    %427 = arith.truncf %423 : vector<8x128xf32> to vector<8x128xbf16>
    %cst_137 = arith.constant dense<0.000000e+00> : vector<8x512xf32>
    %428 = tpu.matmul %427, %316, %cst_137 {dimension_numbers = #tpu.dot_dimension_numbers<[1], [0], [0], [1], [0, 0, 1, 1], [], []>} : vector<8x128xbf16>, vector<128x512xbf16>, vector<8x512xf32> -> vector<8x512xf32>
    %429 = arith.addf %426, %428 : vector<8x512xf32>
    %430 = vector.extract_strided_slice %429 {offsets = [0, 0], sizes = [8, 128], strides = [1, 1]} : vector<8x512xf32> to vector<8x128xf32>
    %431 = arith.negf %430 : vector<8x128xf32>
    %432 = math.exp %431 : vector<8x128xf32>
    %cst_138 = arith.constant 1.000000e+00 : f32
    %433 = vector.broadcast %cst_138 : f32 to vector<8x128xf32>
    %434 = arith.addf %433, %432 : vector<8x128xf32>
    %435 = arith.divf %433, %434 : vector<8x128xf32>
    %436 = vector.extract_strided_slice %429 {offsets = [0, 128], sizes = [8, 128], strides = [1, 1]} : vector<8x512xf32> to vector<8x128xf32>
    %437 = arith.negf %436 : vector<8x128xf32>
    %438 = math.exp %437 : vector<8x128xf32>
    %cst_139 = arith.constant 1.000000e+00 : f32
    %439 = vector.broadcast %cst_139 : f32 to vector<8x128xf32>
    %440 = arith.addf %439, %438 : vector<8x128xf32>
    %441 = arith.divf %439, %440 : vector<8x128xf32>
    %442 = vector.extract_strided_slice %429 {offsets = [0, 256], sizes = [8, 128], strides = [1, 1]} : vector<8x512xf32> to vector<8x128xf32>
    %443 = math.tanh %442 : vector<8x128xf32>
    %444 = vector.extract_strided_slice %429 {offsets = [0, 384], sizes = [8, 128], strides = [1, 1]} : vector<8x512xf32> to vector<8x128xf32>
    %445 = arith.negf %444 : vector<8x128xf32>
    %446 = math.exp %445 : vector<8x128xf32>
    %cst_140 = arith.constant 1.000000e+00 : f32
    %447 = vector.broadcast %cst_140 : f32 to vector<8x128xf32>
    %448 = arith.addf %447, %446 : vector<8x128xf32>
    %449 = arith.divf %447, %448 : vector<8x128xf32>
    %450 = arith.mulf %441, %421 : vector<8x128xf32>
    %451 = arith.mulf %435, %443 : vector<8x128xf32>
    %452 = arith.addf %450, %451 : vector<8x128xf32>
    %453 = math.tanh %452 : vector<8x128xf32>
    %454 = arith.mulf %449, %453 : vector<8x128xf32>
    %c4_i32_141 = arith.constant 4 : i32
    %455 = arith.index_cast %c4_i32_141 : i32 to index
    %c0_142 = arith.constant 0 : index
    %c0_143 = arith.constant 0 : index
    %456 = vector.load %arg11[%455, %c0_142, %c0_143] : memref<8x8x512xf32, #tpu.memory_space<vmem>>, vector<1x8x512xf32>
    %457 = vector.shape_cast %456 : vector<1x8x512xf32> to vector<8x512xf32>
    %458 = arith.truncf %454 : vector<8x128xf32> to vector<8x128xbf16>
    %cst_144 = arith.constant dense<0.000000e+00> : vector<8x512xf32>
    %459 = tpu.matmul %458, %316, %cst_144 {dimension_numbers = #tpu.dot_dimension_numbers<[1], [0], [0], [1], [0, 0, 1, 1], [], []>} : vector<8x128xbf16>, vector<128x512xbf16>, vector<8x512xf32> -> vector<8x512xf32>
    %460 = arith.addf %457, %459 : vector<8x512xf32>
    %461 = vector.extract_strided_slice %460 {offsets = [0, 0], sizes = [8, 128], strides = [1, 1]} : vector<8x512xf32> to vector<8x128xf32>
    %462 = arith.negf %461 : vector<8x128xf32>
    %463 = math.exp %462 : vector<8x128xf32>
    %cst_145 = arith.constant 1.000000e+00 : f32
    %464 = vector.broadcast %cst_145 : f32 to vector<8x128xf32>
    %465 = arith.addf %464, %463 : vector<8x128xf32>
    %466 = arith.divf %464, %465 : vector<8x128xf32>
    %467 = vector.extract_strided_slice %460 {offsets = [0, 128], sizes = [8, 128], strides = [1, 1]} : vector<8x512xf32> to vector<8x128xf32>
    %468 = arith.negf %467 : vector<8x128xf32>
    %469 = math.exp %468 : vector<8x128xf32>
    %cst_146 = arith.constant 1.000000e+00 : f32
    %470 = vector.broadcast %cst_146 : f32 to vector<8x128xf32>
    %471 = arith.addf %470, %469 : vector<8x128xf32>
    %472 = arith.divf %470, %471 : vector<8x128xf32>
    %473 = vector.extract_strided_slice %460 {offsets = [0, 256], sizes = [8, 128], strides = [1, 1]} : vector<8x512xf32> to vector<8x128xf32>
    %474 = math.tanh %473 : vector<8x128xf32>
    %475 = vector.extract_strided_slice %460 {offsets = [0, 384], sizes = [8, 128], strides = [1, 1]} : vector<8x512xf32> to vector<8x128xf32>
    %476 = arith.negf %475 : vector<8x128xf32>
    %477 = math.exp %476 : vector<8x128xf32>
    %cst_147 = arith.constant 1.000000e+00 : f32
    %478 = vector.broadcast %cst_147 : f32 to vector<8x128xf32>
    %479 = arith.addf %478, %477 : vector<8x128xf32>
    %480 = arith.divf %478, %479 : vector<8x128xf32>
    %481 = arith.mulf %472, %452 : vector<8x128xf32>
    %482 = arith.mulf %466, %474 : vector<8x128xf32>
    %483 = arith.addf %481, %482 : vector<8x128xf32>
    %484 = math.tanh %483 : vector<8x128xf32>
    %485 = arith.mulf %480, %484 : vector<8x128xf32>
    %c5_i32_148 = arith.constant 5 : i32
    %486 = arith.index_cast %c5_i32_148 : i32 to index
    %c0_149 = arith.constant 0 : index
    %c0_150 = arith.constant 0 : index
    %487 = vector.load %arg11[%486, %c0_149, %c0_150] : memref<8x8x512xf32, #tpu.memory_space<vmem>>, vector<1x8x512xf32>
    %488 = vector.shape_cast %487 : vector<1x8x512xf32> to vector<8x512xf32>
    %489 = arith.truncf %485 : vector<8x128xf32> to vector<8x128xbf16>
    %cst_151 = arith.constant dense<0.000000e+00> : vector<8x512xf32>
    %490 = tpu.matmul %489, %316, %cst_151 {dimension_numbers = #tpu.dot_dimension_numbers<[1], [0], [0], [1], [0, 0, 1, 1], [], []>} : vector<8x128xbf16>, vector<128x512xbf16>, vector<8x512xf32> -> vector<8x512xf32>
    %491 = arith.addf %488, %490 : vector<8x512xf32>
    %492 = vector.extract_strided_slice %491 {offsets = [0, 0], sizes = [8, 128], strides = [1, 1]} : vector<8x512xf32> to vector<8x128xf32>
    %493 = arith.negf %492 : vector<8x128xf32>
    %494 = math.exp %493 : vector<8x128xf32>
    %cst_152 = arith.constant 1.000000e+00 : f32
    %495 = vector.broadcast %cst_152 : f32 to vector<8x128xf32>
    %496 = arith.addf %495, %494 : vector<8x128xf32>
    %497 = arith.divf %495, %496 : vector<8x128xf32>
    %498 = vector.extract_strided_slice %491 {offsets = [0, 128], sizes = [8, 128], strides = [1, 1]} : vector<8x512xf32> to vector<8x128xf32>
    %499 = arith.negf %498 : vector<8x128xf32>
    %500 = math.exp %499 : vector<8x128xf32>
    %cst_153 = arith.constant 1.000000e+00 : f32
    %501 = vector.broadcast %cst_153 : f32 to vector<8x128xf32>
    %502 = arith.addf %501, %500 : vector<8x128xf32>
    %503 = arith.divf %501, %502 : vector<8x128xf32>
    %504 = vector.extract_strided_slice %491 {offsets = [0, 256], sizes = [8, 128], strides = [1, 1]} : vector<8x512xf32> to vector<8x128xf32>
    %505 = math.tanh %504 : vector<8x128xf32>
    %506 = vector.extract_strided_slice %491 {offsets = [0, 384], sizes = [8, 128], strides = [1, 1]} : vector<8x512xf32> to vector<8x128xf32>
    %507 = arith.negf %506 : vector<8x128xf32>
    %508 = math.exp %507 : vector<8x128xf32>
    %cst_154 = arith.constant 1.000000e+00 : f32
    %509 = vector.broadcast %cst_154 : f32 to vector<8x128xf32>
    %510 = arith.addf %509, %508 : vector<8x128xf32>
    %511 = arith.divf %509, %510 : vector<8x128xf32>
    %512 = arith.mulf %503, %483 : vector<8x128xf32>
    %513 = arith.mulf %497, %505 : vector<8x128xf32>
    %514 = arith.addf %512, %513 : vector<8x128xf32>
    %515 = math.tanh %514 : vector<8x128xf32>
    %516 = arith.mulf %511, %515 : vector<8x128xf32>
    %c6_i32_155 = arith.constant 6 : i32
    %517 = arith.index_cast %c6_i32_155 : i32 to index
    %c0_156 = arith.constant 0 : index
    %c0_157 = arith.constant 0 : index
    %518 = vector.load %arg11[%517, %c0_156, %c0_157] : memref<8x8x512xf32, #tpu.memory_space<vmem>>, vector<1x8x512xf32>
    %519 = vector.shape_cast %518 : vector<1x8x512xf32> to vector<8x512xf32>
    %520 = arith.truncf %516 : vector<8x128xf32> to vector<8x128xbf16>
    %cst_158 = arith.constant dense<0.000000e+00> : vector<8x512xf32>
    %521 = tpu.matmul %520, %316, %cst_158 {dimension_numbers = #tpu.dot_dimension_numbers<[1], [0], [0], [1], [0, 0, 1, 1], [], []>} : vector<8x128xbf16>, vector<128x512xbf16>, vector<8x512xf32> -> vector<8x512xf32>
    %522 = arith.addf %519, %521 : vector<8x512xf32>
    %523 = vector.extract_strided_slice %522 {offsets = [0, 0], sizes = [8, 128], strides = [1, 1]} : vector<8x512xf32> to vector<8x128xf32>
    %524 = arith.negf %523 : vector<8x128xf32>
    %525 = math.exp %524 : vector<8x128xf32>
    %cst_159 = arith.constant 1.000000e+00 : f32
    %526 = vector.broadcast %cst_159 : f32 to vector<8x128xf32>
    %527 = arith.addf %526, %525 : vector<8x128xf32>
    %528 = arith.divf %526, %527 : vector<8x128xf32>
    %529 = vector.extract_strided_slice %522 {offsets = [0, 128], sizes = [8, 128], strides = [1, 1]} : vector<8x512xf32> to vector<8x128xf32>
    %530 = arith.negf %529 : vector<8x128xf32>
    %531 = math.exp %530 : vector<8x128xf32>
    %cst_160 = arith.constant 1.000000e+00 : f32
    %532 = vector.broadcast %cst_160 : f32 to vector<8x128xf32>
    %533 = arith.addf %532, %531 : vector<8x128xf32>
    %534 = arith.divf %532, %533 : vector<8x128xf32>
    %535 = vector.extract_strided_slice %522 {offsets = [0, 256], sizes = [8, 128], strides = [1, 1]} : vector<8x512xf32> to vector<8x128xf32>
    %536 = math.tanh %535 : vector<8x128xf32>
    %537 = vector.extract_strided_slice %522 {offsets = [0, 384], sizes = [8, 128], strides = [1, 1]} : vector<8x512xf32> to vector<8x128xf32>
    %538 = arith.negf %537 : vector<8x128xf32>
    %539 = math.exp %538 : vector<8x128xf32>
    %cst_161 = arith.constant 1.000000e+00 : f32
    %540 = vector.broadcast %cst_161 : f32 to vector<8x128xf32>
    %541 = arith.addf %540, %539 : vector<8x128xf32>
    %542 = arith.divf %540, %541 : vector<8x128xf32>
    %543 = arith.mulf %534, %514 : vector<8x128xf32>
    %544 = arith.mulf %528, %536 : vector<8x128xf32>
    %545 = arith.addf %543, %544 : vector<8x128xf32>
    %546 = math.tanh %545 : vector<8x128xf32>
    %547 = arith.mulf %542, %546 : vector<8x128xf32>
    %c7_i32_162 = arith.constant 7 : i32
    %548 = arith.index_cast %c7_i32_162 : i32 to index
    %c0_163 = arith.constant 0 : index
    %c0_164 = arith.constant 0 : index
    %549 = vector.load %arg11[%548, %c0_163, %c0_164] : memref<8x8x512xf32, #tpu.memory_space<vmem>>, vector<1x8x512xf32>
    %550 = vector.shape_cast %549 : vector<1x8x512xf32> to vector<8x512xf32>
    %551 = arith.truncf %547 : vector<8x128xf32> to vector<8x128xbf16>
    %cst_165 = arith.constant dense<0.000000e+00> : vector<8x512xf32>
    %552 = tpu.matmul %551, %316, %cst_165 {dimension_numbers = #tpu.dot_dimension_numbers<[1], [0], [0], [1], [0, 0, 1, 1], [], []>} : vector<8x128xbf16>, vector<128x512xbf16>, vector<8x512xf32> -> vector<8x512xf32>
    %553 = arith.addf %550, %552 : vector<8x512xf32>
    %554 = vector.extract_strided_slice %553 {offsets = [0, 0], sizes = [8, 128], strides = [1, 1]} : vector<8x512xf32> to vector<8x128xf32>
    %555 = arith.negf %554 : vector<8x128xf32>
    %556 = math.exp %555 : vector<8x128xf32>
    %cst_166 = arith.constant 1.000000e+00 : f32
    %557 = vector.broadcast %cst_166 : f32 to vector<8x128xf32>
    %558 = arith.addf %557, %556 : vector<8x128xf32>
    %559 = arith.divf %557, %558 : vector<8x128xf32>
    %560 = vector.extract_strided_slice %553 {offsets = [0, 128], sizes = [8, 128], strides = [1, 1]} : vector<8x512xf32> to vector<8x128xf32>
    %561 = arith.negf %560 : vector<8x128xf32>
    %562 = math.exp %561 : vector<8x128xf32>
    %cst_167 = arith.constant 1.000000e+00 : f32
    %563 = vector.broadcast %cst_167 : f32 to vector<8x128xf32>
    %564 = arith.addf %563, %562 : vector<8x128xf32>
    %565 = arith.divf %563, %564 : vector<8x128xf32>
    %566 = vector.extract_strided_slice %553 {offsets = [0, 256], sizes = [8, 128], strides = [1, 1]} : vector<8x512xf32> to vector<8x128xf32>
    %567 = math.tanh %566 : vector<8x128xf32>
    %568 = vector.extract_strided_slice %553 {offsets = [0, 384], sizes = [8, 128], strides = [1, 1]} : vector<8x512xf32> to vector<8x128xf32>
    %569 = arith.negf %568 : vector<8x128xf32>
    %570 = math.exp %569 : vector<8x128xf32>
    %cst_168 = arith.constant 1.000000e+00 : f32
    %571 = vector.broadcast %cst_168 : f32 to vector<8x128xf32>
    %572 = arith.addf %571, %570 : vector<8x128xf32>
    %573 = arith.divf %571, %572 : vector<8x128xf32>
    %574 = arith.mulf %565, %545 : vector<8x128xf32>
    %575 = arith.mulf %559, %567 : vector<8x128xf32>
    %576 = arith.addf %574, %575 : vector<8x128xf32>
    %577 = math.tanh %576 : vector<8x128xf32>
    %578 = arith.mulf %573, %577 : vector<8x128xf32>
    %c8_i32_169 = arith.constant 8 : i32
    %c1_170 = arith.constant 1 : index
    %c0_171 = arith.constant 0 : index
    %c0_172 = arith.constant 0 : index
    %579 = vector.load %arg8[%c1_170, %c0_171, %c0_172] : memref<2x8x128xf32, #tpu.memory_space<vmem>>, vector<1x8x128xf32>
    %580 = vector.shape_cast %579 : vector<1x8x128xf32> to vector<8x128xf32>
    %581 = vector.shape_cast %578 : vector<8x128xf32> to vector<1x8x128xf32>
    tpu.vector_store %arg8[%c1_170, %c0_171, %c0_172], %581 {strides = array<i32>} : memref<2x8x128xf32, #tpu.memory_space<vmem>>, vector<1x8x128xf32>,
    %c1_173 = arith.constant 1 : index
    %c0_174 = arith.constant 0 : index
    %c0_175 = arith.constant 0 : index
    %582 = vector.load %arg9[%c1_173, %c0_174, %c0_175] : memref<2x8x128xf32, #tpu.memory_space<vmem>>, vector<1x8x128xf32>
    %583 = vector.shape_cast %582 : vector<1x8x128xf32> to vector<8x128xf32>
    %584 = vector.shape_cast %576 : vector<8x128xf32> to vector<1x8x128xf32>
    tpu.vector_store %arg9[%c1_173, %c0_174, %c0_175], %584 {strides = array<i32>} : memref<2x8x128xf32, #tpu.memory_space<vmem>>, vector<1x8x128xf32>,
    %c0_i32_176 = arith.constant 0 : i32
    %585 = arith.cmpi eq, %arg1, %c0_i32_176 : i32
    %586 = arith.extui %585 : i1 to i32
    %c0_i32_177 = arith.constant 0 : i32
    %587 = arith.cmpi ne, %586, %c0_i32_177 : i32
    scf.if %587 {
      %c0_178 = arith.constant 0 : index
      %c0_179 = arith.constant 0 : index
      %c0_180 = arith.constant 0 : index
      %588 = vector.load %arg8[%c0_178, %c0_179, %c0_180] : memref<2x8x128xf32, #tpu.memory_space<vmem>>, vector<2x8x128xf32>
      %c0_181 = arith.constant 0 : index
      %c0_182 = arith.constant 0 : index
      %c0_183 = arith.constant 0 : index
      %589 = vector.load %arg6[%c0_181, %c0_182, %c0_183] : memref<2x8x128xf32, #tpu.memory_space<vmem>>, vector<2x8x128xf32>
      tpu.vector_store %arg6[%c0_181, %c0_182, %c0_183], %588 {strides = array<i32>} : memref<2x8x128xf32, #tpu.memory_space<vmem>>, vector<2x8x128xf32>,
      %c0_184 = arith.constant 0 : index
      %c0_185 = arith.constant 0 : index
      %c0_186 = arith.constant 0 : index
      %590 = vector.load %arg9[%c0_184, %c0_185, %c0_186] : memref<2x8x128xf32, #tpu.memory_space<vmem>>, vector<2x8x128xf32>
      %c0_187 = arith.constant 0 : index
      %c0_188 = arith.constant 0 : index
      %c0_189 = arith.constant 0 : index
      %591 = vector.load %arg7[%c0_187, %c0_188, %c0_189] : memref<2x8x128xf32, #tpu.memory_space<vmem>>, vector<2x8x128xf32>
      tpu.vector_store %arg7[%c0_187, %c0_188, %c0_189], %590 {strides = array<i32>} : memref<2x8x128xf32, #tpu.memory_space<vmem>>, vector<2x8x128xf32>,
    } else {
    }
    return
  }
  func.func @transform_0(%arg0: i32, %arg1: i32) -> (i32, i32, i32) {
    %c0_i32 = arith.constant 0 : i32
    %c0_i32_0 = arith.constant 0 : i32
    return %arg1, %arg0, %c0_i32 : i32, i32, i32
  }
  func.func @transform_1(%arg0: i32, %arg1: i32) -> (i32, i32, i32) {
    %c0_i32 = arith.constant 0 : i32
    %c0_i32_0 = arith.constant 0 : i32
    %c0_i32_1 = arith.constant 0 : i32
    %c0_i32_2 = arith.constant 0 : i32
    return %c0_i32, %c0_i32_0, %c0_i32_1 : i32, i32, i32
  }
  func.func @transform_2(%arg0: i32, %arg1: i32) -> (i32, i32, i32) {
    %c0_i32 = arith.constant 0 : i32
    %c0_i32_0 = arith.constant 0 : i32
    %c0_i32_1 = arith.constant 0 : i32
    %c0_i32_2 = arith.constant 0 : i32
    return %c0_i32, %c0_i32_0, %c0_i32_1 : i32, i32, i32
  }
  func.func @transform_3(%arg0: i32, %arg1: i32) -> (i32, i32, i32) {
    %c0_i32 = arith.constant 0 : i32
    %c0_i32_0 = arith.constant 0 : i32
    %c0_i32_1 = arith.constant 0 : i32
    %c0_i32_2 = arith.constant 0 : i32
    return %c0_i32, %c0_i32_0, %c0_i32_1 : i32, i32, i32
  }
  func.func @transform_4(%arg0: i32, %arg1: i32) -> (i32, i32, i32) {
    %c0_i32 = arith.constant 0 : i32
    %c0_i32_0 = arith.constant 0 : i32
    %c0_i32_1 = arith.constant 0 : i32
    return %c0_i32, %arg0, %c0_i32_0 : i32, i32, i32
  }
  func.func @transform_5(%arg0: i32, %arg1: i32) -> (i32, i32, i32) {
    %c0_i32 = arith.constant 0 : i32
    %c0_i32_0 = arith.constant 0 : i32
    %c0_i32_1 = arith.constant 0 : i32
    return %c0_i32, %arg0, %c0_i32_0 : i32, i32, i32
  }
}

</mosaic_0001>

<llo_original>
// kernel: lstm_language_model_forward.3
$region0: #{lstm_language_model_forward.3}
  #allocation0 [shape = 'u32[]', space=smem, size = 0x4, offset = 0x4, fixed_abs, tag = 'smem constant byte address 0x4 - core index']
  #allocation1 [shape = 'u32[144,128]{1,0:T(1,128)}', space=vmem, size = 0x12000, scoped, tag = 'internal scratch']
  %s0 = inlined_call_operand.vmem [shape: bf16[8,128], index: 0, kind: input, shape index: {}]
  %s1 = inlined_call_operand.vmem [shape: bf16[128,128], index: 1, kind: input, shape index: {}]
  %s2 = inlined_call_operand.vmem [shape: f32[1,128], index: 2, kind: input, shape index: {}]
  %s3 = inlined_call_operand.vmem [shape: f32[8,128], index: 3, kind: output, shape index: {}]
  %s4 = sld [smem:[#allocation0]]
  $region22: #{lstm_language_model_forward.3} parent=0
    _
  %s6 = ssub.s32 1, %s4
  %s7 = scalar_select 0, %s6, %s4
  // Predicated region
  $region2: #{lstm_language_model_forward.3} parent=0 // pred_check
    _
  $region3: #{lstm_language_model_forward.3} parent=0 // pred_check_branch
    %9 = sbr.rel (0) target = $region5
  $region4: #{lstm_language_model_forward.3} parent=0 // pred_region
    _
  $region5: #{lstm_language_model_forward.3} parent=0 // pred_fallthru
    _
  // Predicated region
  $region6: #{lstm_language_model_forward.3} parent=0 // pred_check
    _
  $region7: #{lstm_language_model_forward.3} parent=0 // pred_check_branch
    %11 = sbr.rel (0) target = $region9
  $region8: #{lstm_language_model_forward.3} parent=0 // pred_region
    _
  $region9: #{lstm_language_model_forward.3} parent=0 // pred_fallthru
    _
  // Predicated region
  $region10: #{lstm_language_model_forward.3} parent=0 // pred_check
    _
  $region11: #{lstm_language_model_forward.3} parent=0 // pred_check_branch
    %13 = sbr.rel (0) target = $region13
  $region12: #{lstm_language_model_forward.3} parent=0 // pred_region
    _
  $region13: #{lstm_language_model_forward.3} parent=0 // pred_fallthru
    _
  %v15 = vld [vmem:[%s0] sm:$0xf]
  %v16 = vld [vmem:[%s1] sm:$0xf]
  %v17 = vld [vmem:[%s1 + $0x4] sm:$0xf]
  %v18 = vld [vmem:[%s1 + $0x8] sm:$0xf]
  %v19 = vld [vmem:[%s1 + $0xc] sm:$0xf]
  %v20 = vld [vmem:[%s1 + $0x10] sm:$0xf]
  %v21 = vld [vmem:[%s1 + $0x14] sm:$0xf]
  %v22 = vld [vmem:[%s1 + $0x18] sm:$0xf]
  %v23 = vld [vmem:[%s1 + $0x1c] sm:$0xf]
  %v24 = vld [vmem:[%s1 + $0x20] sm:$0xf]
  %v25 = vld [vmem:[%s1 + $0x24] sm:$0xf]
  %v26 = vld [vmem:[%s1 + $0x28] sm:$0xf]
  %v27 = vld [vmem:[%s1 + $0x2c] sm:$0xf]
  %v28 = vld [vmem:[%s1 + $0x30] sm:$0xf]
  %v29 = vld [vmem:[%s1 + $0x34] sm:$0xf]
  %v30 = vld [vmem:[%s1 + $0x38] sm:$0xf]
  %v31 = vld [vmem:[%s1 + $0x3c] sm:$0xf]
  %v32 = vld [vmem:[%s2] sm:$0x1]
  %v34 = vlaneseq
  %v35 = vshrl.u32 %v34, 7
  %v36 = vsub.s32 0, %v35
  %v37 = vrot.slane %v32, %v36
  %v55 = vunpack.c.l.b16 %v16
  %v56 = vunpack.c.l.b16 %v17
  %v57 = vunpack.c.l.b16 %v18
  %v58 = vunpack.c.l.b16 %v19
  %v59 = vunpack.c.l.b16 %v20
  %v60 = vunpack.c.l.b16 %v21
  %v61 = vunpack.c.l.b16 %v22
  %v62 = vunpack.c.l.b16 %v23
  %v63 = vunpack.c.l.b16 %v24
  %v64 = vunpack.c.l.b16 %v25
  %v65 = vunpack.c.l.b16 %v26
  %v66 = vunpack.c.l.b16 %v27
  %v67 = vunpack.c.l.b16 %v28
  %v68 = vunpack.c.l.b16 %v29
  %v69 = vunpack.c.l.b16 %v30
  %v70 = vunpack.c.l.b16 %v31
  %v71 = vpack.c.b16 %v56, %v55
  %v72 = vpack.c.b16 %v58, %v57
  %v73 = vpack.c.b16 %v60, %v59
  %v74 = vpack.c.b16 %v62, %v61
  %v75 = vpack.c.b16 %v64, %v63
  %v76 = vpack.c.b16 %v66, %v65
  %v77 = vpack.c.b16 %v68, %v67
  %v78 = vpack.c.b16 %v70, %v69
  %87 = vmatprep.subr.bf16.mxu0 0
  %88 = vmatpush1.bf16.msra.mxu0 %v71
  %89 = vmatprep.subr.bf16.mxu0 0
  %90 = vmatpush1.bf16.msra.mxu0 %v72
  %91 = vmatprep.subr.bf16.mxu0 0
  %92 = vmatpush1.bf16.msra.mxu0 %v73
  %93 = vmatprep.subr.bf16.mxu0 0
  %94 = vmatpush1.bf16.msra.mxu0 %v74
  %95 = vmatprep.subr.bf16.mxu0 0
  %96 = vmatpush1.bf16.msra.mxu0 %v75
  %97 = vmatprep.subr.bf16.mxu0 0
  %98 = vmatpush1.bf16.msra.mxu0 %v76
  %99 = vmatprep.subr.bf16.mxu0 0
  %100 = vmatpush1.bf16.msra.mxu0 %v77
  %101 = vmatprep.subr.bf16.mxu0 0
  %102 = vmatpush1.bf16.msra.mxu0 %v78
  %103 = vmatprep.subr.bf16.mxu0 0
  %104 = vmatpush1.bf16.msra.mxu0 0
  %105 = vmatprep.subr.bf16.mxu0 0
  %106 = vmatpush1.bf16.msra.mxu0 0
  %107 = vmatprep.subr.bf16.mxu0 0
  %108 = vmatpush1.bf16.msra.mxu0 0
  %109 = vmatprep.subr.bf16.mxu0 0
  %110 = vmatpush1.bf16.msra.mxu0 0
  %111 = vmatprep.subr.bf16.mxu0 0
  %112 = vmatpush1.bf16.msra.mxu0 0
  %113 = vmatprep.subr.bf16.mxu0 0
  %114 = vmatpush1.bf16.msra.mxu0 0
  %115 = vmatprep.subr.bf16.mxu0 0
  %116 = vmatpush1.bf16.msra.mxu0 0
  %117 = vmatprep.subr.bf16.mxu0 0
  %118 = vmatpush1.bf16.msra.mxu0 0
  %119 = vmatprep.mubr.bf16.mxu0 0
  %120 = vmatmul.mubr.bf16.gmra.mrb[0].mxu0 %v15
  %v121 = vpop.f32.mrb[0].mxu0
  %v122 = vadd.f32 %v37, %v121
  %v123 = vpop.f32.mrb[0].mxu0
  %v124 = vpop.f32.mrb[0].mxu0
  %v125 = vpop.f32.mrb[0].mxu0
  %126 = vdwg.mxu0
  %127 = vst [vmem:[%s3] sm:$0xff] %v122
  // Predicated region
  $region14: #{lstm_language_model_forward.3} parent=0 // pred_check
    _
  $region15: #{lstm_language_model_forward.3} parent=0 // pred_check_branch
    %129 = sbr.rel (0) target = $region17
  $region16: #{lstm_language_model_forward.3} parent=0 // pred_region
    _
  $region17: #{lstm_language_model_forward.3} parent=0 // pred_fallthru
    _
  // Predicated region
  $region18: #{lstm_language_model_forward.3} parent=0 // pred_check
    _
  $region19: #{lstm_language_model_forward.3} parent=0 // pred_check_branch
    %131 = sbr.rel (0) target = $region21
  $region20: #{lstm_language_model_forward.3} parent=0 // pred_region
    _
  $region21: #{lstm_language_model_forward.3} parent=0 // pred_fallthru
    _

// kernel: lstm_language_model_forward.2
$region0: #{lstm_language_model_forward.2}
  #allocation0 [shape = 'u32[]', space=smem, size = 0x4, offset = 0x4, fixed_abs, tag = 'smem constant byte address 0x4 - core index']
  #allocation1 [shape = 'u32[144,128]{1,0:T(1,128)}', space=vmem, size = 0x12000, scoped, tag = 'internal scratch']
  #allocation2 [shape = 'f32[2,8,128]{2,1,0:T(8,128)}', space=vmem, size = 0x2000, scoped, tag = 'scratch operand']
  #allocation3 [shape = 'f32[2,8,128]{2,1,0:T(8,128)}', space=vmem, size = 0x2000, scoped, tag = 'scratch operand']
  #allocation4 [shape = 'bf16[8,8,128]{2,1,0:T(8,128)(2,1)}', space=vmem, size = 0x4000, scoped, tag = 'scratch operand']
  #allocation5 [shape = 'f32[8,8,512]{2,1,0:T(8,128)}', space=vmem, size = 0x20000, scoped, tag = 'scratch operand']
  %s0 = inlined_call_operand.vmem [shape: bf16[8,8,128], index: 0, kind: input, shape index: {}]
  %s1 = inlined_call_operand.hbm [shape: bf16[2,128,512], index: 1, kind: input, shape index: {}]
  %s2 = inlined_call_operand.hbm [shape: bf16[2,128,512], index: 2, kind: input, shape index: {}]
  %s3 = inlined_call_operand.vmem [shape: f32[2,1,512], index: 3, kind: input, shape index: {}]
  %s4 = inlined_call_operand.vmem [shape: f32[2,8,128], index: 4, kind: output, shape index: {0}]
  %s5 = inlined_call_operand.vmem [shape: f32[2,8,128], index: 5, kind: output, shape index: {1}]
  %6 = xla_tuple %s4, %s5
  %s7 = sld [smem:[#allocation0]]
  $region50: #{lstm_language_model_forward.2} parent=0
    _
  %s9 = ssub.s32 1, %s7
  %s10 = scalar_select 0, %s9, %s7
  $region1: #{lstm_language_model_forward.2} parent=0
    #allocation6 [shape = 'u8[262144]{0}', space=vmem, size = 0x40000, scoped, tag = 'input window, operand 1, single buffered']
    #allocation7 [shape = 's32[1]{0}', space=sflag, size = 0x4, scoped, tag = 'scoped memory for lstm_language_model_forward.2']
    #allocation8 [shape = 'u8[262144]{0}', space=vmem, size = 0x40000, scoped, tag = 'input window, operand 2, single buffered']
    #allocation9 [shape = 's32[1]{0}', space=sflag, size = 0x4, scoped, tag = 'scoped memory for lstm_language_model_forward.2']
    %11 = vsyncpa [#allocation7], 0
    %12 = vsyncpa [#allocation9], 0
    // Predicated region
    $region2: #{lstm_language_model_forward.2} parent=1 // pred_check
      _
    $region3: #{lstm_language_model_forward.2} parent=1 // pred_check_branch
      %14 = sbr.rel (0) target = $region5
    $region4: #{lstm_language_model_forward.2} parent=1 // pred_region
      _
    $region5: #{lstm_language_model_forward.2} parent=1 // pred_fallthru
      _
    // Predicated region
    $region6: #{lstm_language_model_forward.2} parent=1 // pred_check
      _
    $region7: #{lstm_language_model_forward.2} parent=1 // pred_check_branch
      %16 = sbr.rel (0) target = $region9
    $region8: #{lstm_language_model_forward.2} parent=1 // pred_region
      %s18 = ssub.s32 8192, 8192
      %19 = vsyncadd [#allocation7], %s18
      %s20 = sshll.u32 [#allocation6], 4
      %s21 = int_to_ptr.vmem [resolvable:$true] %s20
      %26 = dma.hbm_to_vmem [thread:$0]  %s1, 8192, %s21, [#allocation7], 256, 256, 16
    $region9: #{lstm_language_model_forward.2} parent=1 // pred_fallthru
      _
    // Predicated region
    $region10: #{lstm_language_model_forward.2} parent=1 // pred_check
      _
    $region11: #{lstm_language_model_forward.2} parent=1 // pred_check_branch
      %28 = sbr.rel (0) target = $region13
    $region12: #{lstm_language_model_forward.2} parent=1 // pred_region
      %s30 = ssub.s32 8192, 8192
      %31 = vsyncadd [#allocation9], %s30
      %s32 = sshll.u32 [#allocation8], 4
      %s33 = int_to_ptr.vmem [resolvable:$true] %s32
      %38 = dma.hbm_to_vmem [thread:$0]  %s2, 8192, %s33, [#allocation9], 256, 256, 16
    $region13: #{lstm_language_model_forward.2} parent=1 // pred_fallthru
      _
    // Predicated region
    $region14: #{lstm_language_model_forward.2} parent=1 // pred_check
      _
    $region15: #{lstm_language_model_forward.2} parent=1 // pred_check_branch
      %40 = sbr.rel (0) target = $region17
    $region16: #{lstm_language_model_forward.2} parent=1 // pred_region
      _
    $region17: #{lstm_language_model_forward.2} parent=1 // pred_fallthru
      _
    // Predicated region
    $region18: #{lstm_language_model_forward.2} parent=1 // pred_check
      _
    $region19: #{lstm_language_model_forward.2} parent=1 // pred_check_branch
      %42 = sbr.rel (0) target = $region21
    $region20: #{lstm_language_model_forward.2} parent=1 // pred_region
      %43 = dma.done [#allocation7], 8192
    $region21: #{lstm_language_model_forward.2} parent=1 // pred_fallthru
      _
    // Predicated region
    $region22: #{lstm_language_model_forward.2} parent=1 // pred_check
      _
    $region23: #{lstm_language_model_forward.2} parent=1 // pred_check_branch
      %45 = sbr.rel (0) target = $region25
    $region24: #{lstm_language_model_forward.2} parent=1 // pred_region
      %46 = dma.done [#allocation9], 8192
    $region25: #{lstm_language_model_forward.2} parent=1 // pred_fallthru
      _
    %p48 = scmp.eq.s32.totalorder 0, 0
    // Predicated region
    $region26: #{lstm_language_model_forward.2} parent=1 // pred_check
      %p49 = pneg %p48
    $region27: #{lstm_language_model_forward.2} parent=1 // pred_check_branch
      %51 = sbr.rel (%p49) target = $region29
    $region28: #{lstm_language_model_forward.2} parent=1 // pred_region
      %52 = vst [vmem:[#allocation2] sm:$0xff] 0.0
      %53 = vst [vmem:[#allocation2 + $0x8] sm:$0xff] 0.0
      %54 = vst [vmem:[#allocation3] sm:$0xff] 0.0
      %55 = vst [vmem:[#allocation3 + $0x8] sm:$0xff] 0.0
    $region29: #{lstm_language_model_forward.2} parent=1 // pred_fallthru
      _
    %v56 = vld [vmem:[%s0] sm:$0xf]
    %v57 = vld [vmem:[%s0 + $0x4] sm:$0xf]
    %v58 = vld [vmem:[%s0 + $0x8] sm:$0xf]
    %v59 = vld [vmem:[%s0 + $0xc] sm:$0xf]
    %v60 = vld [vmem:[%s0 + $0x10] sm:$0xf]
    %v61 = vld [vmem:[%s0 + $0x14] sm:$0xf]
    %v62 = vld [vmem:[%s0 + $0x18] sm:$0xf]
    %v63 = vld [vmem:[%s0 + $0x1c] sm:$0xf]
    %v64 = vld [vmem:[#allocation8] sm:$0xff]
    %v65 = vld [vmem:[#allocation8 + $0x8] sm:$0xff]
    %v66 = vld [vmem:[#allocation8 + $0x10] sm:$0xff]
    %v67 = vld [vmem:[#allocation8 + $0x18] sm:$0xff]
    %v68 = vld [vmem:[#allocation8 + $0x20] sm:$0xff]
    %v69 = vld [vmem:[#allocation8 + $0x28] sm:$0xff]
    %v70 = vld [vmem:[#allocation8 + $0x30] sm:$0xff]
    %v71 = vld [vmem:[#allocation8 + $0x38] sm:$0xff]
    %v72 = vld [vmem:[#allocation8 + $0x40] sm:$0xff]
    %v73 = vld [vmem:[#allocation8 + $0x48] sm:$0xff]
    %v74 = vld [vmem:[#allocation8 + $0x50] sm:$0xff]
    %v75 = vld [vmem:[#allocation8 + $0x58] sm:$0xff]
    %v76 = vld [vmem:[#allocation8 + $0x60] sm:$0xff]
    %v77 = vld [vmem:[#allocation8 + $0x68] sm:$0xff]
    %v78 = vld [vmem:[#allocation8 + $0x70] sm:$0xff]
    %v79 = vld [vmem:[#allocation8 + $0x78] sm:$0xff]
    %v80 = vld [vmem:[#allocation8 + $0x80] sm:$0xff]
    %v81 = vld [vmem:[#allocation8 + $0x88] sm:$0xff]
    %v82 = vld [vmem:[#allocation8 + $0x90] sm:$0xff]
    %v83 = vld [vmem:[#allocation8 + $0x98] sm:$0xff]
    %v84 = vld [vmem:[#allocation8 + $0xa0] sm:$0xff]
    %v85 = vld [vmem:[#allocation8 + $0xa8] sm:$0xff]
    %v86 = vld [vmem:[#allocation8 + $0xb0] sm:$0xff]
    %v87 = vld [vmem:[#allocation8 + $0xb8] sm:$0xff]
    %v88 = vld [vmem:[#allocation8 + $0xc0] sm:$0xff]
    %v89 = vld [vmem:[#allocation8 + $0xc8] sm:$0xff]
    %v90 = vld [vmem:[#allocation8 + $0xd0] sm:$0xff]
    %v91 = vld [vmem:[#allocation8 + $0xd8] sm:$0xff]
    %v92 = vld [vmem:[#allocation8 + $0xe0] sm:$0xff]
    %v93 = vld [vmem:[#allocation8 + $0xe8] sm:$0xff]
    %v94 = vld [vmem:[#allocation8 + $0xf0] sm:$0xff]
    %v95 = vld [vmem:[#allocation8 + $0xf8] sm:$0xff]
    %v96 = vld [vmem:[#allocation6] sm:$0xff]
    %v97 = vld [vmem:[#allocation6 + $0x8] sm:$0xff]
    %v98 = vld [vmem:[#allocation6 + $0x10] sm:$0xff]
    %v99 = vld [vmem:[#allocation6 + $0x18] sm:$0xff]
    %v100 = vld [vmem:[#allocation6 + $0x20] sm:$0xff]
    %v101 = vld [vmem:[#allocation6 + $0x28] sm:$0xff]
    %v102 = vld [vmem:[#allocation6 + $0x30] sm:$0xff]
    %v103 = vld [vmem:[#allocation6 + $0x38] sm:$0xff]
    %v104 = vld [vmem:[#allocation6 + $0x40] sm:$0xff]
    %v105 = vld [vmem:[#allocation6 + $0x48] sm:$0xff]
    %v106 = vld [vmem:[#allocation6 + $0x50] sm:$0xff]
    %v107 = vld [vmem:[#allocation6 + $0x58] sm:$0xff]
    %v108 = vld [vmem:[#allocation6 + $0x60] sm:$0xff]
    %v109 = vld [vmem:[#allocation6 + $0x68] sm:$0xff]
    %v110 = vld [vmem:[#allocation6 + $0x70] sm:$0xff]
    %v111 = vld [vmem:[#allocation6 + $0x78] sm:$0xff]
    %v112 = vld [vmem:[#allocation6 + $0x80] sm:$0xff]
    %v113 = vld [vmem:[#allocation6 + $0x88] sm:$0xff]
    %v114 = vld [vmem:[#allocation6 + $0x90] sm:$0xff]
    %v115 = vld [vmem:[#allocation6 + $0x98] sm:$0xff]
    %v116 = vld [vmem:[#allocation6 + $0xa0] sm:$0xff]
    %v117 = vld [vmem:[#allocation6 + $0xa8] sm:$0xff]
    %v118 = vld [vmem:[#allocation6 + $0xb0] sm:$0xff]
    %v119 = vld [vmem:[#allocation6 + $0xb8] sm:$0xff]
    %v120 = vld [vmem:[#allocation6 + $0xc0] sm:$0xff]
    %v121 = vld [vmem:[#allocation6 + $0xc8] sm:$0xff]
    %v122 = vld [vmem:[#allocation6 + $0xd0] sm:$0xff]
    %v123 = vld [vmem:[#allocation6 + $0xd8] sm:$0xff]
    %v124 = vld [vmem:[#allocation6 + $0xe0] sm:$0xff]
    %v125 = vld [vmem:[#allocation6 + $0xe8] sm:$0xff]
    %v126 = vld [vmem:[#allocation6 + $0xf0] sm:$0xff]
    %v127 = vld [vmem:[#allocation6 + $0xf8] sm:$0xff]
    %v128 = vld [vmem:[%s3] sm:$0xf]
    %v130 = vlaneseq
    %v131 = vshrl.u32 %v130, 7
    %v132 = vsub.s32 0, %v131
    %v133 = vrot.slane %v128, %v132
    %v134 = vlaneseq
    %v135 = vshrl.u32 %v134, 7
    %v136 = vsub.s32 1, %v135
    %v137 = vrot.slane %v128, %v136
    %v138 = vlaneseq
    %v139 = vshrl.u32 %v138, 7
    %v140 = vsub.s32 2, %v139
    %v141 = vrot.slane %v128, %v140
    %v142 = vlaneseq
    %v143 = vshrl.u32 %v142, 7
    %v144 = vsub.s32 3, %v143
    %v145 = vrot.slane %v128, %v144
    %v158 = vunpack.c.l.b16 %v56
    %v159 = vunpack.c.l.b16 %v57
    %v160 = vunpack.c.l.b16 %v58
    %v161 = vunpack.c.l.b16 %v59
    %v162 = vunpack.c.l.b16 %v60
    %v163 = vunpack.c.l.b16 %v61
    %v164 = vunpack.c.l.b16 %v62
    %v165 = vunpack.c.l.b16 %v63
    %v166 = vpack.c.b16 %v159, %v158
    %v167 = vpack.c.b16 %v161, %v160
    %v168 = vpack.c.b16 %v163, %v162
    %v169 = vpack.c.b16 %v165, %v164
    %v206 = vunpack.c.l.b16 %v96
    %v207 = vunpack.c.h.b16 %v96
    %v208 = vunpack.c.l.b16 %v97
    %v209 = vunpack.c.h.b16 %v97
    %v210 = vunpack.c.l.b16 %v98
    %v211 = vunpack.c.h.b16 %v98
    %v212 = vunpack.c.l.b16 %v99
    %v213 = vunpack.c.h.b16 %v99
    %v214 = vunpack.c.l.b16 %v100
    %v215 = vunpack.c.h.b16 %v100
    %v216 = vunpack.c.l.b16 %v101
    %v217 = vunpack.c.h.b16 %v101
    %v218 = vunpack.c.l.b16 %v102
    %v219 = vunpack.c.h.b16 %v102
    %v220 = vunpack.c.l.b16 %v103
    %v221 = vunpack.c.h.b16 %v103
    %v222 = vunpack.c.l.b16 %v104
    %v223 = vunpack.c.h.b16 %v104
    %v224 = vunpack.c.l.b16 %v105
    %v225 = vunpack.c.h.b16 %v105
    %v226 = vunpack.c.l.b16 %v106
    %v227 = vunpack.c.h.b16 %v106
    %v228 = vunpack.c.l.b16 %v107
    %v229 = vunpack.c.h.b16 %v107
    %v230 = vunpack.c.l.b16 %v108
    %v231 = vunpack.c.h.b16 %v108
    %v232 = vunpack.c.l.b16 %v109
    %v233 = vunpack.c.h.b16 %v109
    %v234 = vunpack.c.l.b16 %v110
    %v235 = vunpack.c.h.b16 %v110
    %v236 = vunpack.c.l.b16 %v111
    %v237 = vunpack.c.h.b16 %v111
    %v238 = vunpack.c.l.b16 %v112
    %v239 = vunpack.c.h.b16 %v112
    %v240 = vunpack.c.l.b16 %v113
    %v241 = vunpack.c.h.b16 %v113
    %v242 = vunpack.c.l.b16 %v114
    %v243 = vunpack.c.h.b16 %v114
    %v244 = vunpack.c.l.b16 %v115
    %v245 = vunpack.c.h.b16 %v115
    %v246 = vunpack.c.l.b16 %v116
    %v247 = vunpack.c.h.b16 %v116
    %v248 = vunpack.c.l.b16 %v117
    %v249 = vunpack.c.h.b16 %v117
    %v250 = vunpack.c.l.b16 %v118
    %v251 = vunpack.c.h.b16 %v118
    %v252 = vunpack.c.l.b16 %v119
    %v253 = vunpack.c.h.b16 %v119
    %v254 = vunpack.c.l.b16 %v120
    %v255 = vunpack.c.h.b16 %v120
    %v256 = vunpack.c.l.b16 %v121
    %v257 = vunpack.c.h.b16 %v121
    %v258 = vunpack.c.l.b16 %v122
    %v259 = vunpack.c.h.b16 %v122
    %v260 = vunpack.c.l.b16 %v123
    %v261 = vunpack.c.h.b16 %v123
    %v262 = vunpack.c.l.b16 %v124
    %v263 = vunpack.c.h.b16 %v124
    %v264 = vunpack.c.l.b16 %v125
    %v265 = vunpack.c.h.b16 %v125
    %v266 = vunpack.c.l.b16 %v126
    %v267 = vunpack.c.h.b16 %v126
    %v268 = vunpack.c.l.b16 %v127
    %v269 = vunpack.c.h.b16 %v127
    %v270 = vpack.c.b16 %v210, %v206
    %v271 = vpack.c.b16 %v211, %v207
    %v272 = vpack.c.b16 %v212, %v208
    %v273 = vpack.c.b16 %v213, %v209
    %v274 = vpack.c.b16 %v218, %v214
    %v275 = vpack.c.b16 %v219, %v215
    %v276 = vpack.c.b16 %v220, %v216
    %v277 = vpack.c.b16 %v221, %v217
    %v278 = vpack.c.b16 %v226, %v222
    %v279 = vpack.c.b16 %v227, %v223
    %v280 = vpack.c.b16 %v228, %v224
    %v281 = vpack.c.b16 %v229, %v225
    %v282 = vpack.c.b16 %v234, %v230
    %v283 = vpack.c.b16 %v235, %v231
    %v284 = vpack.c.b16 %v236, %v232
    %v285 = vpack.c.b16 %v237, %v233
    %v286 = vpack.c.b16 %v242, %v238
    %v287 = vpack.c.b16 %v243, %v239
    %v288 = vpack.c.b16 %v244, %v240
    %v289 = vpack.c.b16 %v245, %v241
    %v290 = vpack.c.b16 %v250, %v246
    %v291 = vpack.c.b16 %v251, %v247
    %v292 = vpack.c.b16 %v252, %v248
    %v293 = vpack.c.b16 %v253, %v249
    %v294 = vpack.c.b16 %v258, %v254
    %v295 = vpack.c.b16 %v259, %v255
    %v296 = vpack.c.b16 %v260, %v256
    %v297 = vpack.c.b16 %v261, %v257
    %v298 = vpack.c.b16 %v266, %v262
    %v299 = vpack.c.b16 %v267, %v263
    %v300 = vpack.c.b16 %v268, %v264
    %v301 = vpack.c.b16 %v269, %v265
    %334 = vmatprep.subr.bf16.mxu0 %v271
    %335 = vmatpush1.bf16.msra.mxu0 %v270
    %336 = vmatprep.subr.bf16.mxu0 %v275
    %337 = vmatpush1.bf16.msra.mxu0 %v274
    %338 = vmatprep.subr.bf16.mxu0 %v279
    %339 = vmatpush1.bf16.msra.mxu0 %v278
    %340 = vmatprep.subr.bf16.mxu0 %v283
    %341 = vmatpush1.bf16.msra.mxu0 %v282
    %342 = vmatprep.subr.bf16.mxu0 %v287
    %343 = vmatpush1.bf16.msra.mxu0 %v286
    %344 = vmatprep.subr.bf16.mxu0 %v291
    %345 = vmatpush1.bf16.msra.mxu0 %v290
    %346 = vmatprep.subr.bf16.mxu0 %v295
    %347 = vmatpush1.bf16.msra.mxu0 %v294
    %348 = vmatprep.subr.bf16.mxu0 %v299
    %349 = vmatpush1.bf16.msra.mxu0 %v298
    %350 = vmatprep.subr.bf16.mxu0 0
    %351 = vmatpush1.bf16.msra.mxu0 0
    %352 = vmatprep.subr.bf16.mxu0 0
    %353 = vmatpush1.bf16.msra.mxu0 0
    %354 = vmatprep.subr.bf16.mxu0 0
    %355 = vmatpush1.bf16.msra.mxu0 0
    %356 = vmatprep.subr.bf16.mxu0 0
    %357 = vmatpush1.bf16.msra.mxu0 0
    %358 = vmatprep.subr.bf16.mxu0 0
    %359 = vmatpush1.bf16.msra.mxu0 0
    %360 = vmatprep.subr.bf16.mxu0 0
    %361 = vmatpush1.bf16.msra.mxu0 0
    %362 = vmatprep.subr.bf16.mxu0 0
    %363 = vmatpush1.bf16.msra.mxu0 0
    %364 = vmatprep.subr.bf16.mxu0 0
    %365 = vmatpush1.bf16.msra.mxu0 0
    %366 = vmatprep.mubr.bf16.mxu0 0
    %367 = vmatmul.mubr.bf16.gmra.mrb[0].mxu0 %v166
    %v368 = vpop.f32.mrb[0].mxu0
    %v369 = vadd.f32 %v133, %v368
    %v370 = vpop.f32.mrb[0].mxu0
    %v371 = vadd.f32 %v137, %v370
    %v372 = vpop.f32.mrb[0].mxu0
    %v373 = vadd.f32 %v133, %v372
    %v374 = vpop.f32.mrb[0].mxu0
    %v375 = vadd.f32 %v137, %v374
    %376 = vmatprep.mubr.bf16.mxu0 0
    %377 = vmatmul.mubr.bf16.gmra.mrb[0].mxu0 %v167
    %v378 = vpop.f32.mrb[0].mxu0
    %v379 = vadd.f32 %v133, %v378
    %v380 = vpop.f32.mrb[0].mxu0
    %v381 = vadd.f32 %v137, %v380
    %v382 = vpop.f32.mrb[0].mxu0
    %v383 = vadd.f32 %v133, %v382
    %v384 = vpop.f32.mrb[0].mxu0
    %v385 = vadd.f32 %v137, %v384
    %386 = vmatprep.mubr.bf16.mxu0 0
    %387 = vmatmul.mubr.bf16.gmra.mrb[0].mxu0 %v168
    %v388 = vpop.f32.mrb[0].mxu0
    %v389 = vadd.f32 %v133, %v388
    %v390 = vpop.f32.mrb[0].mxu0
    %v391 = vadd.f32 %v137, %v390
    %v392 = vpop.f32.mrb[0].mxu0
    %v393 = vadd.f32 %v133, %v392
    %v394 = vpop.f32.mrb[0].mxu0
    %v395 = vadd.f32 %v137, %v394
    %396 = vmatprep.mubr.bf16.mxu0 0
    %397 = vmatmul.mubr.bf16.gmra.mrb[0].mxu0 %v169
    %v398 = vpop.f32.mrb[0].mxu0
    %v399 = vadd.f32 %v133, %v398
    %v400 = vpop.f32.mrb[0].mxu0
    %v401 = vadd.f32 %v137, %v400
    %v402 = vpop.f32.mrb[0].mxu0
    %v403 = vadd.f32 %v133, %v402
    %v404 = vpop.f32.mrb[0].mxu0
    %v405 = vadd.f32 %v137, %v404
    %406 = vdwg.mxu0
    %407 = vmatprep.subr.bf16.mxu0 %v273
    %408 = vmatpush1.bf16.msra.mxu0 %v272
    %409 = vmatprep.subr.bf16.mxu0 %v277
    %410 = vmatpush1.bf16.msra.mxu0 %v276
    %411 = vmatprep.subr.bf16.mxu0 %v281
    %412 = vmatpush1.bf16.msra.mxu0 %v280
    %413 = vmatprep.subr.bf16.mxu0 %v285
    %414 = vmatpush1.bf16.msra.mxu0 %v284
    %415 = vmatprep.subr.bf16.mxu0 %v289
    %416 = vmatpush1.bf16.msra.mxu0 %v288
    %417 = vmatprep.subr.bf16.mxu0 %v293
    %418 = vmatpush1.bf16.msra.mxu0 %v292
    %419 = vmatprep.subr.bf16.mxu0 %v297
    %420 = vmatpush1.bf16.msra.mxu0 %v296
    %421 = vmatprep.subr.bf16.mxu0 %v301
    %422 = vmatpush1.bf16.msra.mxu0 %v300
    %423 = vmatprep.subr.bf16.mxu0 0
    %424 = vmatpush1.bf16.msra.mxu0 0
    %425 = vmatprep.subr.bf16.mxu0 0
    %426 = vmatpush1.bf16.msra.mxu0 0
    %427 = vmatprep.subr.bf16.mxu0 0
    %428 = vmatpush1.bf16.msra.mxu0 0
    %429 = vmatprep.subr.bf16.mxu0 0
    %430 = vmatpush1.bf16.msra.mxu0 0
    %431 = vmatprep.subr.bf16.mxu0 0
    %432 = vmatpush1.bf16.msra.mxu0 0
    %433 = vmatprep.subr.bf16.mxu0 0
    %434 = vmatpush1.bf16.msra.mxu0 0
    %435 = vmatprep.subr.bf16.mxu0 0
    %436 = vmatpush1.bf16.msra.mxu0 0
    %437 = vmatprep.subr.bf16.mxu0 0
    %438 = vmatpush1.bf16.msra.mxu0 0
    %439 = vmatprep.mubr.bf16.mxu0 0
    %440 = vmatmul.mubr.bf16.gmra.mrb[0].mxu0 %v166
    %v441 = vpop.f32.mrb[0].mxu0
    %v442 = vadd.f32 %v141, %v441
    %v443 = vpop.f32.mrb[0].mxu0
    %v444 = vadd.f32 %v145, %v443
    %v445 = vpop.f32.mrb[0].mxu0
    %v446 = vadd.f32 %v141, %v445
    %v447 = vpop.f32.mrb[0].mxu0
    %v448 = vadd.f32 %v145, %v447
    %449 = vmatprep.mubr.bf16.mxu0 0
    %450 = vmatmul.mubr.bf16.gmra.mrb[0].mxu0 %v167
    %v451 = vpop.f32.mrb[0].mxu0
    %v452 = vadd.f32 %v141, %v451
    %v453 = vpop.f32.mrb[0].mxu0
    %v454 = vadd.f32 %v145, %v453
    %v455 = vpop.f32.mrb[0].mxu0
    %v456 = vadd.f32 %v141, %v455
    %v457 = vpop.f32.mrb[0].mxu0
    %v458 = vadd.f32 %v145, %v457
    %459 = vmatprep.mubr.bf16.mxu0 0
    %460 = vmatmul.mubr.bf16.gmra.mrb[0].mxu0 %v168
    %v461 = vpop.f32.mrb[0].mxu0
    %v462 = vadd.f32 %v141, %v461
    %v463 = vpop.f32.mrb[0].mxu0
    %v464 = vadd.f32 %v145, %v463
    %v465 = vpop.f32.mrb[0].mxu0
    %v466 = vadd.f32 %v141, %v465
    %v467 = vpop.f32.mrb[0].mxu0
    %v468 = vadd.f32 %v145, %v467
    %469 = vmatprep.mubr.bf16.mxu0 0
    %470 = vmatmul.mubr.bf16.gmra.mrb[0].mxu0 %v169
    %v471 = vpop.f32.mrb[0].mxu0
    %v472 = vadd.f32 %v141, %v471
    %v473 = vpop.f32.mrb[0].mxu0
    %v474 = vadd.f32 %v145, %v473
    %v475 = vpop.f32.mrb[0].mxu0
    %v476 = vadd.f32 %v141, %v475
    %v477 = vpop.f32.mrb[0].mxu0
    %v478 = vadd.f32 %v145, %v477
    %479 = vdwg.mxu0
    %480 = vst [vmem:[#allocation5] sm:$0xff] %v369
    %481 = vst [vmem:[#allocation5 + $0x8] sm:$0xff] %v371
    %482 = vst [vmem:[#allocation5 + $0x10] sm:$0xff] %v442
    %483 = vst [vmem:[#allocation5 + $0x18] sm:$0xff] %v444
    %484 = vst [vmem:[#allocation5 + $0x20] sm:$0xff] %v373
    %485 = vst [vmem:[#allocation5 + $0x28] sm:$0xff] %v375
    %486 = vst [vmem:[#allocation5 + $0x30] sm:$0xff] %v446
    %487 = vst [vmem:[#allocation5 + $0x38] sm:$0xff] %v448
    %488 = vst [vmem:[#allocation5 + $0x40] sm:$0xff] %v379
    %489 = vst [vmem:[#allocation5 + $0x48] sm:$0xff] %v381
    %490 = vst [vmem:[#allocation5 + $0x50] sm:$0xff] %v452
    %491 = vst [vmem:[#allocation5 + $0x58] sm:$0xff] %v454
    %492 = vst [vmem:[#allocation5 + $0x60] sm:$0xff] %v383
    %493 = vst [vmem:[#allocation5 + $0x68] sm:$0xff] %v385
    %494 = vst [vmem:[#allocation5 + $0x70] sm:$0xff] %v456
    %495 = vst [vmem:[#allocation5 + $0x78] sm:$0xff] %v458
    %496 = vst [vmem:[#allocation5 + $0x80] sm:$0xff] %v389
    %497 = vst [vmem:[#allocation5 + $0x88] sm:$0xff] %v391
    %498 = vst [vmem:[#allocation5 + $0x90] sm:$0xff] %v462
    %499 = vst [vmem:[#allocation5 + $0x98] sm:$0xff] %v464
    %500 = vst [vmem:[#allocation5 + $0xa0] sm:$0xff] %v393
    %501 = vst [vmem:[#allocation5 + $0xa8] sm:$0xff] %v395
    %502 = vst [vmem:[#allocation5 + $0xb0] sm:$0xff] %v466
    %503 = vst [vmem:[#allocation5 + $0xb8] sm:$0xff] %v468
    %504 = vst [vmem:[#allocation5 + $0xc0] sm:$0xff] %v399
    %505 = vst [vmem:[#allocation5 + $0xc8] sm:$0xff] %v401
    %506 = vst [vmem:[#allocation5 + $0xd0] sm:$0xff] %v472
    %507 = vst [vmem:[#allocation5 + $0xd8] sm:$0xff] %v474
    %508 = vst [vmem:[#allocation5 + $0xe0] sm:$0xff] %v403
    %509 = vst [vmem:[#allocation5 + $0xe8] sm:$0xff] %v405
    %510 = vst [vmem:[#allocation5 + $0xf0] sm:$0xff] %v476
    %511 = vst [vmem:[#allocation5 + $0xf8] sm:$0xff] %v478
    %v512 = vld [vmem:[#allocation2] sm:$0xff]
    %v513 = vld [vmem:[#allocation3] sm:$0xff]
    %v514 = vld [vmem:[#allocation5] sm:$0xff]
    %v515 = vld [vmem:[#allocation5 + $0x8] sm:$0xff]
    %v516 = vld [vmem:[#allocation5 + $0x10] sm:$0xff]
    %v517 = vld [vmem:[#allocation5 + $0x18] sm:$0xff]
    %v518 = vpack.c.bf16 %v512, %v512
    %v551 = vunpack.c.l.b16 %v64
    %v552 = vunpack.c.h.b16 %v64
    %v553 = vunpack.c.l.b16 %v65
    %v554 = vunpack.c.h.b16 %v65
    %v555 = vunpack.c.l.b16 %v66
    %v556 = vunpack.c.h.b16 %v66
    %v557 = vunpack.c.l.b16 %v67
    %v558 = vunpack.c.h.b16 %v67
    %v559 = vunpack.c.l.b16 %v68
    %v560 = vunpack.c.h.b16 %v68
    %v561 = vunpack.c.l.b16 %v69
    %v562 = vunpack.c.h.b16 %v69
    %v563 = vunpack.c.l.b16 %v70
    %v564 = vunpack.c.h.b16 %v70
    %v565 = vunpack.c.l.b16 %v71
    %v566 = vunpack.c.h.b16 %v71
    %v567 = vunpack.c.l.b16 %v72
    %v568 = vunpack.c.h.b16 %v72
    %v569 = vunpack.c.l.b16 %v73
    %v570 = vunpack.c.h.b16 %v73
    %v571 = vunpack.c.l.b16 %v74
    %v572 = vunpack.c.h.b16 %v74
    %v573 = vunpack.c.l.b16 %v75
    %v574 = vunpack.c.h.b16 %v75
    %v575 = vunpack.c.l.b16 %v76
    %v576 = vunpack.c.h.b16 %v76
    %v577 = vunpack.c.l.b16 %v77
    %v578 = vunpack.c.h.b16 %v77
    %v579 = vunpack.c.l.b16 %v78
    %v580 = vunpack.c.h.b16 %v78
    %v581 = vunpack.c.l.b16 %v79
    %v582 = vunpack.c.h.b16 %v79
    %v583 = vunpack.c.l.b16 %v80
    %v584 = vunpack.c.h.b16 %v80
    %v585 = vunpack.c.l.b16 %v81
    %v586 = vunpack.c.h.b16 %v81
    %v587 = vunpack.c.l.b16 %v82
    %v588 = vunpack.c.h.b16 %v82
    %v589 = vunpack.c.l.b16 %v83
    %v590 = vunpack.c.h.b16 %v83
    %v591 = vunpack.c.l.b16 %v84
    %v592 = vunpack.c.h.b16 %v84
    %v593 = vunpack.c.l.b16 %v85
    %v594 = vunpack.c.h.b16 %v85
    %v595 = vunpack.c.l.b16 %v86
    %v596 = vunpack.c.h.b16 %v86
    %v597 = vunpack.c.l.b16 %v87
    %v598 = vunpack.c.h.b16 %v87
    %v599 = vunpack.c.l.b16 %v88
    %v600 = vunpack.c.h.b16 %v88
    %v601 = vunpack.c.l.b16 %v89
    %v602 = vunpack.c.h.b16 %v89
    %v603 = vunpack.c.l.b16 %v90
    %v604 = vunpack.c.h.b16 %v90
    %v605 = vunpack.c.l.b16 %v91
    %v606 = vunpack.c.h.b16 %v91
    %v607 = vunpack.c.l.b16 %v92
    %v608 = vunpack.c.h.b16 %v92
    %v609 = vunpack.c.l.b16 %v93
    %v610 = vunpack.c.h.b16 %v93
    %v611 = vunpack.c.l.b16 %v94
    %v612 = vunpack.c.h.b16 %v94
    %v613 = vunpack.c.l.b16 %v95
    %v614 = vunpack.c.h.b16 %v95
    %v615 = vpack.c.b16 %v555, %v551
    %v616 = vpack.c.b16 %v556, %v552
    %v617 = vpack.c.b16 %v557, %v553
    %v618 = vpack.c.b16 %v558, %v554
    %v619 = vpack.c.b16 %v563, %v559
    %v620 = vpack.c.b16 %v564, %v560
    %v621 = vpack.c.b16 %v565, %v561
    %v622 = vpack.c.b16 %v566, %v562
    %v623 = vpack.c.b16 %v571, %v567
    %v624 = vpack.c.b16 %v572, %v568
    %v625 = vpack.c.b16 %v573, %v569
    %v626 = vpack.c.b16 %v574, %v570
    %v627 = vpack.c.b16 %v579, %v575
    %v628 = vpack.c.b16 %v580, %v576
    %v629 = vpack.c.b16 %v581, %v577
    %v630 = vpack.c.b16 %v582, %v578
    %v631 = vpack.c.b16 %v587, %v583
    %v632 = vpack.c.b16 %v588, %v584
    %v633 = vpack.c.b16 %v589, %v585
    %v634 = vpack.c.b16 %v590, %v586
    %v635 = vpack.c.b16 %v595, %v591
    %v636 = vpack.c.b16 %v596, %v592
    %v637 = vpack.c.b16 %v597, %v593
    %v638 = vpack.c.b16 %v598, %v594
    %v639 = vpack.c.b16 %v603, %v599
    %v640 = vpack.c.b16 %v604, %v600
    %v641 = vpack.c.b16 %v605, %v601
    %v642 = vpack.c.b16 %v606, %v602
    %v643 = vpack.c.b16 %v611, %v607
    %v644 = vpack.c.b16 %v612, %v608
    %v645 = vpack.c.b16 %v613, %v609
    %v646 = vpack.c.b16 %v614, %v610
    %679 = vmatprep.subr.bf16.mxu0 %v616
    %680 = vmatpush1.bf16.msra.mxu0 %v615
    %681 = vmatprep.subr.bf16.mxu0 %v620
    %682 = vmatpush1.bf16.msra.mxu0 %v619
    %683 = vmatprep.subr.bf16.mxu0 %v624
    %684 = vmatpush1.bf16.msra.mxu0 %v623
    %685 = vmatprep.subr.bf16.mxu0 %v628
    %686 = vmatpush1.bf16.msra.mxu0 %v627
    %687 = vmatprep.subr.bf16.mxu0 %v632
    %688 = vmatpush1.bf16.msra.mxu0 %v631
    %689 = vmatprep.subr.bf16.mxu0 %v636
    %690 = vmatpush1.bf16.msra.mxu0 %v635
    %691 = vmatprep.subr.bf16.mxu0 %v640
    %692 = vmatpush1.bf16.msra.mxu0 %v639
    %693 = vmatprep.subr.bf16.mxu0 %v644
    %694 = vmatpush1.bf16.msra.mxu0 %v643
    %695 = vmatprep.subr.bf16.mxu0 0
    %696 = vmatpush1.bf16.msra.mxu0 0
    %697 = vmatprep.subr.bf16.mxu0 0
    %698 = vmatpush1.bf16.msra.mxu0 0
    %699 = vmatprep.subr.bf16.mxu0 0
    %700 = vmatpush1.bf16.msra.mxu0 0
    %701 = vmatprep.subr.bf16.mxu0 0
    %702 = vmatpush1.bf16.msra.mxu0 0
    %703 = vmatprep.subr.bf16.mxu0 0
    %704 = vmatpush1.bf16.msra.mxu0 0
    %705 = vmatprep.subr.bf16.mxu0 0
    %706 = vmatpush1.bf16.msra.mxu0 0
    %707 = vmatprep.subr.bf16.mxu0 0
    %708 = vmatpush1.bf16.msra.mxu0 0
    %709 = vmatprep.subr.bf16.mxu0 0
    %710 = vmatpush1.bf16.msra.mxu0 0
    %711 = vmatprep.mubr.bf16.mxu0 0
    %712 = vmatmul.mubr.bf16.gmra.mrb[0].mxu0 %v518
    %v713 = vpop.f32.mrb[0].mxu0
    %v714 = vadd.f32 0.0, %v713
    %v715 = vpop.f32.mrb[0].mxu0
    %v716 = vadd.f32 0.0, %v715
    %v717 = vpop.f32.mrb[0].mxu0
    %v718 = vpop.f32.mrb[0].mxu0
    %719 = vdwg.mxu0
    %720 = vmatprep.subr.bf16.mxu0 %v618
    %721 = vmatpush1.bf16.msra.mxu0 %v617
    %722 = vmatprep.subr.bf16.mxu0 %v622
    %723 = vmatpush1.bf16.msra.mxu0 %v621
    %724 = vmatprep.subr.bf16.mxu0 %v626
    %725 = vmatpush1.bf16.msra.mxu0 %v625
    %726 = vmatprep.subr.bf16.mxu0 %v630
    %727 = vmatpush1.bf16.msra.mxu0 %v629
    %728 = vmatprep.subr.bf16.mxu0 %v634
    %729 = vmatpush1.bf16.msra.mxu0 %v633
    %730 = vmatprep.subr.bf16.mxu0 %v638
    %731 = vmatpush1.bf16.msra.mxu0 %v637
    %732 = vmatprep.subr.bf16.mxu0 %v642
    %733 = vmatpush1.bf16.msra.mxu0 %v641
    %734 = vmatprep.subr.bf16.mxu0 %v646
    %735 = vmatpush1.bf16.msra.mxu0 %v645
    %736 = vmatprep.subr.bf16.mxu0 0
    %737 = vmatpush1.bf16.msra.mxu0 0
    %738 = vmatprep.subr.bf16.mxu0 0
    %739 = vmatpush1.bf16.msra.mxu0 0
    %740 = vmatprep.subr.bf16.mxu0 0
    %741 = vmatpush1.bf16.msra.mxu0 0
    %742 = vmatprep.subr.bf16.mxu0 0
    %743 = vmatpush1.bf16.msra.mxu0 0
    %744 = vmatprep.subr.bf16.mxu0 0
    %745 = vmatpush1.bf16.msra.mxu0 0
    %746 = vmatprep.subr.bf16.mxu0 0
    %747 = vmatpush1.bf16.msra.mxu0 0
    %748 = vmatprep.subr.bf16.mxu0 0
    %749 = vmatpush1.bf16.msra.mxu0 0
    %750 = vmatprep.subr.bf16.mxu0 0
    %751 = vmatpush1.bf16.msra.mxu0 0
    %752 = vmatprep.mubr.bf16.mxu0 0
    %753 = vmatmul.mubr.bf16.gmra.mrb[0].mxu0 %v518
    %v754 = vpop.f32.mrb[0].mxu0
    %v755 = vadd.f32 0.0, %v754
    %v756 = vpop.f32.mrb[0].mxu0
    %v757 = vadd.f32 0.0, %v756
    %v758 = vpop.f32.mrb[0].mxu0
    %v759 = vpop.f32.mrb[0].mxu0
    %760 = vdwg.mxu0
    %v761 = vadd.f32 %v514, %v714
    %v762 = vadd.f32 %v515, %v716
    %v763 = vadd.f32 %v516, %v755
    %v764 = vadd.f32 %v517, %v757
    %v765 = vxor.u32 %v761, 2147483648
    %v766 = vmul.f32 %v765, 1.442695
    %v767 = vpow.pop %v766
    %v768 = vadd.f32 %v767, 1.0
    %v769 = vrcp.pop %v768
    %v770 = vmul.f32 1.0, %v769
    %v771 = vxor.u32 %v762, 2147483648
    %v772 = vmul.f32 %v771, 1.442695
    %v773 = vpow.pop %v772
    %v774 = vadd.f32 %v773, 1.0
    %v775 = vrcp.pop %v774
    %v776 = vmul.f32 1.0, %v775
    %v777 = vtanh.pop %v763
    %v778 = vxor.u32 %v764, 2147483648
    %v779 = vmul.f32 %v778, 1.442695
    %v780 = vpow.pop %v779
    %v781 = vadd.f32 %v780, 1.0
    %v782 = vrcp.pop %v781
    %v783 = vmul.f32 1.0, %v782
    %v784 = vmul.f32 %v776, %v513
    %v785 = vmul.f32 %v770, %v777
    %v786 = vadd.f32 %v784, %v785
    %v787 = vtanh.pop %v786
    %v788 = vmul.f32 %v783, %v787
    %v789 = vpack.c.bf16 %v788, %v788
    %790 = vst [vmem:[#allocation4] sm:$0xf] %v789
    %s791 = scalar_lea.vmem [#allocation5], 32
    %v792 = vld [vmem:[%s791] sm:$0xff]
    %v793 = vld [vmem:[%s791 + $0x8] sm:$0xff]
    %v794 = vld [vmem:[%s791 + $0x10] sm:$0xff]
    %v795 = vld [vmem:[%s791 + $0x18] sm:$0xff]
    %796 = vmatprep.subr.bf16.mxu0 %v616
    %797 = vmatpush1.bf16.msra.mxu0 %v615
    %798 = vmatprep.subr.bf16.mxu0 %v620
    %799 = vmatpush1.bf16.msra.mxu0 %v619
    %800 = vmatprep.subr.bf16.mxu0 %v624
    %801 = vmatpush1.bf16.msra.mxu0 %v623
    %802 = vmatprep.subr.bf16.mxu0 %v628
    %803 = vmatpush1.bf16.msra.mxu0 %v627
    %804 = vmatprep.subr.bf16.mxu0 %v632
    %805 = vmatpush1.bf16.msra.mxu0 %v631
    %806 = vmatprep.subr.bf16.mxu0 %v636
    %807 = vmatpush1.bf16.msra.mxu0 %v635
    %808 = vmatprep.subr.bf16.mxu0 %v640
    %809 = vmatpush1.bf16.msra.mxu0 %v639
    %810 = vmatprep.subr.bf16.mxu0 %v644
    %811 = vmatpush1.bf16.msra.mxu0 %v643
    %812 = vmatprep.subr.bf16.mxu0 0
    %813 = vmatpush1.bf16.msra.mxu0 0
    %814 = vmatprep.subr.bf16.mxu0 0
    %815 = vmatpush1.bf16.msra.mxu0 0
    %816 = vmatprep.subr.bf16.mxu0 0
    %817 = vmatpush1.bf16.msra.mxu0 0
    %818 = vmatprep.subr.bf16.mxu0 0
    %819 = vmatpush1.bf16.msra.mxu0 0
    %820 = vmatprep.subr.bf16.mxu0 0
    %821 = vmatpush1.bf16.msra.mxu0 0
    %822 = vmatprep.subr.bf16.mxu0 0
    %823 = vmatpush1.bf16.msra.mxu0 0
    %824 = vmatprep.subr.bf16.mxu0 0
    %825 = vmatpush1.bf16.msra.mxu0 0
    %826 = vmatprep.subr.bf16.mxu0 0
    %827 = vmatpush1.bf16.msra.mxu0 0
    %828 = vmatprep.mubr.bf16.mxu0 0
    %829 = vmatmul.mubr.bf16.gmra.mrb[0].mxu0 %v789
    %v830 = vpop.f32.mrb[0].mxu0
    %v831 = vadd.f32 0.0, %v830
    %v832 = vpop.f32.mrb[0].mxu0
    %v833 = vadd.f32 0.0, %v832
    %v834 = vpop.f32.mrb[0].mxu0
    %v835 = vpop.f32.mrb[0].mxu0
    %836 = vdwg.mxu0
    %837 = vmatprep.subr.bf16.mxu0 %v618
    %838 = vmatpush1.bf16.msra.mxu0 %v617
    %839 = vmatprep.subr.bf16.mxu0 %v622
    %840 = vmatpush1.bf16.msra.mxu0 %v621
    %841 = vmatprep.subr.bf16.mxu0 %v626
    %842 = vmatpush1.bf16.msra.mxu0 %v625
    %843 = vmatprep.subr.bf16.mxu0 %v630
    %844 = vmatpush1.bf16.msra.mxu0 %v629
    %845 = vmatprep.subr.bf16.mxu0 %v634
    %846 = vmatpush1.bf16.msra.mxu0 %v633
    %847 = vmatprep.subr.bf16.mxu0 %v638
    %848 = vmatpush1.bf16.msra.mxu0 %v637
    %849 = vmatprep.subr.bf16.mxu0 %v642
    %850 = vmatpush1.bf16.msra.mxu0 %v641
    %851 = vmatprep.subr.bf16.mxu0 %v646
    %852 = vmatpush1.bf16.msra.mxu0 %v645
    %853 = vmatprep.subr.bf16.mxu0 0
    %854 = vmatpush1.bf16.msra.mxu0 0
    %855 = vmatprep.subr.bf16.mxu0 0
    %856 = vmatpush1.bf16.msra.mxu0 0
    %857 = vmatprep.subr.bf16.mxu0 0
    %858 = vmatpush1.bf16.msra.mxu0 0
    %859 = vmatprep.subr.bf16.mxu0 0
    %860 = vmatpush1.bf16.msra.mxu0 0
    %861 = vmatprep.subr.bf16.mxu0 0
    %862 = vmatpush1.bf16.msra.mxu0 0
    %863 = vmatprep.subr.bf16.mxu0 0
    %864 = vmatpush1.bf16.msra.mxu0 0
    %865 = vmatprep.subr.bf16.mxu0 0
    %866 = vmatpush1.bf16.msra.mxu0 0
    %867 = vmatprep.subr.bf16.mxu0 0
    %868 = vmatpush1.bf16.msra.mxu0 0
    %869 = vmatprep.mubr.bf16.mxu0 0
    %870 = vmatmul.mubr.bf16.gmra.mrb[0].mxu0 %v789
    %v871 = vpop.f32.mrb[0].mxu0
    %v872 = vadd.f32 0.0, %v871
    %v873 = vpop.f32.mrb[0].mxu0
    %v874 = vadd.f32 0.0, %v873
    %v875 = vpop.f32.mrb[0].mxu0
    %v876 = vpop.f32.mrb[0].mxu0
    %877 = vdwg.mxu0
    %v878 = vadd.f32 %v792, %v831
    %v879 = vadd.f32 %v793, %v833
    %v880 = vadd.f32 %v794, %v872
    %v881 = vadd.f32 %v795, %v874
    %v882 = vxor.u32 %v878, 2147483648
    %v883 = vmul.f32 %v882, 1.442695
    %v884 = vpow.pop %v883
    %v885 = vadd.f32 %v884, 1.0
    %v886 = vrcp.pop %v885
    %v887 = vmul.f32 1.0, %v886
    %v888 = vxor.u32 %v879, 2147483648
    %v889 = vmul.f32 %v888, 1.442695
    %v890 = vpow.pop %v889
    %v891 = vadd.f32 %v890, 1.0
    %v892 = vrcp.pop %v891
    %v893 = vmul.f32 1.0, %v892
    %v894 = vtanh.pop %v880
    %v895 = vxor.u32 %v881, 2147483648
    %v896 = vmul.f32 %v895, 1.442695
    %v897 = vpow.pop %v896
    %v898 = vadd.f32 %v897, 1.0
    %v899 = vrcp.pop %v898
    %v900 = vmul.f32 1.0, %v899
    %v901 = vmul.f32 %v893, %v786
    %v902 = vmul.f32 %v887, %v894
    %v903 = vadd.f32 %v901, %v902
    %v904 = vtanh.pop %v903
    %v905 = vmul.f32 %v900, %v904
    %v906 = vpack.c.bf16 %v905, %v905
    %s907 = scalar_lea.vmem [#allocation4], 4
    %908 = vst [vmem:[%s907] sm:$0xf] %v906
    %s909 = scalar_lea.vmem [#allocation5], 64
    %v910 = vld [vmem:[%s909] sm:$0xff]
    %v911 = vld [vmem:[%s909 + $0x8] sm:$0xff]
    %v912 = vld [vmem:[%s909 + $0x10] sm:$0xff]
    %v913 = vld [vmem:[%s909 + $0x18] sm:$0xff]
    %914 = vmatprep.subr.bf16.mxu0 %v616
    %915 = vmatpush1.bf16.msra.mxu0 %v615
    %916 = vmatprep.subr.bf16.mxu0 %v620
    %917 = vmatpush1.bf16.msra.mxu0 %v619
    %918 = vmatprep.subr.bf16.mxu0 %v624
    %919 = vmatpush1.bf16.msra.mxu0 %v623
    %920 = vmatprep.subr.bf16.mxu0 %v628
    %921 = vmatpush1.bf16.msra.mxu0 %v627
    %922 = vmatprep.subr.bf16.mxu0 %v632
    %923 = vmatpush1.bf16.msra.mxu0 %v631
    %924 = vmatprep.subr.bf16.mxu0 %v636
    %925 = vmatpush1.bf16.msra.mxu0 %v635
    %926 = vmatprep.subr.bf16.mxu0 %v640
    %927 = vmatpush1.bf16.msra.mxu0 %v639
    %928 = vmatprep.subr.bf16.mxu0 %v644
    %929 = vmatpush1.bf16.msra.mxu0 %v643
    %930 = vmatprep.subr.bf16.mxu0 0
    %931 = vmatpush1.bf16.msra.mxu0 0
    %932 = vmatprep.subr.bf16.mxu0 0
    %933 = vmatpush1.bf16.msra.mxu0 0
    %934 = vmatprep.subr.bf16.mxu0 0
    %935 = vmatpush1.bf16.msra.mxu0 0
    %936 = vmatprep.subr.bf16.mxu0 0
    %937 = vmatpush1.bf16.msra.mxu0 0
    %938 = vmatprep.subr.bf16.mxu0 0
    %939 = vmatpush1.bf16.msra.mxu0 0
    %940 = vmatprep.subr.bf16.mxu0 0
    %941 = vmatpush1.bf16.msra.mxu0 0
    %942 = vmatprep.subr.bf16.mxu0 0
    %943 = vmatpush1.bf16.msra.mxu0 0
    %944 = vmatprep.subr.bf16.mxu0 0
    %945 = vmatpush1.bf16.msra.mxu0 0
    %946 = vmatprep.mubr.bf16.mxu0 0
    %947 = vmatmul.mubr.bf16.gmra.mrb[0].mxu0 %v906
    %v948 = vpop.f32.mrb[0].mxu0
    %v949 = vadd.f32 0.0, %v948
    %v950 = vpop.f32.mrb[0].mxu0
    %v951 = vadd.f32 0.0, %v950
    %v952 = vpop.f32.mrb[0].mxu0
    %v953 = vpop.f32.mrb[0].mxu0
    %954 = vdwg.mxu0
    %955 = vmatprep.subr.bf16.mxu0 %v618
    %956 = vmatpush1.bf16.msra.mxu0 %v617
    %957 = vmatprep.subr.bf16.mxu0 %v622
    %958 = vmatpush1.bf16.msra.mxu0 %v621
    %959 = vmatprep.subr.bf16.mxu0 %v626
    %960 = vmatpush1.bf16.msra.mxu0 %v625
    %961 = vmatprep.subr.bf16.mxu0 %v630
    %962 = vmatpush1.bf16.msra.mxu0 %v629
    %963 = vmatprep.subr.bf16.mxu0 %v634
    %964 = vmatpush1.bf16.msra.mxu0 %v633
    %965 = vmatprep.subr.bf16.mxu0 %v638
    %966 = vmatpush1.bf16.msra.mxu0 %v637
    %967 = vmatprep.subr.bf16.mxu0 %v642
    %968 = vmatpush1.bf16.msra.mxu0 %v641
    %969 = vmatprep.subr.bf16.mxu0 %v646
    %970 = vmatpush1.bf16.msra.mxu0 %v645
    %971 = vmatprep.subr.bf16.mxu0 0
    %972 = vmatpush1.bf16.msra.mxu0 0
    %973 = vmatprep.subr.bf16.mxu0 0
    %974 = vmatpush1.bf16.msra.mxu0 0
    %975 = vmatprep.subr.bf16.mxu0 0
    %976 = vmatpush1.bf16.msra.mxu0 0
    %977 = vmatprep.subr.bf16.mxu0 0
    %978 = vmatpush1.bf16.msra.mxu0 0
    %979 = vmatprep.subr.bf16.mxu0 0
    %980 = vmatpush1.bf16.msra.mxu0 0
    %981 = vmatprep.subr.bf16.mxu0 0
    %982 = vmatpush1.bf16.msra.mxu0 0
    %983 = vmatprep.subr.bf16.mxu0 0
    %984 = vmatpush1.bf16.msra.mxu0 0
    %985 = vmatprep.subr.bf16.mxu0 0
    %986 = vmatpush1.bf16.msra.mxu0 0
    %987 = vmatprep.mubr.bf16.mxu0 0
    %988 = vmatmul.mubr.bf16.gmra.mrb[0].mxu0 %v906
    %v989 = vpop.f32.mrb[0].mxu0
    %v990 = vadd.f32 0.0, %v989
    %v991 = vpop.f32.mrb[0].mxu0
    %v992 = vadd.f32 0.0, %v991
    %v993 = vpop.f32.mrb[0].mxu0
    %v994 = vpop.f32.mrb[0].mxu0
    %995 = vdwg.mxu0
    %v996 = vadd.f32 %v910, %v949
    %v997 = vadd.f32 %v911, %v951
    %v998 = vadd.f32 %v912, %v990
    %v999 = vadd.f32 %v913, %v992
    %v1000 = vxor.u32 %v996, 2147483648
    %v1001 = vmul.f32 %v1000, 1.442695
    %v1002 = vpow.pop %v1001
    %v1003 = vadd.f32 %v1002, 1.0
    %v1004 = vrcp.pop %v1003
    %v1005 = vmul.f32 1.0, %v1004
    %v1006 = vxor.u32 %v997, 2147483648
    %v1007 = vmul.f32 %v1006, 1.442695
    %v1008 = vpow.pop %v1007
    %v1009 = vadd.f32 %v1008, 1.0
    %v1010 = vrcp.pop %v1009
    %v1011 = vmul.f32 1.0, %v1010
    %v1012 = vtanh.pop %v998
    %v1013 = vxor.u32 %v999, 2147483648
    %v1014 = vmul.f32 %v1013, 1.442695
    %v1015 = vpow.pop %v1014
    %v1016 = vadd.f32 %v1015, 1.0
    %v1017 = vrcp.pop %v1016
    %v1018 = vmul.f32 1.0, %v1017
    %v1019 = vmul.f32 %v1011, %v903
    %v1020 = vmul.f32 %v1005, %v1012
    %v1021 = vadd.f32 %v1019, %v1020
    %v1022 = vtanh.pop %v1021
    %v1023 = vmul.f32 %v1018, %v1022
    %v1024 = vpack.c.bf16 %v1023, %v1023
    %s1025 = scalar_lea.vmem [#allocation4], 8
    %1026 = vst [vmem:[%s1025] sm:$0xf] %v1024
    %s1027 = scalar_lea.vmem [#allocation5], 96
    %v1028 = vld [vmem:[%s1027] sm:$0xff]
    %v1029 = vld [vmem:[%s1027 + $0x8] sm:$0xff]
    %v1030 = vld [vmem:[%s1027 + $0x10] sm:$0xff]
    %v1031 = vld [vmem:[%s1027 + $0x18] sm:$0xff]
    %1032 = vmatprep.subr.bf16.mxu0 %v616
    %1033 = vmatpush1.bf16.msra.mxu0 %v615
    %1034 = vmatprep.subr.bf16.mxu0 %v620
    %1035 = vmatpush1.bf16.msra.mxu0 %v619
    %1036 = vmatprep.subr.bf16.mxu0 %v624
    %1037 = vmatpush1.bf16.msra.mxu0 %v623
    %1038 = vmatprep.subr.bf16.mxu0 %v628
    %1039 = vmatpush1.bf16.msra.mxu0 %v627
    %1040 = vmatprep.subr.bf16.mxu0 %v632
    %1041 = vmatpush1.bf16.msra.mxu0 %v631
    %1042 = vmatprep.subr.bf16.mxu0 %v636
    %1043 = vmatpush1.bf16.msra.mxu0 %v635
    %1044 = vmatprep.subr.bf16.mxu0 %v640
    %1045 = vmatpush1.bf16.msra.mxu0 %v639
    %1046 = vmatprep.subr.bf16.mxu0 %v644
    %1047 = vmatpush1.bf16.msra.mxu0 %v643
    %1048 = vmatprep.subr.bf16.mxu0 0
    %1049 = vmatpush1.bf16.msra.mxu0 0
    %1050 = vmatprep.subr.bf16.mxu0 0
    %1051 = vmatpush1.bf16.msra.mxu0 0
    %1052 = vmatprep.subr.bf16.mxu0 0
    %1053 = vmatpush1.bf16.msra.mxu0 0
    %1054 = vmatprep.subr.bf16.mxu0 0
    %1055 = vmatpush1.bf16.msra.mxu0 0
    %1056 = vmatprep.subr.bf16.mxu0 0
    %1057 = vmatpush1.bf16.msra.mxu0 0
    %1058 = vmatprep.subr.bf16.mxu0 0
    %1059 = vmatpush1.bf16.msra.mxu0 0
    %1060 = vmatprep.subr.bf16.mxu0 0
    %1061 = vmatpush1.bf16.msra.mxu0 0
    %1062 = vmatprep.subr.bf16.mxu0 0
    %1063 = vmatpush1.bf16.msra.mxu0 0
    %1064 = vmatprep.mubr.bf16.mxu0 0
    %1065 = vmatmul.mubr.bf16.gmra.mrb[0].mxu0 %v1024
    %v1066 = vpop.f32.mrb[0].mxu0
    %v1067 = vadd.f32 0.0, %v1066
    %v1068 = vpop.f32.mrb[0].mxu0
    %v1069 = vadd.f32 0.0, %v1068
    %v1070 = vpop.f32.mrb[0].mxu0
    %v1071 = vpop.f32.mrb[0].mxu0
    %1072 = vdwg.mxu0
    %1073 = vmatprep.subr.bf16.mxu0 %v618
    %1074 = vmatpush1.bf16.msra.mxu0 %v617
    %1075 = vmatprep.subr.bf16.mxu0 %v622
    %1076 = vmatpush1.bf16.msra.mxu0 %v621
    %1077 = vmatprep.subr.bf16.mxu0 %v626
    %1078 = vmatpush1.bf16.msra.mxu0 %v625
    %1079 = vmatprep.subr.bf16.mxu0 %v630
    %1080 = vmatpush1.bf16.msra.mxu0 %v629
    %1081 = vmatprep.subr.bf16.mxu0 %v634
    %1082 = vmatpush1.bf16.msra.mxu0 %v633
    %1083 = vmatprep.subr.bf16.mxu0 %v638
    %1084 = vmatpush1.bf16.msra.mxu0 %v637
    %1085 = vmatprep.subr.bf16.mxu0 %v642
    %1086 = vmatpush1.bf16.msra.mxu0 %v641
    %1087 = vmatprep.subr.bf16.mxu0 %v646
    %1088 = vmatpush1.bf16.msra.mxu0 %v645
    %1089 = vmatprep.subr.bf16.mxu0 0
    %1090 = vmatpush1.bf16.msra.mxu0 0
    %1091 = vmatprep.subr.bf16.mxu0 0
    %1092 = vmatpush1.bf16.msra.mxu0 0
    %1093 = vmatprep.subr.bf16.mxu0 0
    %1094 = vmatpush1.bf16.msra.mxu0 0
    %1095 = vmatprep.subr.bf16.mxu0 0
    %1096 = vmatpush1.bf16.msra.mxu0 0
    %1097 = vmatprep.subr.bf16.mxu0 0
    %1098 = vmatpush1.bf16.msra.mxu0 0
    %1099 = vmatprep.subr.bf16.mxu0 0
    %1100 = vmatpush1.bf16.msra.mxu0 0
    %1101 = vmatprep.subr.bf16.mxu0 0
    %1102 = vmatpush1.bf16.msra.mxu0 0
    %1103 = vmatprep.subr.bf16.mxu0 0
    %1104 = vmatpush1.bf16.msra.mxu0 0
    %1105 = vmatprep.mubr.bf16.mxu0 0
    %1106 = vmatmul.mubr.bf16.gmra.mrb[0].mxu0 %v1024
    %v1107 = vpop.f32.mrb[0].mxu0
    %v1108 = vadd.f32 0.0, %v1107
    %v1109 = vpop.f32.mrb[0].mxu0
    %v1110 = vadd.f32 0.0, %v1109
    %v1111 = vpop.f32.mrb[0].mxu0
    %v1112 = vpop.f32.mrb[0].mxu0
    %1113 = vdwg.mxu0
    %v1114 = vadd.f32 %v1028, %v1067
    %v1115 = vadd.f32 %v1029, %v1069
    %v1116 = vadd.f32 %v1030, %v1108
    %v1117 = vadd.f32 %v1031, %v1110
    %v1118 = vxor.u32 %v1114, 2147483648
    %v1119 = vmul.f32 %v1118, 1.442695
    %v1120 = vpow.pop %v1119
    %v1121 = vadd.f32 %v1120, 1.0
    %v1122 = vrcp.pop %v1121
    %v1123 = vmul.f32 1.0, %v1122
    %v1124 = vxor.u32 %v1115, 2147483648
    %v1125 = vmul.f32 %v1124, 1.442695
    %v1126 = vpow.pop %v1125
    %v1127 = vadd.f32 %v1126, 1.0
    %v1128 = vrcp.pop %v1127
    %v1129 = vmul.f32 1.0, %v1128
    %v1130 = vtanh.pop %v1116
    %v1131 = vxor.u32 %v1117, 2147483648
    %v1132 = vmul.f32 %v1131, 1.442695
    %v1133 = vpow.pop %v1132
    %v1134 = vadd.f32 %v1133, 1.0
    %v1135 = vrcp.pop %v1134
    %v1136 = vmul.f32 1.0, %v1135
    %v1137 = vmul.f32 %v1129, %v1021
    %v1138 = vmul.f32 %v1123, %v1130
    %v1139 = vadd.f32 %v1137, %v1138
    %v1140 = vtanh.pop %v1139
    %v1141 = vmul.f32 %v1136, %v1140
    %v1142 = vpack.c.bf16 %v1141, %v1141
    %s1143 = scalar_lea.vmem [#allocation4], 12
    %1144 = vst [vmem:[%s1143] sm:$0xf] %v1142
    %s1145 = scalar_lea.vmem [#allocation5], 128
    %v1146 = vld [vmem:[%s1145] sm:$0xff]
    %v1147 = vld [vmem:[%s1145 + $0x8] sm:$0xff]
    %v1148 = vld [vmem:[%s1145 + $0x10] sm:$0xff]
    %v1149 = vld [vmem:[%s1145 + $0x18] sm:$0xff]
    %1150 = vmatprep.subr.bf16.mxu0 %v616
    %1151 = vmatpush1.bf16.msra.mxu0 %v615
    %1152 = vmatprep.subr.bf16.mxu0 %v620
    %1153 = vmatpush1.bf16.msra.mxu0 %v619
    %1154 = vmatprep.subr.bf16.mxu0 %v624
    %1155 = vmatpush1.bf16.msra.mxu0 %v623
    %1156 = vmatprep.subr.bf16.mxu0 %v628
    %1157 = vmatpush1.bf16.msra.mxu0 %v627
    %1158 = vmatprep.subr.bf16.mxu0 %v632
    %1159 = vmatpush1.bf16.msra.mxu0 %v631
    %1160 = vmatprep.subr.bf16.mxu0 %v636
    %1161 = vmatpush1.bf16.msra.mxu0 %v635
    %1162 = vmatprep.subr.bf16.mxu0 %v640
    %1163 = vmatpush1.bf16.msra.mxu0 %v639
    %1164 = vmatprep.subr.bf16.mxu0 %v644
    %1165 = vmatpush1.bf16.msra.mxu0 %v643
    %1166 = vmatprep.subr.bf16.mxu0 0
    %1167 = vmatpush1.bf16.msra.mxu0 0
    %1168 = vmatprep.subr.bf16.mxu0 0
    %1169 = vmatpush1.bf16.msra.mxu0 0
    %1170 = vmatprep.subr.bf16.mxu0 0
    %1171 = vmatpush1.bf16.msra.mxu0 0
    %1172 = vmatprep.subr.bf16.mxu0 0
    %1173 = vmatpush1.bf16.msra.mxu0 0
    %1174 = vmatprep.subr.bf16.mxu0 0
    %1175 = vmatpush1.bf16.msra.mxu0 0
    %1176 = vmatprep.subr.bf16.mxu0 0
    %1177 = vmatpush1.bf16.msra.mxu0 0
    %1178 = vmatprep.subr.bf16.mxu0 0
    %1179 = vmatpush1.bf16.msra.mxu0 0
    %1180 = vmatprep.subr.bf16.mxu0 0
    %1181 = vmatpush1.bf16.msra.mxu0 0
    %1182 = vmatprep.mubr.bf16.mxu0 0
    %1183 = vmatmul.mubr.bf16.gmra.mrb[0].mxu0 %v1142
    %v1184 = vpop.f32.mrb[0].mxu0
    %v1185 = vadd.f32 0.0, %v1184
    %v1186 = vpop.f32.mrb[0].mxu0
    %v1187 = vadd.f32 0.0, %v1186
    %v1188 = vpop.f32.mrb[0].mxu0
    %v1189 = vpop.f32.mrb[0].mxu0
    %1190 = vdwg.mxu0
    %1191 = vmatprep.subr.bf16.mxu0 %v618
    %1192 = vmatpush1.bf16.msra.mxu0 %v617
    %1193 = vmatprep.subr.bf16.mxu0 %v622
    %1194 = vmatpush1.bf16.msra.mxu0 %v621
    %1195 = vmatprep.subr.bf16.mxu0 %v626
    %1196 = vmatpush1.bf16.msra.mxu0 %v625
    %1197 = vmatprep.subr.bf16.mxu0 %v630
    %1198 = vmatpush1.bf16.msra.mxu0 %v629
    %1199 = vmatprep.subr.bf16.mxu0 %v634
    %1200 = vmatpush1.bf16.msra.mxu0 %v633
    %1201 = vmatprep.subr.bf16.mxu0 %v638
    %1202 = vmatpush1.bf16.msra.mxu0 %v637
    %1203 = vmatprep.subr.bf16.mxu0 %v642
    %1204 = vmatpush1.bf16.msra.mxu0 %v641
    %1205 = vmatprep.subr.bf16.mxu0 %v646
    %1206 = vmatpush1.bf16.msra.mxu0 %v645
    %1207 = vmatprep.subr.bf16.mxu0 0
    %1208 = vmatpush1.bf16.msra.mxu0 0
    %1209 = vmatprep.subr.bf16.mxu0 0
    %1210 = vmatpush1.bf16.msra.mxu0 0
    %1211 = vmatprep.subr.bf16.mxu0 0
    %1212 = vmatpush1.bf16.msra.mxu0 0
    %1213 = vmatprep.subr.bf16.mxu0 0
    %1214 = vmatpush1.bf16.msra.mxu0 0
    %1215 = vmatprep.subr.bf16.mxu0 0
    %1216 = vmatpush1.bf16.msra.mxu0 0
    %1217 = vmatprep.subr.bf16.mxu0 0
    %1218 = vmatpush1.bf16.msra.mxu0 0
    %1219 = vmatprep.subr.bf16.mxu0 0
    %1220 = vmatpush1.bf16.msra.mxu0 0
    %1221 = vmatprep.subr.bf16.mxu0 0
    %1222 = vmatpush1.bf16.msra.mxu0 0
    %1223 = vmatprep.mubr.bf16.mxu0 0
    %1224 = vmatmul.mubr.bf16.gmra.mrb[0].mxu0 %v1142
    %v1225 = vpop.f32.mrb[0].mxu0
    %v1226 = vadd.f32 0.0, %v1225
    %v1227 = vpop.f32.mrb[0].mxu0
    %v1228 = vadd.f32 0.0, %v1227
    %v1229 = vpop.f32.mrb[0].mxu0
    %v1230 = vpop.f32.mrb[0].mxu0
    %1231 = vdwg.mxu0
    %v1232 = vadd.f32 %v1146, %v1185
    %v1233 = vadd.f32 %v1147, %v1187
    %v1234 = vadd.f32 %v1148, %v1226
    %v1235 = vadd.f32 %v1149, %v1228
    %v1236 = vxor.u32 %v1232, 2147483648
    %v1237 = vmul.f32 %v1236, 1.442695
    %v1238 = vpow.pop %v1237
    %v1239 = vadd.f32 %v1238, 1.0
    %v1240 = vrcp.pop %v1239
    %v1241 = vmul.f32 1.0, %v1240
    %v1242 = vxor.u32 %v1233, 2147483648
    %v1243 = vmul.f32 %v1242, 1.442695
    %v1244 = vpow.pop %v1243
    %v1245 = vadd.f32 %v1244, 1.0
    %v1246 = vrcp.pop %v1245
    %v1247 = vmul.f32 1.0, %v1246
    %v1248 = vtanh.pop %v1234
    %v1249 = vxor.u32 %v1235, 2147483648
    %v1250 = vmul.f32 %v1249, 1.442695
    %v1251 = vpow.pop %v1250
    %v1252 = vadd.f32 %v1251, 1.0
    %v1253 = vrcp.pop %v1252
    %v1254 = vmul.f32 1.0, %v1253
    %v1255 = vmul.f32 %v1247, %v1139
    %v1256 = vmul.f32 %v1241, %v1248
    %v1257 = vadd.f32 %v1255, %v1256
    %v1258 = vtanh.pop %v1257
    %v1259 = vmul.f32 %v1254, %v1258
    %v1260 = vpack.c.bf16 %v1259, %v1259
    %s1261 = scalar_lea.vmem [#allocation4], 16
    %1262 = vst [vmem:[%s1261] sm:$0xf] %v1260
    %s1263 = scalar_lea.vmem [#allocation5], 160
    %v1264 = vld [vmem:[%s1263] sm:$0xff]
    %v1265 = vld [vmem:[%s1263 + $0x8] sm:$0xff]
    %v1266 = vld [vmem:[%s1263 + $0x10] sm:$0xff]
    %v1267 = vld [vmem:[%s1263 + $0x18] sm:$0xff]
    %1268 = vmatprep.subr.bf16.mxu0 %v616
    %1269 = vmatpush1.bf16.msra.mxu0 %v615
    %1270 = vmatprep.subr.bf16.mxu0 %v620
    %1271 = vmatpush1.bf16.msra.mxu0 %v619
    %1272 = vmatprep.subr.bf16.mxu0 %v624
    %1273 = vmatpush1.bf16.msra.mxu0 %v623
    %1274 = vmatprep.subr.bf16.mxu0 %v628
    %1275 = vmatpush1.bf16.msra.mxu0 %v627
    %1276 = vmatprep.subr.bf16.mxu0 %v632
    %1277 = vmatpush1.bf16.msra.mxu0 %v631
    %1278 = vmatprep.subr.bf16.mxu0 %v636
    %1279 = vmatpush1.bf16.msra.mxu0 %v635
    %1280 = vmatprep.subr.bf16.mxu0 %v640
    %1281 = vmatpush1.bf16.msra.mxu0 %v639
    %1282 = vmatprep.subr.bf16.mxu0 %v644
    %1283 = vmatpush1.bf16.msra.mxu0 %v643
    %1284 = vmatprep.subr.bf16.mxu0 0
    %1285 = vmatpush1.bf16.msra.mxu0 0
    %1286 = vmatprep.subr.bf16.mxu0 0
    %1287 = vmatpush1.bf16.msra.mxu0 0
    %1288 = vmatprep.subr.bf16.mxu0 0
    %1289 = vmatpush1.bf16.msra.mxu0 0
    %1290 = vmatprep.subr.bf16.mxu0 0
    %1291 = vmatpush1.bf16.msra.mxu0 0
    %1292 = vmatprep.subr.bf16.mxu0 0
    %1293 = vmatpush1.bf16.msra.mxu0 0
    %1294 = vmatprep.subr.bf16.mxu0 0
    %1295 = vmatpush1.bf16.msra.mxu0 0
    %1296 = vmatprep.subr.bf16.mxu0 0
    %1297 = vmatpush1.bf16.msra.mxu0 0
    %1298 = vmatprep.subr.bf16.mxu0 0
    %1299 = vmatpush1.bf16.msra.mxu0 0
    %1300 = vmatprep.mubr.bf16.mxu0 0
    %1301 = vmatmul.mubr.bf16.gmra.mrb[0].mxu0 %v1260
    %v1302 = vpop.f32.mrb[0].mxu0
    %v1303 = vadd.f32 0.0, %v1302
    %v1304 = vpop.f32.mrb[0].mxu0
    %v1305 = vadd.f32 0.0, %v1304
    %v1306 = vpop.f32.mrb[0].mxu0
    %v1307 = vpop.f32.mrb[0].mxu0
    %1308 = vdwg.mxu0
    %1309 = vmatprep.subr.bf16.mxu0 %v618
    %1310 = vmatpush1.bf16.msra.mxu0 %v617
    %1311 = vmatprep.subr.bf16.mxu0 %v622
    %1312 = vmatpush1.bf16.msra.mxu0 %v621
    %1313 = vmatprep.subr.bf16.mxu0 %v626
    %1314 = vmatpush1.bf16.msra.mxu0 %v625
    %1315 = vmatprep.subr.bf16.mxu0 %v630
    %1316 = vmatpush1.bf16.msra.mxu0 %v629
    %1317 = vmatprep.subr.bf16.mxu0 %v634
    %1318 = vmatpush1.bf16.msra.mxu0 %v633
    %1319 = vmatprep.subr.bf16.mxu0 %v638
    %1320 = vmatpush1.bf16.msra.mxu0 %v637
    %1321 = vmatprep.subr.bf16.mxu0 %v642
    %1322 = vmatpush1.bf16.msra.mxu0 %v641
    %1323 = vmatprep.subr.bf16.mxu0 %v646
    %1324 = vmatpush1.bf16.msra.mxu0 %v645
    %1325 = vmatprep.subr.bf16.mxu0 0
    %1326 = vmatpush1.bf16.msra.mxu0 0
    %1327 = vmatprep.subr.bf16.mxu0 0
    %1328 = vmatpush1.bf16.msra.mxu0 0
    %1329 = vmatprep.subr.bf16.mxu0 0
    %1330 = vmatpush1.bf16.msra.mxu0 0
    %1331 = vmatprep.subr.bf16.mxu0 0
    %1332 = vmatpush1.bf16.msra.mxu0 0
    %1333 = vmatprep.subr.bf16.mxu0 0
    %1334 = vmatpush1.bf16.msra.mxu0 0
    %1335 = vmatprep.subr.bf16.mxu0 0
    %1336 = vmatpush1.bf16.msra.mxu0 0
    %1337 = vmatprep.subr.bf16.mxu0 0
    %1338 = vmatpush1.bf16.msra.mxu0 0
    %1339 = vmatprep.subr.bf16.mxu0 0
    %1340 = vmatpush1.bf16.msra.mxu0 0
    %1341 = vmatprep.mubr.bf16.mxu0 0
    %1342 = vmatmul.mubr.bf16.gmra.mrb[0].mxu0 %v1260
    %v1343 = vpop.f32.mrb[0].mxu0
    %v1344 = vadd.f32 0.0, %v1343
    %v1345 = vpop.f32.mrb[0].mxu0
    %v1346 = vadd.f32 0.0, %v1345
    %v1347 = vpop.f32.mrb[0].mxu0
    %v1348 = vpop.f32.mrb[0].mxu0
    %1349 = vdwg.mxu0
    %v1350 = vadd.f32 %v1264, %v1303
    %v1351 = vadd.f32 %v1265, %v1305
    %v1352 = vadd.f32 %v1266, %v1344
    %v1353 = vadd.f32 %v1267, %v1346
    %v1354 = vxor.u32 %v1350, 2147483648
    %v1355 = vmul.f32 %v1354, 1.442695
    %v1356 = vpow.pop %v1355
    %v1357 = vadd.f32 %v1356, 1.0
    %v1358 = vrcp.pop %v1357
    %v1359 = vmul.f32 1.0, %v1358
    %v1360 = vxor.u32 %v1351, 2147483648
    %v1361 = vmul.f32 %v1360, 1.442695
    %v1362 = vpow.pop %v1361
    %v1363 = vadd.f32 %v1362, 1.0
    %v1364 = vrcp.pop %v1363
    %v1365 = vmul.f32 1.0, %v1364
    %v1366 = vtanh.pop %v1352
    %v1367 = vxor.u32 %v1353, 2147483648
    %v1368 = vmul.f32 %v1367, 1.442695
    %v1369 = vpow.pop %v1368
    %v1370 = vadd.f32 %v1369, 1.0
    %v1371 = vrcp.pop %v1370
    %v1372 = vmul.f32 1.0, %v1371
    %v1373 = vmul.f32 %v1365, %v1257
    %v1374 = vmul.f32 %v1359, %v1366
    %v1375 = vadd.f32 %v1373, %v1374
    %v1376 = vtanh.pop %v1375
    %v1377 = vmul.f32 %v1372, %v1376
    %v1378 = vpack.c.bf16 %v1377, %v1377
    %s1379 = scalar_lea.vmem [#allocation4], 20
    %1380 = vst [vmem:[%s1379] sm:$0xf] %v1378
    %s1381 = scalar_lea.vmem [#allocation5], 192
    %v1382 = vld [vmem:[%s1381] sm:$0xff]
    %v1383 = vld [vmem:[%s1381 + $0x8] sm:$0xff]
    %v1384 = vld [vmem:[%s1381 + $0x10] sm:$0xff]
    %v1385 = vld [vmem:[%s1381 + $0x18] sm:$0xff]
    %1386 = vmatprep.subr.bf16.mxu0 %v616
    %1387 = vmatpush1.bf16.msra.mxu0 %v615
    %1388 = vmatprep.subr.bf16.mxu0 %v620
    %1389 = vmatpush1.bf16.msra.mxu0 %v619
    %1390 = vmatprep.subr.bf16.mxu0 %v624
    %1391 = vmatpush1.bf16.msra.mxu0 %v623
    %1392 = vmatprep.subr.bf16.mxu0 %v628
    %1393 = vmatpush1.bf16.msra.mxu0 %v627
    %1394 = vmatprep.subr.bf16.mxu0 %v632
    %1395 = vmatpush1.bf16.msra.mxu0 %v631
    %1396 = vmatprep.subr.bf16.mxu0 %v636
    %1397 = vmatpush1.bf16.msra.mxu0 %v635
    %1398 = vmatprep.subr.bf16.mxu0 %v640
    %1399 = vmatpush1.bf16.msra.mxu0 %v639
    %1400 = vmatprep.subr.bf16.mxu0 %v644
    %1401 = vmatpush1.bf16.msra.mxu0 %v643
    %1402 = vmatprep.subr.bf16.mxu0 0
    %1403 = vmatpush1.bf16.msra.mxu0 0
    %1404 = vmatprep.subr.bf16.mxu0 0
    %1405 = vmatpush1.bf16.msra.mxu0 0
    %1406 = vmatprep.subr.bf16.mxu0 0
    %1407 = vmatpush1.bf16.msra.mxu0 0
    %1408 = vmatprep.subr.bf16.mxu0 0
    %1409 = vmatpush1.bf16.msra.mxu0 0
    %1410 = vmatprep.subr.bf16.mxu0 0
    %1411 = vmatpush1.bf16.msra.mxu0 0
    %1412 = vmatprep.subr.bf16.mxu0 0
    %1413 = vmatpush1.bf16.msra.mxu0 0
    %1414 = vmatprep.subr.bf16.mxu0 0
    %1415 = vmatpush1.bf16.msra.mxu0 0
    %1416 = vmatprep.subr.bf16.mxu0 0
    %1417 = vmatpush1.bf16.msra.mxu0 0
    %1418 = vmatprep.mubr.bf16.mxu0 0
    %1419 = vmatmul.mubr.bf16.gmra.mrb[0].mxu0 %v1378
    %v1420 = vpop.f32.mrb[0].mxu0
    %v1421 = vadd.f32 0.0, %v1420
    %v1422 = vpop.f32.mrb[0].mxu0
    %v1423 = vadd.f32 0.0, %v1422
    %v1424 = vpop.f32.mrb[0].mxu0
    %v1425 = vpop.f32.mrb[0].mxu0
    %1426 = vdwg.mxu0
    %1427 = vmatprep.subr.bf16.mxu0 %v618
    %1428 = vmatpush1.bf16.msra.mxu0 %v617
    %1429 = vmatprep.subr.bf16.mxu0 %v622
    %1430 = vmatpush1.bf16.msra.mxu0 %v621
    %1431 = vmatprep.subr.bf16.mxu0 %v626
    %1432 = vmatpush1.bf16.msra.mxu0 %v625
    %1433 = vmatprep.subr.bf16.mxu0 %v630
    %1434 = vmatpush1.bf16.msra.mxu0 %v629
    %1435 = vmatprep.subr.bf16.mxu0 %v634
    %1436 = vmatpush1.bf16.msra.mxu0 %v633
    %1437 = vmatprep.subr.bf16.mxu0 %v638
    %1438 = vmatpush1.bf16.msra.mxu0 %v637
    %1439 = vmatprep.subr.bf16.mxu0 %v642
    %1440 = vmatpush1.bf16.msra.mxu0 %v641
    %1441 = vmatprep.subr.bf16.mxu0 %v646
    %1442 = vmatpush1.bf16.msra.mxu0 %v645
    %1443 = vmatprep.subr.bf16.mxu0 0
    %1444 = vmatpush1.bf16.msra.mxu0 0
    %1445 = vmatprep.subr.bf16.mxu0 0
    %1446 = vmatpush1.bf16.msra.mxu0 0
    %1447 = vmatprep.subr.bf16.mxu0 0
    %1448 = vmatpush1.bf16.msra.mxu0 0
    %1449 = vmatprep.subr.bf16.mxu0 0
    %1450 = vmatpush1.bf16.msra.mxu0 0
    %1451 = vmatprep.subr.bf16.mxu0 0
    %1452 = vmatpush1.bf16.msra.mxu0 0
    %1453 = vmatprep.subr.bf16.mxu0 0
    %1454 = vmatpush1.bf16.msra.mxu0 0
    %1455 = vmatprep.subr.bf16.mxu0 0
    %1456 = vmatpush1.bf16.msra.mxu0 0
    %1457 = vmatprep.subr.bf16.mxu0 0
    %1458 = vmatpush1.bf16.msra.mxu0 0
    %1459 = vmatprep.mubr.bf16.mxu0 0
    %1460 = vmatmul.mubr.bf16.gmra.mrb[0].mxu0 %v1378
    %v1461 = vpop.f32.mrb[0].mxu0
    %v1462 = vadd.f32 0.0, %v1461
    %v1463 = vpop.f32.mrb[0].mxu0
    %v1464 = vadd.f32 0.0, %v1463
    %v1465 = vpop.f32.mrb[0].mxu0
    %v1466 = vpop.f32.mrb[0].mxu0
    %1467 = vdwg.mxu0
    %v1468 = vadd.f32 %v1382, %v1421
    %v1469 = vadd.f32 %v1383, %v1423
    %v1470 = vadd.f32 %v1384, %v1462
    %v1471 = vadd.f32 %v1385, %v1464
    %v1472 = vxor.u32 %v1468, 2147483648
    %v1473 = vmul.f32 %v1472, 1.442695
    %v1474 = vpow.pop %v1473
    %v1475 = vadd.f32 %v1474, 1.0
    %v1476 = vrcp.pop %v1475
    %v1477 = vmul.f32 1.0, %v1476
    %v1478 = vxor.u32 %v1469, 2147483648
    %v1479 = vmul.f32 %v1478, 1.442695
    %v1480 = vpow.pop %v1479
    %v1481 = vadd.f32 %v1480, 1.0
    %v1482 = vrcp.pop %v1481
    %v1483 = vmul.f32 1.0, %v1482
    %v1484 = vtanh.pop %v1470
    %v1485 = vxor.u32 %v1471, 2147483648
    %v1486 = vmul.f32 %v1485, 1.442695
    %v1487 = vpow.pop %v1486
    %v1488 = vadd.f32 %v1487, 1.0
    %v1489 = vrcp.pop %v1488
    %v1490 = vmul.f32 1.0, %v1489
    %v1491 = vmul.f32 %v1483, %v1375
    %v1492 = vmul.f32 %v1477, %v1484
    %v1493 = vadd.f32 %v1491, %v1492
    %v1494 = vtanh.pop %v1493
    %v1495 = vmul.f32 %v1490, %v1494
    %v1496 = vpack.c.bf16 %v1495, %v1495
    %s1497 = scalar_lea.vmem [#allocation4], 24
    %1498 = vst [vmem:[%s1497] sm:$0xf] %v1496
    %s1499 = scalar_lea.vmem [#allocation5], 224
    %v1500 = vld [vmem:[%s1499] sm:$0xff]
    %v1501 = vld [vmem:[%s1499 + $0x8] sm:$0xff]
    %v1502 = vld [vmem:[%s1499 + $0x10] sm:$0xff]
    %v1503 = vld [vmem:[%s1499 + $0x18] sm:$0xff]
    %1504 = vmatprep.subr.bf16.mxu0 %v616
    %1505 = vmatpush1.bf16.msra.mxu0 %v615
    %1506 = vmatprep.subr.bf16.mxu0 %v620
    %1507 = vmatpush1.bf16.msra.mxu0 %v619
    %1508 = vmatprep.subr.bf16.mxu0 %v624
    %1509 = vmatpush1.bf16.msra.mxu0 %v623
    %1510 = vmatprep.subr.bf16.mxu0 %v628
    %1511 = vmatpush1.bf16.msra.mxu0 %v627
    %1512 = vmatprep.subr.bf16.mxu0 %v632
    %1513 = vmatpush1.bf16.msra.mxu0 %v631
    %1514 = vmatprep.subr.bf16.mxu0 %v636
    %1515 = vmatpush1.bf16.msra.mxu0 %v635
    %1516 = vmatprep.subr.bf16.mxu0 %v640
    %1517 = vmatpush1.bf16.msra.mxu0 %v639
    %1518 = vmatprep.subr.bf16.mxu0 %v644
    %1519 = vmatpush1.bf16.msra.mxu0 %v643
    %1520 = vmatprep.subr.bf16.mxu0 0
    %1521 = vmatpush1.bf16.msra.mxu0 0
    %1522 = vmatprep.subr.bf16.mxu0 0
    %1523 = vmatpush1.bf16.msra.mxu0 0
    %1524 = vmatprep.subr.bf16.mxu0 0
    %1525 = vmatpush1.bf16.msra.mxu0 0
    %1526 = vmatprep.subr.bf16.mxu0 0
    %1527 = vmatpush1.bf16.msra.mxu0 0
    %1528 = vmatprep.subr.bf16.mxu0 0
    %1529 = vmatpush1.bf16.msra.mxu0 0
    %1530 = vmatprep.subr.bf16.mxu0 0
    %1531 = vmatpush1.bf16.msra.mxu0 0
    %1532 = vmatprep.subr.bf16.mxu0 0
    %1533 = vmatpush1.bf16.msra.mxu0 0
    %1534 = vmatprep.subr.bf16.mxu0 0
    %1535 = vmatpush1.bf16.msra.mxu0 0
    %1536 = vmatprep.mubr.bf16.mxu0 0
    %1537 = vmatmul.mubr.bf16.gmra.mrb[0].mxu0 %v1496
    %v1538 = vpop.f32.mrb[0].mxu0
    %v1539 = vadd.f32 0.0, %v1538
    %v1540 = vpop.f32.mrb[0].mxu0
    %v1541 = vadd.f32 0.0, %v1540
    %v1542 = vpop.f32.mrb[0].mxu0
    %v1543 = vpop.f32.mrb[0].mxu0
    %1544 = vdwg.mxu0
    %1545 = vmatprep.subr.bf16.mxu0 %v618
    %1546 = vmatpush1.bf16.msra.mxu0 %v617
    %1547 = vmatprep.subr.bf16.mxu0 %v622
    %1548 = vmatpush1.bf16.msra.mxu0 %v621
    %1549 = vmatprep.subr.bf16.mxu0 %v626
    %1550 = vmatpush1.bf16.msra.mxu0 %v625
    %1551 = vmatprep.subr.bf16.mxu0 %v630
    %1552 = vmatpush1.bf16.msra.mxu0 %v629
    %1553 = vmatprep.subr.bf16.mxu0 %v634
    %1554 = vmatpush1.bf16.msra.mxu0 %v633
    %1555 = vmatprep.subr.bf16.mxu0 %v638
    %1556 = vmatpush1.bf16.msra.mxu0 %v637
    %1557 = vmatprep.subr.bf16.mxu0 %v642
    %1558 = vmatpush1.bf16.msra.mxu0 %v641
    %1559 = vmatprep.subr.bf16.mxu0 %v646
    %1560 = vmatpush1.bf16.msra.mxu0 %v645
    %1561 = vmatprep.subr.bf16.mxu0 0
    %1562 = vmatpush1.bf16.msra.mxu0 0
    %1563 = vmatprep.subr.bf16.mxu0 0
    %1564 = vmatpush1.bf16.msra.mxu0 0
    %1565 = vmatprep.subr.bf16.mxu0 0
    %1566 = vmatpush1.bf16.msra.mxu0 0
    %1567 = vmatprep.subr.bf16.mxu0 0
    %1568 = vmatpush1.bf16.msra.mxu0 0
    %1569 = vmatprep.subr.bf16.mxu0 0
    %1570 = vmatpush1.bf16.msra.mxu0 0
    %1571 = vmatprep.subr.bf16.mxu0 0
    %1572 = vmatpush1.bf16.msra.mxu0 0
    %1573 = vmatprep.subr.bf16.mxu0 0
    %1574 = vmatpush1.bf16.msra.mxu0 0
    %1575 = vmatprep.subr.bf16.mxu0 0
    %1576 = vmatpush1.bf16.msra.mxu0 0
    %1577 = vmatprep.mubr.bf16.mxu0 0
    %1578 = vmatmul.mubr.bf16.gmra.mrb[0].mxu0 %v1496
    %v1579 = vpop.f32.mrb[0].mxu0
    %v1580 = vadd.f32 0.0, %v1579
    %v1581 = vpop.f32.mrb[0].mxu0
    %v1582 = vadd.f32 0.0, %v1581
    %v1583 = vpop.f32.mrb[0].mxu0
    %v1584 = vpop.f32.mrb[0].mxu0
    %1585 = vdwg.mxu0
    %v1586 = vadd.f32 %v1500, %v1539
    %v1587 = vadd.f32 %v1501, %v1541
    %v1588 = vadd.f32 %v1502, %v1580
    %v1589 = vadd.f32 %v1503, %v1582
    %v1590 = vxor.u32 %v1586, 2147483648
    %v1591 = vmul.f32 %v1590, 1.442695
    %v1592 = vpow.pop %v1591
    %v1593 = vadd.f32 %v1592, 1.0
    %v1594 = vrcp.pop %v1593
    %v1595 = vmul.f32 1.0, %v1594
    %v1596 = vxor.u32 %v1587, 2147483648
    %v1597 = vmul.f32 %v1596, 1.442695
    %v1598 = vpow.pop %v1597
    %v1599 = vadd.f32 %v1598, 1.0
    %v1600 = vrcp.pop %v1599
    %v1601 = vmul.f32 1.0, %v1600
    %v1602 = vtanh.pop %v1588
    %v1603 = vxor.u32 %v1589, 2147483648
    %v1604 = vmul.f32 %v1603, 1.442695
    %v1605 = vpow.pop %v1604
    %v1606 = vadd.f32 %v1605, 1.0
    %v1607 = vrcp.pop %v1606
    %v1608 = vmul.f32 1.0, %v1607
    %v1609 = vmul.f32 %v1601, %v1493
    %v1610 = vmul.f32 %v1595, %v1602
    %v1611 = vadd.f32 %v1609, %v1610
    %v1612 = vtanh.pop %v1611
    %v1613 = vmul.f32 %v1608, %v1612
    %v1614 = vpack.c.bf16 %v1613, %v1613
    %s1615 = scalar_lea.vmem [#allocation4], 28
    %1616 = vst [vmem:[%s1615] sm:$0xf] %v1614
    %1617 = vst [vmem:[#allocation2] sm:$0xff] %v1613
    %1618 = vst [vmem:[#allocation3] sm:$0xff] %v1611
    %v1619 = vld [vmem:[#allocation4] sm:$0xf]
    %v1620 = vld [vmem:[#allocation4 + $0x4] sm:$0xf]
    %v1621 = vld [vmem:[#allocation4 + $0x8] sm:$0xf]
    %v1622 = vld [vmem:[#allocation4 + $0xc] sm:$0xf]
    %v1623 = vld [vmem:[#allocation4 + $0x10] sm:$0xf]
    %v1624 = vld [vmem:[#allocation4 + $0x14] sm:$0xf]
    %v1625 = vld [vmem:[#allocation4 + $0x18] sm:$0xf]
    %v1626 = vld [vmem:[#allocation4 + $0x1c] sm:$0xf]
    %s1627 = scalar_lea.vmem [#allocation8], 256
    %v1628 = vld [vmem:[%s1627] sm:$0xff]
    %v1629 = vld [vmem:[%s1627 + $0x8] sm:$0xff]
    %v1630 = vld [vmem:[%s1627 + $0x10] sm:$0xff]
    %v1631 = vld [vmem:[%s1627 + $0x18] sm:$0xff]
    %v1632 = vld [vmem:[%s1627 + $0x20] sm:$0xff]
    %v1633 = vld [vmem:[%s1627 + $0x28] sm:$0xff]
    %v1634 = vld [vmem:[%s1627 + $0x30] sm:$0xff]
    %v1635 = vld [vmem:[%s1627 + $0x38] sm:$0xff]
    %v1636 = vld [vmem:[%s1627 + $0x40] sm:$0xff]
    %v1637 = vld [vmem:[%s1627 + $0x48] sm:$0xff]
    %v1638 = vld [vmem:[%s1627 + $0x50] sm:$0xff]
    %v1639 = vld [vmem:[%s1627 + $0x58] sm:$0xff]
    %v1640 = vld [vmem:[%s1627 + $0x60] sm:$0xff]
    %v1641 = vld [vmem:[%s1627 + $0x68] sm:$0xff]
    %v1642 = vld [vmem:[%s1627 + $0x70] sm:$0xff]
    %v1643 = vld [vmem:[%s1627 + $0x78] sm:$0xff]
    %v1644 = vld [vmem:[%s1627 + $0x80] sm:$0xff]
    %v1645 = vld [vmem:[%s1627 + $0x88] sm:$0xff]
    %v1646 = vld [vmem:[%s1627 + $0x90] sm:$0xff]
    %v1647 = vld [vmem:[%s1627 + $0x98] sm:$0xff]
    %v1648 = vld [vmem:[%s1627 + $0xa0] sm:$0xff]
    %v1649 = vld [vmem:[%s1627 + $0xa8] sm:$0xff]
    %v1650 = vld [vmem:[%s1627 + $0xb0] sm:$0xff]
    %v1651 = vld [vmem:[%s1627 + $0xb8] sm:$0xff]
    %v1652 = vld [vmem:[%s1627 + $0xc0] sm:$0xff]
    %v1653 = vld [vmem:[%s1627 + $0xc8] sm:$0xff]
    %v1654 = vld [vmem:[%s1627 + $0xd0] sm:$0xff]
    %v1655 = vld [vmem:[%s1627 + $0xd8] sm:$0xff]
    %v1656 = vld [vmem:[%s1627 + $0xe0] sm:$0xff]
    %v1657 = vld [vmem:[%s1627 + $0xe8] sm:$0xff]
    %v1658 = vld [vmem:[%s1627 + $0xf0] sm:$0xff]
    %v1659 = vld [vmem:[%s1627 + $0xf8] sm:$0xff]
    %s1660 = scalar_lea.vmem [#allocation6], 256
    %v1661 = vld [vmem:[%s1660] sm:$0xff]
    %v1662 = vld [vmem:[%s1660 + $0x8] sm:$0xff]
    %v1663 = vld [vmem:[%s1660 + $0x10] sm:$0xff]
    %v1664 = vld [vmem:[%s1660 + $0x18] sm:$0xff]
    %v1665 = vld [vmem:[%s1660 + $0x20] sm:$0xff]
    %v1666 = vld [vmem:[%s1660 + $0x28] sm:$0xff]
    %v1667 = vld [vmem:[%s1660 + $0x30] sm:$0xff]
    %v1668 = vld [vmem:[%s1660 + $0x38] sm:$0xff]
    %v1669 = vld [vmem:[%s1660 + $0x40] sm:$0xff]
    %v1670 = vld [vmem:[%s1660 + $0x48] sm:$0xff]
    %v1671 = vld [vmem:[%s1660 + $0x50] sm:$0xff]
    %v1672 = vld [vmem:[%s1660 + $0x58] sm:$0xff]
    %v1673 = vld [vmem:[%s1660 + $0x60] sm:$0xff]
    %v1674 = vld [vmem:[%s1660 + $0x68] sm:$0xff]
    %v1675 = vld [vmem:[%s1660 + $0x70] sm:$0xff]
    %v1676 = vld [vmem:[%s1660 + $0x78] sm:$0xff]
    %v1677 = vld [vmem:[%s1660 + $0x80] sm:$0xff]
    %v1678 = vld [vmem:[%s1660 + $0x88] sm:$0xff]
    %v1679 = vld [vmem:[%s1660 + $0x90] sm:$0xff]
    %v1680 = vld [vmem:[%s1660 + $0x98] sm:$0xff]
    %v1681 = vld [vmem:[%s1660 + $0xa0] sm:$0xff]
    %v1682 = vld [vmem:[%s1660 + $0xa8] sm:$0xff]
    %v1683 = vld [vmem:[%s1660 + $0xb0] sm:$0xff]
    %v1684 = vld [vmem:[%s1660 + $0xb8] sm:$0xff]
    %v1685 = vld [vmem:[%s1660 + $0xc0] sm:$0xff]
    %v1686 = vld [vmem:[%s1660 + $0xc8] sm:$0xff]
    %v1687 = vld [vmem:[%s1660 + $0xd0] sm:$0xff]
    %v1688 = vld [vmem:[%s1660 + $0xd8] sm:$0xff]
    %v1689 = vld [vmem:[%s1660 + $0xe0] sm:$0xff]
    %v1690 = vld [vmem:[%s1660 + $0xe8] sm:$0xff]
    %v1691 = vld [vmem:[%s1660 + $0xf0] sm:$0xff]
    %v1692 = vld [vmem:[%s1660 + $0xf8] sm:$0xff]
    %s1693 = scalar_lea.vmem %s3, 4
    %v1694 = vld [vmem:[%s1693] sm:$0xf]
    %v1696 = vlaneseq
    %v1697 = vshrl.u32 %v1696, 7
    %v1698 = vsub.s32 0, %v1697
    %v1699 = vrot.slane %v1694, %v1698
    %v1700 = vlaneseq
    %v1701 = vshrl.u32 %v1700, 7
    %v1702 = vsub.s32 1, %v1701
    %v1703 = vrot.slane %v1694, %v1702
    %v1704 = vlaneseq
    %v1705 = vshrl.u32 %v1704, 7
    %v1706 = vsub.s32 2, %v1705
    %v1707 = vrot.slane %v1694, %v1706
    %v1708 = vlaneseq
    %v1709 = vshrl.u32 %v1708, 7
    %v1710 = vsub.s32 3, %v1709
    %v1711 = vrot.slane %v1694, %v1710
    %v1724 = vunpack.c.l.b16 %v1619
    %v1725 = vunpack.c.l.b16 %v1620
    %v1726 = vunpack.c.l.b16 %v1621
    %v1727 = vunpack.c.l.b16 %v1622
    %v1728 = vunpack.c.l.b16 %v1623
    %v1729 = vunpack.c.l.b16 %v1624
    %v1730 = vunpack.c.l.b16 %v1625
    %v1731 = vunpack.c.l.b16 %v1626
    %v1732 = vpack.c.b16 %v1725, %v1724
    %v1733 = vpack.c.b16 %v1727, %v1726
    %v1734 = vpack.c.b16 %v1729, %v1728
    %v1735 = vpack.c.b16 %v1731, %v1730
    %v1772 = vunpack.c.l.b16 %v1661
    %v1773 = vunpack.c.h.b16 %v1661
    %v1774 = vunpack.c.l.b16 %v1662
    %v1775 = vunpack.c.h.b16 %v1662
    %v1776 = vunpack.c.l.b16 %v1663
    %v1777 = vunpack.c.h.b16 %v1663
    %v1778 = vunpack.c.l.b16 %v1664
    %v1779 = vunpack.c.h.b16 %v1664
    %v1780 = vunpack.c.l.b16 %v1665
    %v1781 = vunpack.c.h.b16 %v1665
    %v1782 = vunpack.c.l.b16 %v1666
    %v1783 = vunpack.c.h.b16 %v1666
    %v1784 = vunpack.c.l.b16 %v1667
    %v1785 = vunpack.c.h.b16 %v1667
    %v1786 = vunpack.c.l.b16 %v1668
    %v1787 = vunpack.c.h.b16 %v1668
    %v1788 = vunpack.c.l.b16 %v1669
    %v1789 = vunpack.c.h.b16 %v1669
    %v1790 = vunpack.c.l.b16 %v1670
    %v1791 = vunpack.c.h.b16 %v1670
    %v1792 = vunpack.c.l.b16 %v1671
    %v1793 = vunpack.c.h.b16 %v1671
    %v1794 = vunpack.c.l.b16 %v1672
    %v1795 = vunpack.c.h.b16 %v1672
    %v1796 = vunpack.c.l.b16 %v1673
    %v1797 = vunpack.c.h.b16 %v1673
    %v1798 = vunpack.c.l.b16 %v1674
    %v1799 = vunpack.c.h.b16 %v1674
    %v1800 = vunpack.c.l.b16 %v1675
    %v1801 = vunpack.c.h.b16 %v1675
    %v1802 = vunpack.c.l.b16 %v1676
    %v1803 = vunpack.c.h.b16 %v1676
    %v1804 = vunpack.c.l.b16 %v1677
    %v1805 = vunpack.c.h.b16 %v1677
    %v1806 = vunpack.c.l.b16 %v1678
    %v1807 = vunpack.c.h.b16 %v1678
    %v1808 = vunpack.c.l.b16 %v1679
    %v1809 = vunpack.c.h.b16 %v1679
    %v1810 = vunpack.c.l.b16 %v1680
    %v1811 = vunpack.c.h.b16 %v1680
    %v1812 = vunpack.c.l.b16 %v1681
    %v1813 = vunpack.c.h.b16 %v1681
    %v1814 = vunpack.c.l.b16 %v1682
    %v1815 = vunpack.c.h.b16 %v1682
    %v1816 = vunpack.c.l.b16 %v1683
    %v1817 = vunpack.c.h.b16 %v1683
    %v1818 = vunpack.c.l.b16 %v1684
    %v1819 = vunpack.c.h.b16 %v1684
    %v1820 = vunpack.c.l.b16 %v1685
    %v1821 = vunpack.c.h.b16 %v1685
    %v1822 = vunpack.c.l.b16 %v1686
    %v1823 = vunpack.c.h.b16 %v1686
    %v1824 = vunpack.c.l.b16 %v1687
    %v1825 = vunpack.c.h.b16 %v1687
    %v1826 = vunpack.c.l.b16 %v1688
    %v1827 = vunpack.c.h.b16 %v1688
    %v1828 = vunpack.c.l.b16 %v1689
    %v1829 = vunpack.c.h.b16 %v1689
    %v1830 = vunpack.c.l.b16 %v1690
    %v1831 = vunpack.c.h.b16 %v1690
    %v1832 = vunpack.c.l.b16 %v1691
    %v1833 = vunpack.c.h.b16 %v1691
    %v1834 = vunpack.c.l.b16 %v1692
    %v1835 = vunpack.c.h.b16 %v1692
    %v1836 = vpack.c.b16 %v1776, %v1772
    %v1837 = vpack.c.b16 %v1777, %v1773
    %v1838 = vpack.c.b16 %v1778, %v1774
    %v1839 = vpack.c.b16 %v1779, %v1775
    %v1840 = vpack.c.b16 %v1784, %v1780
    %v1841 = vpack.c.b16 %v1785, %v1781
    %v1842 = vpack.c.b16 %v1786, %v1782
    %v1843 = vpack.c.b16 %v1787, %v1783
    %v1844 = vpack.c.b16 %v1792, %v1788
    %v1845 = vpack.c.b16 %v1793, %v1789
    %v1846 = vpack.c.b16 %v1794, %v1790
    %v1847 = vpack.c.b16 %v1795, %v1791
    %v1848 = vpack.c.b16 %v1800, %v1796
    %v1849 = vpack.c.b16 %v1801, %v1797
    %v1850 = vpack.c.b16 %v1802, %v1798
    %v1851 = vpack.c.b16 %v1803, %v1799
    %v1852 = vpack.c.b16 %v1808, %v1804
    %v1853 = vpack.c.b16 %v1809, %v1805
    %v1854 = vpack.c.b16 %v1810, %v1806
    %v1855 = vpack.c.b16 %v1811, %v1807
    %v1856 = vpack.c.b16 %v1816, %v1812
    %v1857 = vpack.c.b16 %v1817, %v1813
    %v1858 = vpack.c.b16 %v1818, %v1814
    %v1859 = vpack.c.b16 %v1819, %v1815
    %v1860 = vpack.c.b16 %v1824, %v1820
    %v1861 = vpack.c.b16 %v1825, %v1821
    %v1862 = vpack.c.b16 %v1826, %v1822
    %v1863 = vpack.c.b16 %v1827, %v1823
    %v1864 = vpack.c.b16 %v1832, %v1828
    %v1865 = vpack.c.b16 %v1833, %v1829
    %v1866 = vpack.c.b16 %v1834, %v1830
    %v1867 = vpack.c.b16 %v1835, %v1831
    %1900 = vmatprep.subr.bf16.mxu0 %v1837
    %1901 = vmatpush1.bf16.msra.mxu0 %v1836
    %1902 = vmatprep.subr.bf16.mxu0 %v1841
    %1903 = vmatpush1.bf16.msra.mxu0 %v1840
    %1904 = vmatprep.subr.bf16.mxu0 %v1845
    %1905 = vmatpush1.bf16.msra.mxu0 %v1844
    %1906 = vmatprep.subr.bf16.mxu0 %v1849
    %1907 = vmatpush1.bf16.msra.mxu0 %v1848
    %1908 = vmatprep.subr.bf16.mxu0 %v1853
    %1909 = vmatpush1.bf16.msra.mxu0 %v1852
    %1910 = vmatprep.subr.bf16.mxu0 %v1857
    %1911 = vmatpush1.bf16.msra.mxu0 %v1856
    %1912 = vmatprep.subr.bf16.mxu0 %v1861
    %1913 = vmatpush1.bf16.msra.mxu0 %v1860
    %1914 = vmatprep.subr.bf16.mxu0 %v1865
    %1915 = vmatpush1.bf16.msra.mxu0 %v1864
    %1916 = vmatprep.subr.bf16.mxu0 0
    %1917 = vmatpush1.bf16.msra.mxu0 0
    %1918 = vmatprep.subr.bf16.mxu0 0
    %1919 = vmatpush1.bf16.msra.mxu0 0
    %1920 = vmatprep.subr.bf16.mxu0 0
    %1921 = vmatpush1.bf16.msra.mxu0 0
    %1922 = vmatprep.subr.bf16.mxu0 0
    %1923 = vmatpush1.bf16.msra.mxu0 0
    %1924 = vmatprep.subr.bf16.mxu0 0
    %1925 = vmatpush1.bf16.msra.mxu0 0
    %1926 = vmatprep.subr.bf16.mxu0 0
    %1927 = vmatpush1.bf16.msra.mxu0 0
    %1928 = vmatprep.subr.bf16.mxu0 0
    %1929 = vmatpush1.bf16.msra.mxu0 0
    %1930 = vmatprep.subr.bf16.mxu0 0
    %1931 = vmatpush1.bf16.msra.mxu0 0
    %1932 = vmatprep.mubr.bf16.mxu0 0
    %1933 = vmatmul.mubr.bf16.gmra.mrb[0].mxu0 %v1732
    %v1934 = vpop.f32.mrb[0].mxu0
    %v1935 = vadd.f32 %v1699, %v1934
    %v1936 = vpop.f32.mrb[0].mxu0
    %v1937 = vadd.f32 %v1703, %v1936
    %v1938 = vpop.f32.mrb[0].mxu0
    %v1939 = vadd.f32 %v1699, %v1938
    %v1940 = vpop.f32.mrb[0].mxu0
    %v1941 = vadd.f32 %v1703, %v1940
    %1942 = vmatprep.mubr.bf16.mxu0 0
    %1943 = vmatmul.mubr.bf16.gmra.mrb[0].mxu0 %v1733
    %v1944 = vpop.f32.mrb[0].mxu0
    %v1945 = vadd.f32 %v1699, %v1944
    %v1946 = vpop.f32.mrb[0].mxu0
    %v1947 = vadd.f32 %v1703, %v1946
    %v1948 = vpop.f32.mrb[0].mxu0
    %v1949 = vadd.f32 %v1699, %v1948
    %v1950 = vpop.f32.mrb[0].mxu0
    %v1951 = vadd.f32 %v1703, %v1950
    %1952 = vmatprep.mubr.bf16.mxu0 0
    %1953 = vmatmul.mubr.bf16.gmra.mrb[0].mxu0 %v1734
    %v1954 = vpop.f32.mrb[0].mxu0
    %v1955 = vadd.f32 %v1699, %v1954
    %v1956 = vpop.f32.mrb[0].mxu0
    %v1957 = vadd.f32 %v1703, %v1956
    %v1958 = vpop.f32.mrb[0].mxu0
    %v1959 = vadd.f32 %v1699, %v1958
    %v1960 = vpop.f32.mrb[0].mxu0
    %v1961 = vadd.f32 %v1703, %v1960
    %1962 = vmatprep.mubr.bf16.mxu0 0
    %1963 = vmatmul.mubr.bf16.gmra.mrb[0].mxu0 %v1735
    %v1964 = vpop.f32.mrb[0].mxu0
    %v1965 = vadd.f32 %v1699, %v1964
    %v1966 = vpop.f32.mrb[0].mxu0
    %v1967 = vadd.f32 %v1703, %v1966
    %v1968 = vpop.f32.mrb[0].mxu0
    %v1969 = vadd.f32 %v1699, %v1968
    %v1970 = vpop.f32.mrb[0].mxu0
    %v1971 = vadd.f32 %v1703, %v1970
    %1972 = vdwg.mxu0
    %1973 = vmatprep.subr.bf16.mxu0 %v1839
    %1974 = vmatpush1.bf16.msra.mxu0 %v1838
    %1975 = vmatprep.subr.bf16.mxu0 %v1843
    %1976 = vmatpush1.bf16.msra.mxu0 %v1842
    %1977 = vmatprep.subr.bf16.mxu0 %v1847
    %1978 = vmatpush1.bf16.msra.mxu0 %v1846
    %1979 = vmatprep.subr.bf16.mxu0 %v1851
    %1980 = vmatpush1.bf16.msra.mxu0 %v1850
    %1981 = vmatprep.subr.bf16.mxu0 %v1855
    %1982 = vmatpush1.bf16.msra.mxu0 %v1854
    %1983 = vmatprep.subr.bf16.mxu0 %v1859
    %1984 = vmatpush1.bf16.msra.mxu0 %v1858
    %1985 = vmatprep.subr.bf16.mxu0 %v1863
    %1986 = vmatpush1.bf16.msra.mxu0 %v1862
    %1987 = vmatprep.subr.bf16.mxu0 %v1867
    %1988 = vmatpush1.bf16.msra.mxu0 %v1866
    %1989 = vmatprep.subr.bf16.mxu0 0
    %1990 = vmatpush1.bf16.msra.mxu0 0
    %1991 = vmatprep.subr.bf16.mxu0 0
    %1992 = vmatpush1.bf16.msra.mxu0 0
    %1993 = vmatprep.subr.bf16.mxu0 0
    %1994 = vmatpush1.bf16.msra.mxu0 0
    %1995 = vmatprep.subr.bf16.mxu0 0
    %1996 = vmatpush1.bf16.msra.mxu0 0
    %1997 = vmatprep.subr.bf16.mxu0 0
    %1998 = vmatpush1.bf16.msra.mxu0 0
    %1999 = vmatprep.subr.bf16.mxu0 0
    %2000 = vmatpush1.bf16.msra.mxu0 0
    %2001 = vmatprep.subr.bf16.mxu0 0
    %2002 = vmatpush1.bf16.msra.mxu0 0
    %2003 = vmatprep.subr.bf16.mxu0 0
    %2004 = vmatpush1.bf16.msra.mxu0 0
    %2005 = vmatprep.mubr.bf16.mxu0 0
    %2006 = vmatmul.mubr.bf16.gmra.mrb[0].mxu0 %v1732
    %v2007 = vpop.f32.mrb[0].mxu0
    %v2008 = vadd.f32 %v1707, %v2007
    %v2009 = vpop.f32.mrb[0].mxu0
    %v2010 = vadd.f32 %v1711, %v2009
    %v2011 = vpop.f32.mrb[0].mxu0
    %v2012 = vadd.f32 %v1707, %v2011
    %v2013 = vpop.f32.mrb[0].mxu0
    %v2014 = vadd.f32 %v1711, %v2013
    %2015 = vmatprep.mubr.bf16.mxu0 0
    %2016 = vmatmul.mubr.bf16.gmra.mrb[0].mxu0 %v1733
    %v2017 = vpop.f32.mrb[0].mxu0
    %v2018 = vadd.f32 %v1707, %v2017
    %v2019 = vpop.f32.mrb[0].mxu0
    %v2020 = vadd.f32 %v1711, %v2019
    %v2021 = vpop.f32.mrb[0].mxu0
    %v2022 = vadd.f32 %v1707, %v2021
    %v2023 = vpop.f32.mrb[0].mxu0
    %v2024 = vadd.f32 %v1711, %v2023
    %2025 = vmatprep.mubr.bf16.mxu0 0
    %2026 = vmatmul.mubr.bf16.gmra.mrb[0].mxu0 %v1734
    %v2027 = vpop.f32.mrb[0].mxu0
    %v2028 = vadd.f32 %v1707, %v2027
    %v2029 = vpop.f32.mrb[0].mxu0
    %v2030 = vadd.f32 %v1711, %v2029
    %v2031 = vpop.f32.mrb[0].mxu0
    %v2032 = vadd.f32 %v1707, %v2031
    %v2033 = vpop.f32.mrb[0].mxu0
    %v2034 = vadd.f32 %v1711, %v2033
    %2035 = vmatprep.mubr.bf16.mxu0 0
    %2036 = vmatmul.mubr.bf16.gmra.mrb[0].mxu0 %v1735
    %v2037 = vpop.f32.mrb[0].mxu0
    %v2038 = vadd.f32 %v1707, %v2037
    %v2039 = vpop.f32.mrb[0].mxu0
    %v2040 = vadd.f32 %v1711, %v2039
    %v2041 = vpop.f32.mrb[0].mxu0
    %v2042 = vadd.f32 %v1707, %v2041
    %v2043 = vpop.f32.mrb[0].mxu0
    %v2044 = vadd.f32 %v1711, %v2043
    %2045 = vdwg.mxu0
    %2046 = vst [vmem:[#allocation5] sm:$0xff] %v1935
    %2047 = vst [vmem:[#allocation5 + $0x8] sm:$0xff] %v1937
    %2048 = vst [vmem:[#allocation5 + $0x10] sm:$0xff] %v2008
    %2049 = vst [vmem:[#allocation5 + $0x18] sm:$0xff] %v2010
    %2050 = vst [vmem:[#allocation5 + $0x20] sm:$0xff] %v1939
    %2051 = vst [vmem:[#allocation5 + $0x28] sm:$0xff] %v1941
    %2052 = vst [vmem:[#allocation5 + $0x30] sm:$0xff] %v2012
    %2053 = vst [vmem:[#allocation5 + $0x38] sm:$0xff] %v2014
    %2054 = vst [vmem:[#allocation5 + $0x40] sm:$0xff] %v1945
    %2055 = vst [vmem:[#allocation5 + $0x48] sm:$0xff] %v1947
    %2056 = vst [vmem:[#allocation5 + $0x50] sm:$0xff] %v2018
    %2057 = vst [vmem:[#allocation5 + $0x58] sm:$0xff] %v2020
    %2058 = vst [vmem:[#allocation5 + $0x60] sm:$0xff] %v1949
    %2059 = vst [vmem:[#allocation5 + $0x68] sm:$0xff] %v1951
    %2060 = vst [vmem:[#allocation5 + $0x70] sm:$0xff] %v2022
    %2061 = vst [vmem:[#allocation5 + $0x78] sm:$0xff] %v2024
    %2062 = vst [vmem:[#allocation5 + $0x80] sm:$0xff] %v1955
    %2063 = vst [vmem:[#allocation5 + $0x88] sm:$0xff] %v1957
    %2064 = vst [vmem:[#allocation5 + $0x90] sm:$0xff] %v2028
    %2065 = vst [vmem:[#allocation5 + $0x98] sm:$0xff] %v2030
    %2066 = vst [vmem:[#allocation5 + $0xa0] sm:$0xff] %v1959
    %2067 = vst [vmem:[#allocation5 + $0xa8] sm:$0xff] %v1961
    %2068 = vst [vmem:[#allocation5 + $0xb0] sm:$0xff] %v2032
    %2069 = vst [vmem:[#allocation5 + $0xb8] sm:$0xff] %v2034
    %2070 = vst [vmem:[#allocation5 + $0xc0] sm:$0xff] %v1965
    %2071 = vst [vmem:[#allocation5 + $0xc8] sm:$0xff] %v1967
    %2072 = vst [vmem:[#allocation5 + $0xd0] sm:$0xff] %v2038
    %2073 = vst [vmem:[#allocation5 + $0xd8] sm:$0xff] %v2040
    %2074 = vst [vmem:[#allocation5 + $0xe0] sm:$0xff] %v1969
    %2075 = vst [vmem:[#allocation5 + $0xe8] sm:$0xff] %v1971
    %2076 = vst [vmem:[#allocation5 + $0xf0] sm:$0xff] %v2042
    %2077 = vst [vmem:[#allocation5 + $0xf8] sm:$0xff] %v2044
    %s2078 = scalar_lea.vmem [#allocation2], 8
    %v2079 = vld [vmem:[%s2078] sm:$0xff]
    %s2080 = scalar_lea.vmem [#allocation3], 8
    %v2081 = vld [vmem:[%s2080] sm:$0xff]
    %v2082 = vld [vmem:[#allocation5] sm:$0xff]
    %v2083 = vld [vmem:[#allocation5 + $0x8] sm:$0xff]
    %v2084 = vld [vmem:[#allocation5 + $0x10] sm:$0xff]
    %v2085 = vld [vmem:[#allocation5 + $0x18] sm:$0xff]
    %v2086 = vpack.c.bf16 %v2079, %v2079
    %v2119 = vunpack.c.l.b16 %v1628
    %v2120 = vunpack.c.h.b16 %v1628
    %v2121 = vunpack.c.l.b16 %v1629
    %v2122 = vunpack.c.h.b16 %v1629
    %v2123 = vunpack.c.l.b16 %v1630
    %v2124 = vunpack.c.h.b16 %v1630
    %v2125 = vunpack.c.l.b16 %v1631
    %v2126 = vunpack.c.h.b16 %v1631
    %v2127 = vunpack.c.l.b16 %v1632
    %v2128 = vunpack.c.h.b16 %v1632
    %v2129 = vunpack.c.l.b16 %v1633
    %v2130 = vunpack.c.h.b16 %v1633
    %v2131 = vunpack.c.l.b16 %v1634
    %v2132 = vunpack.c.h.b16 %v1634
    %v2133 = vunpack.c.l.b16 %v1635
    %v2134 = vunpack.c.h.b16 %v1635
    %v2135 = vunpack.c.l.b16 %v1636
    %v2136 = vunpack.c.h.b16 %v1636
    %v2137 = vunpack.c.l.b16 %v1637
    %v2138 = vunpack.c.h.b16 %v1637
    %v2139 = vunpack.c.l.b16 %v1638
    %v2140 = vunpack.c.h.b16 %v1638
    %v2141 = vunpack.c.l.b16 %v1639
    %v2142 = vunpack.c.h.b16 %v1639
    %v2143 = vunpack.c.l.b16 %v1640
    %v2144 = vunpack.c.h.b16 %v1640
    %v2145 = vunpack.c.l.b16 %v1641
    %v2146 = vunpack.c.h.b16 %v1641
    %v2147 = vunpack.c.l.b16 %v1642
    %v2148 = vunpack.c.h.b16 %v1642
    %v2149 = vunpack.c.l.b16 %v1643
    %v2150 = vunpack.c.h.b16 %v1643
    %v2151 = vunpack.c.l.b16 %v1644
    %v2152 = vunpack.c.h.b16 %v1644
    %v2153 = vunpack.c.l.b16 %v1645
    %v2154 = vunpack.c.h.b16 %v1645
    %v2155 = vunpack.c.l.b16 %v1646
    %v2156 = vunpack.c.h.b16 %v1646
    %v2157 = vunpack.c.l.b16 %v1647
    %v2158 = vunpack.c.h.b16 %v1647
    %v2159 = vunpack.c.l.b16 %v1648
    %v2160 = vunpack.c.h.b16 %v1648
    %v2161 = vunpack.c.l.b16 %v1649
    %v2162 = vunpack.c.h.b16 %v1649
    %v2163 = vunpack.c.l.b16 %v1650
    %v2164 = vunpack.c.h.b16 %v1650
    %v2165 = vunpack.c.l.b16 %v1651
    %v2166 = vunpack.c.h.b16 %v1651
    %v2167 = vunpack.c.l.b16 %v1652
    %v2168 = vunpack.c.h.b16 %v1652
    %v2169 = vunpack.c.l.b16 %v1653
    %v2170 = vunpack.c.h.b16 %v1653
    %v2171 = vunpack.c.l.b16 %v1654
    %v2172 = vunpack.c.h.b16 %v1654
    %v2173 = vunpack.c.l.b16 %v1655
    %v2174 = vunpack.c.h.b16 %v1655
    %v2175 = vunpack.c.l.b16 %v1656
    %v2176 = vunpack.c.h.b16 %v1656
    %v2177 = vunpack.c.l.b16 %v1657
    %v2178 = vunpack.c.h.b16 %v1657
    %v2179 = vunpack.c.l.b16 %v1658
    %v2180 = vunpack.c.h.b16 %v1658
    %v2181 = vunpack.c.l.b16 %v1659
    %v2182 = vunpack.c.h.b16 %v1659
    %v2183 = vpack.c.b16 %v2123, %v2119
    %v2184 = vpack.c.b16 %v2124, %v2120
    %v2185 = vpack.c.b16 %v2125, %v2121
    %v2186 = vpack.c.b16 %v2126, %v2122
    %v2187 = vpack.c.b16 %v2131, %v2127
    %v2188 = vpack.c.b16 %v2132, %v2128
    %v2189 = vpack.c.b16 %v2133, %v2129
    %v2190 = vpack.c.b16 %v2134, %v2130
    %v2191 = vpack.c.b16 %v2139, %v2135
    %v2192 = vpack.c.b16 %v2140, %v2136
    %v2193 = vpack.c.b16 %v2141, %v2137
    %v2194 = vpack.c.b16 %v2142, %v2138
    %v2195 = vpack.c.b16 %v2147, %v2143
    %v2196 = vpack.c.b16 %v2148, %v2144
    %v2197 = vpack.c.b16 %v2149, %v2145
    %v2198 = vpack.c.b16 %v2150, %v2146
    %v2199 = vpack.c.b16 %v2155, %v2151
    %v2200 = vpack.c.b16 %v2156, %v2152
    %v2201 = vpack.c.b16 %v2157, %v2153
    %v2202 = vpack.c.b16 %v2158, %v2154
    %v2203 = vpack.c.b16 %v2163, %v2159
    %v2204 = vpack.c.b16 %v2164, %v2160
    %v2205 = vpack.c.b16 %v2165, %v2161
    %v2206 = vpack.c.b16 %v2166, %v2162
    %v2207 = vpack.c.b16 %v2171, %v2167
    %v2208 = vpack.c.b16 %v2172, %v2168
    %v2209 = vpack.c.b16 %v2173, %v2169
    %v2210 = vpack.c.b16 %v2174, %v2170
    %v2211 = vpack.c.b16 %v2179, %v2175
    %v2212 = vpack.c.b16 %v2180, %v2176
    %v2213 = vpack.c.b16 %v2181, %v2177
    %v2214 = vpack.c.b16 %v2182, %v2178
    %2247 = vmatprep.subr.bf16.mxu0 %v2184
    %2248 = vmatpush1.bf16.msra.mxu0 %v2183
    %2249 = vmatprep.subr.bf16.mxu0 %v2188
    %2250 = vmatpush1.bf16.msra.mxu0 %v2187
    %2251 = vmatprep.subr.bf16.mxu0 %v2192
    %2252 = vmatpush1.bf16.msra.mxu0 %v2191
    %2253 = vmatprep.subr.bf16.mxu0 %v2196
    %2254 = vmatpush1.bf16.msra.mxu0 %v2195
    %2255 = vmatprep.subr.bf16.mxu0 %v2200
    %2256 = vmatpush1.bf16.msra.mxu0 %v2199
    %2257 = vmatprep.subr.bf16.mxu0 %v2204
    %2258 = vmatpush1.bf16.msra.mxu0 %v2203
    %2259 = vmatprep.subr.bf16.mxu0 %v2208
    %2260 = vmatpush1.bf16.msra.mxu0 %v2207
    %2261 = vmatprep.subr.bf16.mxu0 %v2212
    %2262 = vmatpush1.bf16.msra.mxu0 %v2211
    %2263 = vmatprep.subr.bf16.mxu0 0
    %2264 = vmatpush1.bf16.msra.mxu0 0
    %2265 = vmatprep.subr.bf16.mxu0 0
    %2266 = vmatpush1.bf16.msra.mxu0 0
    %2267 = vmatprep.subr.bf16.mxu0 0
    %2268 = vmatpush1.bf16.msra.mxu0 0
    %2269 = vmatprep.subr.bf16.mxu0 0
    %2270 = vmatpush1.bf16.msra.mxu0 0
    %2271 = vmatprep.subr.bf16.mxu0 0
    %2272 = vmatpush1.bf16.msra.mxu0 0
    %2273 = vmatprep.subr.bf16.mxu0 0
    %2274 = vmatpush1.bf16.msra.mxu0 0
    %2275 = vmatprep.subr.bf16.mxu0 0
    %2276 = vmatpush1.bf16.msra.mxu0 0
    %2277 = vmatprep.subr.bf16.mxu0 0
    %2278 = vmatpush1.bf16.msra.mxu0 0
    %2279 = vmatprep.mubr.bf16.mxu0 0
    %2280 = vmatmul.mubr.bf16.gmra.mrb[0].mxu0 %v2086
    %v2281 = vpop.f32.mrb[0].mxu0
    %v2282 = vadd.f32 0.0, %v2281
    %v2283 = vpop.f32.mrb[0].mxu0
    %v2284 = vadd.f32 0.0, %v2283
    %v2285 = vpop.f32.mrb[0].mxu0
    %v2286 = vpop.f32.mrb[0].mxu0
    %2287 = vdwg.mxu0
    %2288 = vmatprep.subr.bf16.mxu0 %v2186
    %2289 = vmatpush1.bf16.msra.mxu0 %v2185
    %2290 = vmatprep.subr.bf16.mxu0 %v2190
    %2291 = vmatpush1.bf16.msra.mxu0 %v2189
    %2292 = vmatprep.subr.bf16.mxu0 %v2194
    %2293 = vmatpush1.bf16.msra.mxu0 %v2193
    %2294 = vmatprep.subr.bf16.mxu0 %v2198
    %2295 = vmatpush1.bf16.msra.mxu0 %v2197
    %2296 = vmatprep.subr.bf16.mxu0 %v2202
    %2297 = vmatpush1.bf16.msra.mxu0 %v2201
    %2298 = vmatprep.subr.bf16.mxu0 %v2206
    %2299 = vmatpush1.bf16.msra.mxu0 %v2205
    %2300 = vmatprep.subr.bf16.mxu0 %v2210
    %2301 = vmatpush1.bf16.msra.mxu0 %v2209
    %2302 = vmatprep.subr.bf16.mxu0 %v2214
    %2303 = vmatpush1.bf16.msra.mxu0 %v2213
    %2304 = vmatprep.subr.bf16.mxu0 0
    %2305 = vmatpush1.bf16.msra.mxu0 0
    %2306 = vmatprep.subr.bf16.mxu0 0
    %2307 = vmatpush1.bf16.msra.mxu0 0
    %2308 = vmatprep.subr.bf16.mxu0 0
    %2309 = vmatpush1.bf16.msra.mxu0 0
    %2310 = vmatprep.subr.bf16.mxu0 0
    %2311 = vmatpush1.bf16.msra.mxu0 0
    %2312 = vmatprep.subr.bf16.mxu0 0
    %2313 = vmatpush1.bf16.msra.mxu0 0
    %2314 = vmatprep.subr.bf16.mxu0 0
    %2315 = vmatpush1.bf16.msra.mxu0 0
    %2316 = vmatprep.subr.bf16.mxu0 0
    %2317 = vmatpush1.bf16.msra.mxu0 0
    %2318 = vmatprep.subr.bf16.mxu0 0
    %2319 = vmatpush1.bf16.msra.mxu0 0
    %2320 = vmatprep.mubr.bf16.mxu0 0
    %2321 = vmatmul.mubr.bf16.gmra.mrb[0].mxu0 %v2086
    %v2322 = vpop.f32.mrb[0].mxu0
    %v2323 = vadd.f32 0.0, %v2322
    %v2324 = vpop.f32.mrb[0].mxu0
    %v2325 = vadd.f32 0.0, %v2324
    %v2326 = vpop.f32.mrb[0].mxu0
    %v2327 = vpop.f32.mrb[0].mxu0
    %2328 = vdwg.mxu0
    %v2329 = vadd.f32 %v2082, %v2282
    %v2330 = vadd.f32 %v2083, %v2284
    %v2331 = vadd.f32 %v2084, %v2323
    %v2332 = vadd.f32 %v2085, %v2325
    %v2333 = vxor.u32 %v2329, 2147483648
    %v2334 = vmul.f32 %v2333, 1.442695
    %v2335 = vpow.pop %v2334
    %v2336 = vadd.f32 %v2335, 1.0
    %v2337 = vrcp.pop %v2336
    %v2338 = vmul.f32 1.0, %v2337
    %v2339 = vxor.u32 %v2330, 2147483648
    %v2340 = vmul.f32 %v2339, 1.442695
    %v2341 = vpow.pop %v2340
    %v2342 = vadd.f32 %v2341, 1.0
    %v2343 = vrcp.pop %v2342
    %v2344 = vmul.f32 1.0, %v2343
    %v2345 = vtanh.pop %v2331
    %v2346 = vxor.u32 %v2332, 2147483648
    %v2347 = vmul.f32 %v2346, 1.442695
    %v2348 = vpow.pop %v2347
    %v2349 = vadd.f32 %v2348, 1.0
    %v2350 = vrcp.pop %v2349
    %v2351 = vmul.f32 1.0, %v2350
    %v2352 = vmul.f32 %v2344, %v2081
    %v2353 = vmul.f32 %v2338, %v2345
    %v2354 = vadd.f32 %v2352, %v2353
    %v2355 = vtanh.pop %v2354
    %v2356 = vmul.f32 %v2351, %v2355
    %v2357 = vld [vmem:[%s791] sm:$0xff]
    %v2358 = vld [vmem:[%s791 + $0x8] sm:$0xff]
    %v2359 = vld [vmem:[%s791 + $0x10] sm:$0xff]
    %v2360 = vld [vmem:[%s791 + $0x18] sm:$0xff]
    %v2361 = vpack.c.bf16 %v2356, %v2356
    %2362 = vmatprep.subr.bf16.mxu0 %v2184
    %2363 = vmatpush1.bf16.msra.mxu0 %v2183
    %2364 = vmatprep.subr.bf16.mxu0 %v2188
    %2365 = vmatpush1.bf16.msra.mxu0 %v2187
    %2366 = vmatprep.subr.bf16.mxu0 %v2192
    %2367 = vmatpush1.bf16.msra.mxu0 %v2191
    %2368 = vmatprep.subr.bf16.mxu0 %v2196
    %2369 = vmatpush1.bf16.msra.mxu0 %v2195
    %2370 = vmatprep.subr.bf16.mxu0 %v2200
    %2371 = vmatpush1.bf16.msra.mxu0 %v2199
    %2372 = vmatprep.subr.bf16.mxu0 %v2204
    %2373 = vmatpush1.bf16.msra.mxu0 %v2203
    %2374 = vmatprep.subr.bf16.mxu0 %v2208
    %2375 = vmatpush1.bf16.msra.mxu0 %v2207
    %2376 = vmatprep.subr.bf16.mxu0 %v2212
    %2377 = vmatpush1.bf16.msra.mxu0 %v2211
    %2378 = vmatprep.subr.bf16.mxu0 0
    %2379 = vmatpush1.bf16.msra.mxu0 0
    %2380 = vmatprep.subr.bf16.mxu0 0
    %2381 = vmatpush1.bf16.msra.mxu0 0
    %2382 = vmatprep.subr.bf16.mxu0 0
    %2383 = vmatpush1.bf16.msra.mxu0 0
    %2384 = vmatprep.subr.bf16.mxu0 0
    %2385 = vmatpush1.bf16.msra.mxu0 0
    %2386 = vmatprep.subr.bf16.mxu0 0
    %2387 = vmatpush1.bf16.msra.mxu0 0
    %2388 = vmatprep.subr.bf16.mxu0 0
    %2389 = vmatpush1.bf16.msra.mxu0 0
    %2390 = vmatprep.subr.bf16.mxu0 0
    %2391 = vmatpush1.bf16.msra.mxu0 0
    %2392 = vmatprep.subr.bf16.mxu0 0
    %2393 = vmatpush1.bf16.msra.mxu0 0
    %2394 = vmatprep.mubr.bf16.mxu0 0
    %2395 = vmatmul.mubr.bf16.gmra.mrb[0].mxu0 %v2361
    %v2396 = vpop.f32.mrb[0].mxu0
    %v2397 = vadd.f32 0.0, %v2396
    %v2398 = vpop.f32.mrb[0].mxu0
    %v2399 = vadd.f32 0.0, %v2398
    %v2400 = vpop.f32.mrb[0].mxu0
    %v2401 = vpop.f32.mrb[0].mxu0
    %2402 = vdwg.mxu0
    %2403 = vmatprep.subr.bf16.mxu0 %v2186
    %2404 = vmatpush1.bf16.msra.mxu0 %v2185
    %2405 = vmatprep.subr.bf16.mxu0 %v2190
    %2406 = vmatpush1.bf16.msra.mxu0 %v2189
    %2407 = vmatprep.subr.bf16.mxu0 %v2194
    %2408 = vmatpush1.bf16.msra.mxu0 %v2193
    %2409 = vmatprep.subr.bf16.mxu0 %v2198
    %2410 = vmatpush1.bf16.msra.mxu0 %v2197
    %2411 = vmatprep.subr.bf16.mxu0 %v2202
    %2412 = vmatpush1.bf16.msra.mxu0 %v2201
    %2413 = vmatprep.subr.bf16.mxu0 %v2206
    %2414 = vmatpush1.bf16.msra.mxu0 %v2205
    %2415 = vmatprep.subr.bf16.mxu0 %v2210
    %2416 = vmatpush1.bf16.msra.mxu0 %v2209
    %2417 = vmatprep.subr.bf16.mxu0 %v2214
    %2418 = vmatpush1.bf16.msra.mxu0 %v2213
    %2419 = vmatprep.subr.bf16.mxu0 0
    %2420 = vmatpush1.bf16.msra.mxu0 0
    %2421 = vmatprep.subr.bf16.mxu0 0
    %2422 = vmatpush1.bf16.msra.mxu0 0
    %2423 = vmatprep.subr.bf16.mxu0 0
    %2424 = vmatpush1.bf16.msra.mxu0 0
    %2425 = vmatprep.subr.bf16.mxu0 0
    %2426 = vmatpush1.bf16.msra.mxu0 0
    %2427 = vmatprep.subr.bf16.mxu0 0
    %2428 = vmatpush1.bf16.msra.mxu0 0
    %2429 = vmatprep.subr.bf16.mxu0 0
    %2430 = vmatpush1.bf16.msra.mxu0 0
    %2431 = vmatprep.subr.bf16.mxu0 0
    %2432 = vmatpush1.bf16.msra.mxu0 0
    %2433 = vmatprep.subr.bf16.mxu0 0
    %2434 = vmatpush1.bf16.msra.mxu0 0
    %2435 = vmatprep.mubr.bf16.mxu0 0
    %2436 = vmatmul.mubr.bf16.gmra.mrb[0].mxu0 %v2361
    %v2437 = vpop.f32.mrb[0].mxu0
    %v2438 = vadd.f32 0.0, %v2437
    %v2439 = vpop.f32.mrb[0].mxu0
    %v2440 = vadd.f32 0.0, %v2439
    %v2441 = vpop.f32.mrb[0].mxu0
    %v2442 = vpop.f32.mrb[0].mxu0
    %2443 = vdwg.mxu0
    %v2444 = vadd.f32 %v2357, %v2397
    %v2445 = vadd.f32 %v2358, %v2399
    %v2446 = vadd.f32 %v2359, %v2438
    %v2447 = vadd.f32 %v2360, %v2440
    %v2448 = vxor.u32 %v2444, 2147483648
    %v2449 = vmul.f32 %v2448, 1.442695
    %v2450 = vpow.pop %v2449
    %v2451 = vadd.f32 %v2450, 1.0
    %v2452 = vrcp.pop %v2451
    %v2453 = vmul.f32 1.0, %v2452
    %v2454 = vxor.u32 %v2445, 2147483648
    %v2455 = vmul.f32 %v2454, 1.442695
    %v2456 = vpow.pop %v2455
    %v2457 = vadd.f32 %v2456, 1.0
    %v2458 = vrcp.pop %v2457
    %v2459 = vmul.f32 1.0, %v2458
    %v2460 = vtanh.pop %v2446
    %v2461 = vxor.u32 %v2447, 2147483648
    %v2462 = vmul.f32 %v2461, 1.442695
    %v2463 = vpow.pop %v2462
    %v2464 = vadd.f32 %v2463, 1.0
    %v2465 = vrcp.pop %v2464
    %v2466 = vmul.f32 1.0, %v2465
    %v2467 = vmul.f32 %v2459, %v2354
    %v2468 = vmul.f32 %v2453, %v2460
    %v2469 = vadd.f32 %v2467, %v2468
    %v2470 = vtanh.pop %v2469
    %v2471 = vmul.f32 %v2466, %v2470
    %v2472 = vld [vmem:[%s909] sm:$0xff]
    %v2473 = vld [vmem:[%s909 + $0x8] sm:$0xff]
    %v2474 = vld [vmem:[%s909 + $0x10] sm:$0xff]
    %v2475 = vld [vmem:[%s909 + $0x18] sm:$0xff]
    %v2476 = vpack.c.bf16 %v2471, %v2471
    %2477 = vmatprep.subr.bf16.mxu0 %v2184
    %2478 = vmatpush1.bf16.msra.mxu0 %v2183
    %2479 = vmatprep.subr.bf16.mxu0 %v2188
    %2480 = vmatpush1.bf16.msra.mxu0 %v2187
    %2481 = vmatprep.subr.bf16.mxu0 %v2192
    %2482 = vmatpush1.bf16.msra.mxu0 %v2191
    %2483 = vmatprep.subr.bf16.mxu0 %v2196
    %2484 = vmatpush1.bf16.msra.mxu0 %v2195
    %2485 = vmatprep.subr.bf16.mxu0 %v2200
    %2486 = vmatpush1.bf16.msra.mxu0 %v2199
    %2487 = vmatprep.subr.bf16.mxu0 %v2204
    %2488 = vmatpush1.bf16.msra.mxu0 %v2203
    %2489 = vmatprep.subr.bf16.mxu0 %v2208
    %2490 = vmatpush1.bf16.msra.mxu0 %v2207
    %2491 = vmatprep.subr.bf16.mxu0 %v2212
    %2492 = vmatpush1.bf16.msra.mxu0 %v2211
    %2493 = vmatprep.subr.bf16.mxu0 0
    %2494 = vmatpush1.bf16.msra.mxu0 0
    %2495 = vmatprep.subr.bf16.mxu0 0
    %2496 = vmatpush1.bf16.msra.mxu0 0
    %2497 = vmatprep.subr.bf16.mxu0 0
    %2498 = vmatpush1.bf16.msra.mxu0 0
    %2499 = vmatprep.subr.bf16.mxu0 0
    %2500 = vmatpush1.bf16.msra.mxu0 0
    %2501 = vmatprep.subr.bf16.mxu0 0
    %2502 = vmatpush1.bf16.msra.mxu0 0
    %2503 = vmatprep.subr.bf16.mxu0 0
    %2504 = vmatpush1.bf16.msra.mxu0 0
    %2505 = vmatprep.subr.bf16.mxu0 0
    %2506 = vmatpush1.bf16.msra.mxu0 0
    %2507 = vmatprep.subr.bf16.mxu0 0
    %2508 = vmatpush1.bf16.msra.mxu0 0
    %2509 = vmatprep.mubr.bf16.mxu0 0
    %2510 = vmatmul.mubr.bf16.gmra.mrb[0].mxu0 %v2476
    %v2511 = vpop.f32.mrb[0].mxu0
    %v2512 = vadd.f32 0.0, %v2511
    %v2513 = vpop.f32.mrb[0].mxu0
    %v2514 = vadd.f32 0.0, %v2513
    %v2515 = vpop.f32.mrb[0].mxu0
    %v2516 = vpop.f32.mrb[0].mxu0
    %2517 = vdwg.mxu0
    %2518 = vmatprep.subr.bf16.mxu0 %v2186
    %2519 = vmatpush1.bf16.msra.mxu0 %v2185
    %2520 = vmatprep.subr.bf16.mxu0 %v2190
    %2521 = vmatpush1.bf16.msra.mxu0 %v2189
    %2522 = vmatprep.subr.bf16.mxu0 %v2194
    %2523 = vmatpush1.bf16.msra.mxu0 %v2193
    %2524 = vmatprep.subr.bf16.mxu0 %v2198
    %2525 = vmatpush1.bf16.msra.mxu0 %v2197
    %2526 = vmatprep.subr.bf16.mxu0 %v2202
    %2527 = vmatpush1.bf16.msra.mxu0 %v2201
    %2528 = vmatprep.subr.bf16.mxu0 %v2206
    %2529 = vmatpush1.bf16.msra.mxu0 %v2205
    %2530 = vmatprep.subr.bf16.mxu0 %v2210
    %2531 = vmatpush1.bf16.msra.mxu0 %v2209
    %2532 = vmatprep.subr.bf16.mxu0 %v2214
    %2533 = vmatpush1.bf16.msra.mxu0 %v2213
    %2534 = vmatprep.subr.bf16.mxu0 0
    %2535 = vmatpush1.bf16.msra.mxu0 0
    %2536 = vmatprep.subr.bf16.mxu0 0
    %2537 = vmatpush1.bf16.msra.mxu0 0
    %2538 = vmatprep.subr.bf16.mxu0 0
    %2539 = vmatpush1.bf16.msra.mxu0 0
    %2540 = vmatprep.subr.bf16.mxu0 0
    %2541 = vmatpush1.bf16.msra.mxu0 0
    %2542 = vmatprep.subr.bf16.mxu0 0
    %2543 = vmatpush1.bf16.msra.mxu0 0
    %2544 = vmatprep.subr.bf16.mxu0 0
    %2545 = vmatpush1.bf16.msra.mxu0 0
    %2546 = vmatprep.subr.bf16.mxu0 0
    %2547 = vmatpush1.bf16.msra.mxu0 0
    %2548 = vmatprep.subr.bf16.mxu0 0
    %2549 = vmatpush1.bf16.msra.mxu0 0
    %2550 = vmatprep.mubr.bf16.mxu0 0
    %2551 = vmatmul.mubr.bf16.gmra.mrb[0].mxu0 %v2476
    %v2552 = vpop.f32.mrb[0].mxu0
    %v2553 = vadd.f32 0.0, %v2552
    %v2554 = vpop.f32.mrb[0].mxu0
    %v2555 = vadd.f32 0.0, %v2554
    %v2556 = vpop.f32.mrb[0].mxu0
    %v2557 = vpop.f32.mrb[0].mxu0
    %2558 = vdwg.mxu0
    %v2559 = vadd.f32 %v2472, %v2512
    %v2560 = vadd.f32 %v2473, %v2514
    %v2561 = vadd.f32 %v2474, %v2553
    %v2562 = vadd.f32 %v2475, %v2555
    %v2563 = vxor.u32 %v2559, 2147483648
    %v2564 = vmul.f32 %v2563, 1.442695
    %v2565 = vpow.pop %v2564
    %v2566 = vadd.f32 %v2565, 1.0
    %v2567 = vrcp.pop %v2566
    %v2568 = vmul.f32 1.0, %v2567
    %v2569 = vxor.u32 %v2560, 2147483648
    %v2570 = vmul.f32 %v2569, 1.442695
    %v2571 = vpow.pop %v2570
    %v2572 = vadd.f32 %v2571, 1.0
    %v2573 = vrcp.pop %v2572
    %v2574 = vmul.f32 1.0, %v2573
    %v2575 = vtanh.pop %v2561
    %v2576 = vxor.u32 %v2562, 2147483648
    %v2577 = vmul.f32 %v2576, 1.442695
    %v2578 = vpow.pop %v2577
    %v2579 = vadd.f32 %v2578, 1.0
    %v2580 = vrcp.pop %v2579
    %v2581 = vmul.f32 1.0, %v2580
    %v2582 = vmul.f32 %v2574, %v2469
    %v2583 = vmul.f32 %v2568, %v2575
    %v2584 = vadd.f32 %v2582, %v2583
    %v2585 = vtanh.pop %v2584
    %v2586 = vmul.f32 %v2581, %v2585
    %v2587 = vld [vmem:[%s1027] sm:$0xff]
    %v2588 = vld [vmem:[%s1027 + $0x8] sm:$0xff]
    %v2589 = vld [vmem:[%s1027 + $0x10] sm:$0xff]
    %v2590 = vld [vmem:[%s1027 + $0x18] sm:$0xff]
    %v2591 = vpack.c.bf16 %v2586, %v2586
    %2592 = vmatprep.subr.bf16.mxu0 %v2184
    %2593 = vmatpush1.bf16.msra.mxu0 %v2183
    %2594 = vmatprep.subr.bf16.mxu0 %v2188
    %2595 = vmatpush1.bf16.msra.mxu0 %v2187
    %2596 = vmatprep.subr.bf16.mxu0 %v2192
    %2597 = vmatpush1.bf16.msra.mxu0 %v2191
    %2598 = vmatprep.subr.bf16.mxu0 %v2196
    %2599 = vmatpush1.bf16.msra.mxu0 %v2195
    %2600 = vmatprep.subr.bf16.mxu0 %v2200
    %2601 = vmatpush1.bf16.msra.mxu0 %v2199
    %2602 = vmatprep.subr.bf16.mxu0 %v2204
    %2603 = vmatpush1.bf16.msra.mxu0 %v2203
    %2604 = vmatprep.subr.bf16.mxu0 %v2208
    %2605 = vmatpush1.bf16.msra.mxu0 %v2207
    %2606 = vmatprep.subr.bf16.mxu0 %v2212
    %2607 = vmatpush1.bf16.msra.mxu0 %v2211
    %2608 = vmatprep.subr.bf16.mxu0 0
    %2609 = vmatpush1.bf16.msra.mxu0 0
    %2610 = vmatprep.subr.bf16.mxu0 0
    %2611 = vmatpush1.bf16.msra.mxu0 0
    %2612 = vmatprep.subr.bf16.mxu0 0
    %2613 = vmatpush1.bf16.msra.mxu0 0
    %2614 = vmatprep.subr.bf16.mxu0 0
    %2615 = vmatpush1.bf16.msra.mxu0 0
    %2616 = vmatprep.subr.bf16.mxu0 0
    %2617 = vmatpush1.bf16.msra.mxu0 0
    %2618 = vmatprep.subr.bf16.mxu0 0
    %2619 = vmatpush1.bf16.msra.mxu0 0
    %2620 = vmatprep.subr.bf16.mxu0 0
    %2621 = vmatpush1.bf16.msra.mxu0 0
    %2622 = vmatprep.subr.bf16.mxu0 0
    %2623 = vmatpush1.bf16.msra.mxu0 0
    %2624 = vmatprep.mubr.bf16.mxu0 0
    %2625 = vmatmul.mubr.bf16.gmra.mrb[0].mxu0 %v2591
    %v2626 = vpop.f32.mrb[0].mxu0
    %v2627 = vadd.f32 0.0, %v2626
    %v2628 = vpop.f32.mrb[0].mxu0
    %v2629 = vadd.f32 0.0, %v2628
    %v2630 = vpop.f32.mrb[0].mxu0
    %v2631 = vpop.f32.mrb[0].mxu0
    %2632 = vdwg.mxu0
    %2633 = vmatprep.subr.bf16.mxu0 %v2186
    %2634 = vmatpush1.bf16.msra.mxu0 %v2185
    %2635 = vmatprep.subr.bf16.mxu0 %v2190
    %2636 = vmatpush1.bf16.msra.mxu0 %v2189
    %2637 = vmatprep.subr.bf16.mxu0 %v2194
    %2638 = vmatpush1.bf16.msra.mxu0 %v2193
    %2639 = vmatprep.subr.bf16.mxu0 %v2198
    %2640 = vmatpush1.bf16.msra.mxu0 %v2197
    %2641 = vmatprep.subr.bf16.mxu0 %v2202
    %2642 = vmatpush1.bf16.msra.mxu0 %v2201
    %2643 = vmatprep.subr.bf16.mxu0 %v2206
    %2644 = vmatpush1.bf16.msra.mxu0 %v2205
    %2645 = vmatprep.subr.bf16.mxu0 %v2210
    %2646 = vmatpush1.bf16.msra.mxu0 %v2209
    %2647 = vmatprep.subr.bf16.mxu0 %v2214
    %2648 = vmatpush1.bf16.msra.mxu0 %v2213
    %2649 = vmatprep.subr.bf16.mxu0 0
    %2650 = vmatpush1.bf16.msra.mxu0 0
    %2651 = vmatprep.subr.bf16.mxu0 0
    %2652 = vmatpush1.bf16.msra.mxu0 0
    %2653 = vmatprep.subr.bf16.mxu0 0
    %2654 = vmatpush1.bf16.msra.mxu0 0
    %2655 = vmatprep.subr.bf16.mxu0 0
    %2656 = vmatpush1.bf16.msra.mxu0 0
    %2657 = vmatprep.subr.bf16.mxu0 0
    %2658 = vmatpush1.bf16.msra.mxu0 0
    %2659 = vmatprep.subr.bf16.mxu0 0
    %2660 = vmatpush1.bf16.msra.mxu0 0
    %2661 = vmatprep.subr.bf16.mxu0 0
    %2662 = vmatpush1.bf16.msra.mxu0 0
    %2663 = vmatprep.subr.bf16.mxu0 0
    %2664 = vmatpush1.bf16.msra.mxu0 0
    %2665 = vmatprep.mubr.bf16.mxu0 0
    %2666 = vmatmul.mubr.bf16.gmra.mrb[0].mxu0 %v2591
    %v2667 = vpop.f32.mrb[0].mxu0
    %v2668 = vadd.f32 0.0, %v2667
    %v2669 = vpop.f32.mrb[0].mxu0
    %v2670 = vadd.f32 0.0, %v2669
    %v2671 = vpop.f32.mrb[0].mxu0
    %v2672 = vpop.f32.mrb[0].mxu0
    %2673 = vdwg.mxu0
    %v2674 = vadd.f32 %v2587, %v2627
    %v2675 = vadd.f32 %v2588, %v2629
    %v2676 = vadd.f32 %v2589, %v2668
    %v2677 = vadd.f32 %v2590, %v2670
    %v2678 = vxor.u32 %v2674, 2147483648
    %v2679 = vmul.f32 %v2678, 1.442695
    %v2680 = vpow.pop %v2679
    %v2681 = vadd.f32 %v2680, 1.0
    %v2682 = vrcp.pop %v2681
    %v2683 = vmul.f32 1.0, %v2682
    %v2684 = vxor.u32 %v2675, 2147483648
    %v2685 = vmul.f32 %v2684, 1.442695
    %v2686 = vpow.pop %v2685
    %v2687 = vadd.f32 %v2686, 1.0
    %v2688 = vrcp.pop %v2687
    %v2689 = vmul.f32 1.0, %v2688
    %v2690 = vtanh.pop %v2676
    %v2691 = vxor.u32 %v2677, 2147483648
    %v2692 = vmul.f32 %v2691, 1.442695
    %v2693 = vpow.pop %v2692
    %v2694 = vadd.f32 %v2693, 1.0
    %v2695 = vrcp.pop %v2694
    %v2696 = vmul.f32 1.0, %v2695
    %v2697 = vmul.f32 %v2689, %v2584
    %v2698 = vmul.f32 %v2683, %v2690
    %v2699 = vadd.f32 %v2697, %v2698
    %v2700 = vtanh.pop %v2699
    %v2701 = vmul.f32 %v2696, %v2700
    %v2702 = vld [vmem:[%s1145] sm:$0xff]
    %v2703 = vld [vmem:[%s1145 + $0x8] sm:$0xff]
    %v2704 = vld [vmem:[%s1145 + $0x10] sm:$0xff]
    %v2705 = vld [vmem:[%s1145 + $0x18] sm:$0xff]
    %v2706 = vpack.c.bf16 %v2701, %v2701
    %2707 = vmatprep.subr.bf16.mxu0 %v2184
    %2708 = vmatpush1.bf16.msra.mxu0 %v2183
    %2709 = vmatprep.subr.bf16.mxu0 %v2188
    %2710 = vmatpush1.bf16.msra.mxu0 %v2187
    %2711 = vmatprep.subr.bf16.mxu0 %v2192
    %2712 = vmatpush1.bf16.msra.mxu0 %v2191
    %2713 = vmatprep.subr.bf16.mxu0 %v2196
    %2714 = vmatpush1.bf16.msra.mxu0 %v2195
    %2715 = vmatprep.subr.bf16.mxu0 %v2200
    %2716 = vmatpush1.bf16.msra.mxu0 %v2199
    %2717 = vmatprep.subr.bf16.mxu0 %v2204
    %2718 = vmatpush1.bf16.msra.mxu0 %v2203
    %2719 = vmatprep.subr.bf16.mxu0 %v2208
    %2720 = vmatpush1.bf16.msra.mxu0 %v2207
    %2721 = vmatprep.subr.bf16.mxu0 %v2212
    %2722 = vmatpush1.bf16.msra.mxu0 %v2211
    %2723 = vmatprep.subr.bf16.mxu0 0
    %2724 = vmatpush1.bf16.msra.mxu0 0
    %2725 = vmatprep.subr.bf16.mxu0 0
    %2726 = vmatpush1.bf16.msra.mxu0 0
    %2727 = vmatprep.subr.bf16.mxu0 0
    %2728 = vmatpush1.bf16.msra.mxu0 0
    %2729 = vmatprep.subr.bf16.mxu0 0
    %2730 = vmatpush1.bf16.msra.mxu0 0
    %2731 = vmatprep.subr.bf16.mxu0 0
    %2732 = vmatpush1.bf16.msra.mxu0 0
    %2733 = vmatprep.subr.bf16.mxu0 0
    %2734 = vmatpush1.bf16.msra.mxu0 0
    %2735 = vmatprep.subr.bf16.mxu0 0
    %2736 = vmatpush1.bf16.msra.mxu0 0
    %2737 = vmatprep.subr.bf16.mxu0 0
    %2738 = vmatpush1.bf16.msra.mxu0 0
    %2739 = vmatprep.mubr.bf16.mxu0 0
    %2740 = vmatmul.mubr.bf16.gmra.mrb[0].mxu0 %v2706
    %v2741 = vpop.f32.mrb[0].mxu0
    %v2742 = vadd.f32 0.0, %v2741
    %v2743 = vpop.f32.mrb[0].mxu0
    %v2744 = vadd.f32 0.0, %v2743
    %v2745 = vpop.f32.mrb[0].mxu0
    %v2746 = vpop.f32.mrb[0].mxu0
    %2747 = vdwg.mxu0
    %2748 = vmatprep.subr.bf16.mxu0 %v2186
    %2749 = vmatpush1.bf16.msra.mxu0 %v2185
    %2750 = vmatprep.subr.bf16.mxu0 %v2190
    %2751 = vmatpush1.bf16.msra.mxu0 %v2189
    %2752 = vmatprep.subr.bf16.mxu0 %v2194
    %2753 = vmatpush1.bf16.msra.mxu0 %v2193
    %2754 = vmatprep.subr.bf16.mxu0 %v2198
    %2755 = vmatpush1.bf16.msra.mxu0 %v2197
    %2756 = vmatprep.subr.bf16.mxu0 %v2202
    %2757 = vmatpush1.bf16.msra.mxu0 %v2201
    %2758 = vmatprep.subr.bf16.mxu0 %v2206
    %2759 = vmatpush1.bf16.msra.mxu0 %v2205
    %2760 = vmatprep.subr.bf16.mxu0 %v2210
    %2761 = vmatpush1.bf16.msra.mxu0 %v2209
    %2762 = vmatprep.subr.bf16.mxu0 %v2214
    %2763 = vmatpush1.bf16.msra.mxu0 %v2213
    %2764 = vmatprep.subr.bf16.mxu0 0
    %2765 = vmatpush1.bf16.msra.mxu0 0
    %2766 = vmatprep.subr.bf16.mxu0 0
    %2767 = vmatpush1.bf16.msra.mxu0 0
    %2768 = vmatprep.subr.bf16.mxu0 0
    %2769 = vmatpush1.bf16.msra.mxu0 0
    %2770 = vmatprep.subr.bf16.mxu0 0
    %2771 = vmatpush1.bf16.msra.mxu0 0
    %2772 = vmatprep.subr.bf16.mxu0 0
    %2773 = vmatpush1.bf16.msra.mxu0 0
    %2774 = vmatprep.subr.bf16.mxu0 0
    %2775 = vmatpush1.bf16.msra.mxu0 0
    %2776 = vmatprep.subr.bf16.mxu0 0
    %2777 = vmatpush1.bf16.msra.mxu0 0
    %2778 = vmatprep.subr.bf16.mxu0 0
    %2779 = vmatpush1.bf16.msra.mxu0 0
    %2780 = vmatprep.mubr.bf16.mxu0 0
    %2781 = vmatmul.mubr.bf16.gmra.mrb[0].mxu0 %v2706
    %v2782 = vpop.f32.mrb[0].mxu0
    %v2783 = vadd.f32 0.0, %v2782
    %v2784 = vpop.f32.mrb[0].mxu0
    %v2785 = vadd.f32 0.0, %v2784
    %v2786 = vpop.f32.mrb[0].mxu0
    %v2787 = vpop.f32.mrb[0].mxu0
    %2788 = vdwg.mxu0
    %v2789 = vadd.f32 %v2702, %v2742
    %v2790 = vadd.f32 %v2703, %v2744
    %v2791 = vadd.f32 %v2704, %v2783
    %v2792 = vadd.f32 %v2705, %v2785
    %v2793 = vxor.u32 %v2789, 2147483648
    %v2794 = vmul.f32 %v2793, 1.442695
    %v2795 = vpow.pop %v2794
    %v2796 = vadd.f32 %v2795, 1.0
    %v2797 = vrcp.pop %v2796
    %v2798 = vmul.f32 1.0, %v2797
    %v2799 = vxor.u32 %v2790, 2147483648
    %v2800 = vmul.f32 %v2799, 1.442695
    %v2801 = vpow.pop %v2800
    %v2802 = vadd.f32 %v2801, 1.0
    %v2803 = vrcp.pop %v2802
    %v2804 = vmul.f32 1.0, %v2803
    %v2805 = vtanh.pop %v2791
    %v2806 = vxor.u32 %v2792, 2147483648
    %v2807 = vmul.f32 %v2806, 1.442695
    %v2808 = vpow.pop %v2807
    %v2809 = vadd.f32 %v2808, 1.0
    %v2810 = vrcp.pop %v2809
    %v2811 = vmul.f32 1.0, %v2810
    %v2812 = vmul.f32 %v2804, %v2699
    %v2813 = vmul.f32 %v2798, %v2805
    %v2814 = vadd.f32 %v2812, %v2813
    %v2815 = vtanh.pop %v2814
    %v2816 = vmul.f32 %v2811, %v2815
    %v2817 = vld [vmem:[%s1263] sm:$0xff]
    %v2818 = vld [vmem:[%s1263 + $0x8] sm:$0xff]
    %v2819 = vld [vmem:[%s1263 + $0x10] sm:$0xff]
    %v2820 = vld [vmem:[%s1263 + $0x18] sm:$0xff]
    %v2821 = vpack.c.bf16 %v2816, %v2816
    %2822 = vmatprep.subr.bf16.mxu0 %v2184
    %2823 = vmatpush1.bf16.msra.mxu0 %v2183
    %2824 = vmatprep.subr.bf16.mxu0 %v2188
    %2825 = vmatpush1.bf16.msra.mxu0 %v2187
    %2826 = vmatprep.subr.bf16.mxu0 %v2192
    %2827 = vmatpush1.bf16.msra.mxu0 %v2191
    %2828 = vmatprep.subr.bf16.mxu0 %v2196
    %2829 = vmatpush1.bf16.msra.mxu0 %v2195
    %2830 = vmatprep.subr.bf16.mxu0 %v2200
    %2831 = vmatpush1.bf16.msra.mxu0 %v2199
    %2832 = vmatprep.subr.bf16.mxu0 %v2204
    %2833 = vmatpush1.bf16.msra.mxu0 %v2203
    %2834 = vmatprep.subr.bf16.mxu0 %v2208
    %2835 = vmatpush1.bf16.msra.mxu0 %v2207
    %2836 = vmatprep.subr.bf16.mxu0 %v2212
    %2837 = vmatpush1.bf16.msra.mxu0 %v2211
    %2838 = vmatprep.subr.bf16.mxu0 0
    %2839 = vmatpush1.bf16.msra.mxu0 0
    %2840 = vmatprep.subr.bf16.mxu0 0
    %2841 = vmatpush1.bf16.msra.mxu0 0
    %2842 = vmatprep.subr.bf16.mxu0 0
    %2843 = vmatpush1.bf16.msra.mxu0 0
    %2844 = vmatprep.subr.bf16.mxu0 0
    %2845 = vmatpush1.bf16.msra.mxu0 0
    %2846 = vmatprep.subr.bf16.mxu0 0
    %2847 = vmatpush1.bf16.msra.mxu0 0
    %2848 = vmatprep.subr.bf16.mxu0 0
    %2849 = vmatpush1.bf16.msra.mxu0 0
    %2850 = vmatprep.subr.bf16.mxu0 0
    %2851 = vmatpush1.bf16.msra.mxu0 0
    %2852 = vmatprep.subr.bf16.mxu0 0
    %2853 = vmatpush1.bf16.msra.mxu0 0
    %2854 = vmatprep.mubr.bf16.mxu0 0
    %2855 = vmatmul.mubr.bf16.gmra.mrb[0].mxu0 %v2821
    %v2856 = vpop.f32.mrb[0].mxu0
    %v2857 = vadd.f32 0.0, %v2856
    %v2858 = vpop.f32.mrb[0].mxu0
    %v2859 = vadd.f32 0.0, %v2858
    %v2860 = vpop.f32.mrb[0].mxu0
    %v2861 = vpop.f32.mrb[0].mxu0
    %2862 = vdwg.mxu0
    %2863 = vmatprep.subr.bf16.mxu0 %v2186
    %2864 = vmatpush1.bf16.msra.mxu0 %v2185
    %2865 = vmatprep.subr.bf16.mxu0 %v2190
    %2866 = vmatpush1.bf16.msra.mxu0 %v2189
    %2867 = vmatprep.subr.bf16.mxu0 %v2194
    %2868 = vmatpush1.bf16.msra.mxu0 %v2193
    %2869 = vmatprep.subr.bf16.mxu0 %v2198
    %2870 = vmatpush1.bf16.msra.mxu0 %v2197
    %2871 = vmatprep.subr.bf16.mxu0 %v2202
    %2872 = vmatpush1.bf16.msra.mxu0 %v2201
    %2873 = vmatprep.subr.bf16.mxu0 %v2206
    %2874 = vmatpush1.bf16.msra.mxu0 %v2205
    %2875 = vmatprep.subr.bf16.mxu0 %v2210
    %2876 = vmatpush1.bf16.msra.mxu0 %v2209
    %2877 = vmatprep.subr.bf16.mxu0 %v2214
    %2878 = vmatpush1.bf16.msra.mxu0 %v2213
    %2879 = vmatprep.subr.bf16.mxu0 0
    %2880 = vmatpush1.bf16.msra.mxu0 0
    %2881 = vmatprep.subr.bf16.mxu0 0
    %2882 = vmatpush1.bf16.msra.mxu0 0
    %2883 = vmatprep.subr.bf16.mxu0 0
    %2884 = vmatpush1.bf16.msra.mxu0 0
    %2885 = vmatprep.subr.bf16.mxu0 0
    %2886 = vmatpush1.bf16.msra.mxu0 0
    %2887 = vmatprep.subr.bf16.mxu0 0
    %2888 = vmatpush1.bf16.msra.mxu0 0
    %2889 = vmatprep.subr.bf16.mxu0 0
    %2890 = vmatpush1.bf16.msra.mxu0 0
    %2891 = vmatprep.subr.bf16.mxu0 0
    %2892 = vmatpush1.bf16.msra.mxu0 0
    %2893 = vmatprep.subr.bf16.mxu0 0
    %2894 = vmatpush1.bf16.msra.mxu0 0
    %2895 = vmatprep.mubr.bf16.mxu0 0
    %2896 = vmatmul.mubr.bf16.gmra.mrb[0].mxu0 %v2821
    %v2897 = vpop.f32.mrb[0].mxu0
    %v2898 = vadd.f32 0.0, %v2897
    %v2899 = vpop.f32.mrb[0].mxu0
    %v2900 = vadd.f32 0.0, %v2899
    %v2901 = vpop.f32.mrb[0].mxu0
    %v2902 = vpop.f32.mrb[0].mxu0
    %2903 = vdwg.mxu0
    %v2904 = vadd.f32 %v2817, %v2857
    %v2905 = vadd.f32 %v2818, %v2859
    %v2906 = vadd.f32 %v2819, %v2898
    %v2907 = vadd.f32 %v2820, %v2900
    %v2908 = vxor.u32 %v2904, 2147483648
    %v2909 = vmul.f32 %v2908, 1.442695
    %v2910 = vpow.pop %v2909
    %v2911 = vadd.f32 %v2910, 1.0
    %v2912 = vrcp.pop %v2911
    %v2913 = vmul.f32 1.0, %v2912
    %v2914 = vxor.u32 %v2905, 2147483648
    %v2915 = vmul.f32 %v2914, 1.442695
    %v2916 = vpow.pop %v2915
    %v2917 = vadd.f32 %v2916, 1.0
    %v2918 = vrcp.pop %v2917
    %v2919 = vmul.f32 1.0, %v2918
    %v2920 = vtanh.pop %v2906
    %v2921 = vxor.u32 %v2907, 2147483648
    %v2922 = vmul.f32 %v2921, 1.442695
    %v2923 = vpow.pop %v2922
    %v2924 = vadd.f32 %v2923, 1.0
    %v2925 = vrcp.pop %v2924
    %v2926 = vmul.f32 1.0, %v2925
    %v2927 = vmul.f32 %v2919, %v2814
    %v2928 = vmul.f32 %v2913, %v2920
    %v2929 = vadd.f32 %v2927, %v2928
    %v2930 = vtanh.pop %v2929
    %v2931 = vmul.f32 %v2926, %v2930
    %v2932 = vld [vmem:[%s1381] sm:$0xff]
    %v2933 = vld [vmem:[%s1381 + $0x8] sm:$0xff]
    %v2934 = vld [vmem:[%s1381 + $0x10] sm:$0xff]
    %v2935 = vld [vmem:[%s1381 + $0x18] sm:$0xff]
    %v2936 = vpack.c.bf16 %v2931, %v2931
    %2937 = vmatprep.subr.bf16.mxu0 %v2184
    %2938 = vmatpush1.bf16.msra.mxu0 %v2183
    %2939 = vmatprep.subr.bf16.mxu0 %v2188
    %2940 = vmatpush1.bf16.msra.mxu0 %v2187
    %2941 = vmatprep.subr.bf16.mxu0 %v2192
    %2942 = vmatpush1.bf16.msra.mxu0 %v2191
    %2943 = vmatprep.subr.bf16.mxu0 %v2196
    %2944 = vmatpush1.bf16.msra.mxu0 %v2195
    %2945 = vmatprep.subr.bf16.mxu0 %v2200
    %2946 = vmatpush1.bf16.msra.mxu0 %v2199
    %2947 = vmatprep.subr.bf16.mxu0 %v2204
    %2948 = vmatpush1.bf16.msra.mxu0 %v2203
    %2949 = vmatprep.subr.bf16.mxu0 %v2208
    %2950 = vmatpush1.bf16.msra.mxu0 %v2207
    %2951 = vmatprep.subr.bf16.mxu0 %v2212
    %2952 = vmatpush1.bf16.msra.mxu0 %v2211
    %2953 = vmatprep.subr.bf16.mxu0 0
    %2954 = vmatpush1.bf16.msra.mxu0 0
    %2955 = vmatprep.subr.bf16.mxu0 0
    %2956 = vmatpush1.bf16.msra.mxu0 0
    %2957 = vmatprep.subr.bf16.mxu0 0
    %2958 = vmatpush1.bf16.msra.mxu0 0
    %2959 = vmatprep.subr.bf16.mxu0 0
    %2960 = vmatpush1.bf16.msra.mxu0 0
    %2961 = vmatprep.subr.bf16.mxu0 0
    %2962 = vmatpush1.bf16.msra.mxu0 0
    %2963 = vmatprep.subr.bf16.mxu0 0
    %2964 = vmatpush1.bf16.msra.mxu0 0
    %2965 = vmatprep.subr.bf16.mxu0 0
    %2966 = vmatpush1.bf16.msra.mxu0 0
    %2967 = vmatprep.subr.bf16.mxu0 0
    %2968 = vmatpush1.bf16.msra.mxu0 0
    %2969 = vmatprep.mubr.bf16.mxu0 0
    %2970 = vmatmul.mubr.bf16.gmra.mrb[0].mxu0 %v2936
    %v2971 = vpop.f32.mrb[0].mxu0
    %v2972 = vadd.f32 0.0, %v2971
    %v2973 = vpop.f32.mrb[0].mxu0
    %v2974 = vadd.f32 0.0, %v2973
    %v2975 = vpop.f32.mrb[0].mxu0
    %v2976 = vpop.f32.mrb[0].mxu0
    %2977 = vdwg.mxu0
    %2978 = vmatprep.subr.bf16.mxu0 %v2186
    %2979 = vmatpush1.bf16.msra.mxu0 %v2185
    %2980 = vmatprep.subr.bf16.mxu0 %v2190
    %2981 = vmatpush1.bf16.msra.mxu0 %v2189
    %2982 = vmatprep.subr.bf16.mxu0 %v2194
    %2983 = vmatpush1.bf16.msra.mxu0 %v2193
    %2984 = vmatprep.subr.bf16.mxu0 %v2198
    %2985 = vmatpush1.bf16.msra.mxu0 %v2197
    %2986 = vmatprep.subr.bf16.mxu0 %v2202
    %2987 = vmatpush1.bf16.msra.mxu0 %v2201
    %2988 = vmatprep.subr.bf16.mxu0 %v2206
    %2989 = vmatpush1.bf16.msra.mxu0 %v2205
    %2990 = vmatprep.subr.bf16.mxu0 %v2210
    %2991 = vmatpush1.bf16.msra.mxu0 %v2209
    %2992 = vmatprep.subr.bf16.mxu0 %v2214
    %2993 = vmatpush1.bf16.msra.mxu0 %v2213
    %2994 = vmatprep.subr.bf16.mxu0 0
    %2995 = vmatpush1.bf16.msra.mxu0 0
    %2996 = vmatprep.subr.bf16.mxu0 0
    %2997 = vmatpush1.bf16.msra.mxu0 0
    %2998 = vmatprep.subr.bf16.mxu0 0
    %2999 = vmatpush1.bf16.msra.mxu0 0
    %3000 = vmatprep.subr.bf16.mxu0 0
    %3001 = vmatpush1.bf16.msra.mxu0 0
    %3002 = vmatprep.subr.bf16.mxu0 0
    %3003 = vmatpush1.bf16.msra.mxu0 0
    %3004 = vmatprep.subr.bf16.mxu0 0
    %3005 = vmatpush1.bf16.msra.mxu0 0
    %3006 = vmatprep.subr.bf16.mxu0 0
    %3007 = vmatpush1.bf16.msra.mxu0 0
    %3008 = vmatprep.subr.bf16.mxu0 0
    %3009 = vmatpush1.bf16.msra.mxu0 0
    %3010 = vmatprep.mubr.bf16.mxu0 0
    %3011 = vmatmul.mubr.bf16.gmra.mrb[0].mxu0 %v2936
    %v3012 = vpop.f32.mrb[0].mxu0
    %v3013 = vadd.f32 0.0, %v3012
    %v3014 = vpop.f32.mrb[0].mxu0
    %v3015 = vadd.f32 0.0, %v3014
    %v3016 = vpop.f32.mrb[0].mxu0
    %v3017 = vpop.f32.mrb[0].mxu0
    %3018 = vdwg.mxu0
    %v3019 = vadd.f32 %v2932, %v2972
    %v3020 = vadd.f32 %v2933, %v2974
    %v3021 = vadd.f32 %v2934, %v3013
    %v3022 = vadd.f32 %v2935, %v3015
    %v3023 = vxor.u32 %v3019, 2147483648
    %v3024 = vmul.f32 %v3023, 1.442695
    %v3025 = vpow.pop %v3024
    %v3026 = vadd.f32 %v3025, 1.0
    %v3027 = vrcp.pop %v3026
    %v3028 = vmul.f32 1.0, %v3027
    %v3029 = vxor.u32 %v3020, 2147483648
    %v3030 = vmul.f32 %v3029, 1.442695
    %v3031 = vpow.pop %v3030
    %v3032 = vadd.f32 %v3031, 1.0
    %v3033 = vrcp.pop %v3032
    %v3034 = vmul.f32 1.0, %v3033
    %v3035 = vtanh.pop %v3021
    %v3036 = vxor.u32 %v3022, 2147483648
    %v3037 = vmul.f32 %v3036, 1.442695
    %v3038 = vpow.pop %v3037
    %v3039 = vadd.f32 %v3038, 1.0
    %v3040 = vrcp.pop %v3039
    %v3041 = vmul.f32 1.0, %v3040
    %v3042 = vmul.f32 %v3034, %v2929
    %v3043 = vmul.f32 %v3028, %v3035
    %v3044 = vadd.f32 %v3042, %v3043
    %v3045 = vtanh.pop %v3044
    %v3046 = vmul.f32 %v3041, %v3045
    %v3047 = vld [vmem:[%s1499] sm:$0xff]
    %v3048 = vld [vmem:[%s1499 + $0x8] sm:$0xff]
    %v3049 = vld [vmem:[%s1499 + $0x10] sm:$0xff]
    %v3050 = vld [vmem:[%s1499 + $0x18] sm:$0xff]
    %v3051 = vpack.c.bf16 %v3046, %v3046
    %3052 = vmatprep.subr.bf16.mxu0 %v2184
    %3053 = vmatpush1.bf16.msra.mxu0 %v2183
    %3054 = vmatprep.subr.bf16.mxu0 %v2188
    %3055 = vmatpush1.bf16.msra.mxu0 %v2187
    %3056 = vmatprep.subr.bf16.mxu0 %v2192
    %3057 = vmatpush1.bf16.msra.mxu0 %v2191
    %3058 = vmatprep.subr.bf16.mxu0 %v2196
    %3059 = vmatpush1.bf16.msra.mxu0 %v2195
    %3060 = vmatprep.subr.bf16.mxu0 %v2200
    %3061 = vmatpush1.bf16.msra.mxu0 %v2199
    %3062 = vmatprep.subr.bf16.mxu0 %v2204
    %3063 = vmatpush1.bf16.msra.mxu0 %v2203
    %3064 = vmatprep.subr.bf16.mxu0 %v2208
    %3065 = vmatpush1.bf16.msra.mxu0 %v2207
    %3066 = vmatprep.subr.bf16.mxu0 %v2212
    %3067 = vmatpush1.bf16.msra.mxu0 %v2211
    %3068 = vmatprep.subr.bf16.mxu0 0
    %3069 = vmatpush1.bf16.msra.mxu0 0
    %3070 = vmatprep.subr.bf16.mxu0 0
    %3071 = vmatpush1.bf16.msra.mxu0 0
    %3072 = vmatprep.subr.bf16.mxu0 0
    %3073 = vmatpush1.bf16.msra.mxu0 0
    %3074 = vmatprep.subr.bf16.mxu0 0
    %3075 = vmatpush1.bf16.msra.mxu0 0
    %3076 = vmatprep.subr.bf16.mxu0 0
    %3077 = vmatpush1.bf16.msra.mxu0 0
    %3078 = vmatprep.subr.bf16.mxu0 0
    %3079 = vmatpush1.bf16.msra.mxu0 0
    %3080 = vmatprep.subr.bf16.mxu0 0
    %3081 = vmatpush1.bf16.msra.mxu0 0
    %3082 = vmatprep.subr.bf16.mxu0 0
    %3083 = vmatpush1.bf16.msra.mxu0 0
    %3084 = vmatprep.mubr.bf16.mxu0 0
    %3085 = vmatmul.mubr.bf16.gmra.mrb[0].mxu0 %v3051
    %v3086 = vpop.f32.mrb[0].mxu0
    %v3087 = vadd.f32 0.0, %v3086
    %v3088 = vpop.f32.mrb[0].mxu0
    %v3089 = vadd.f32 0.0, %v3088
    %v3090 = vpop.f32.mrb[0].mxu0
    %v3091 = vpop.f32.mrb[0].mxu0
    %3092 = vdwg.mxu0
    %3093 = vmatprep.subr.bf16.mxu0 %v2186
    %3094 = vmatpush1.bf16.msra.mxu0 %v2185
    %3095 = vmatprep.subr.bf16.mxu0 %v2190
    %3096 = vmatpush1.bf16.msra.mxu0 %v2189
    %3097 = vmatprep.subr.bf16.mxu0 %v2194
    %3098 = vmatpush1.bf16.msra.mxu0 %v2193
    %3099 = vmatprep.subr.bf16.mxu0 %v2198
    %3100 = vmatpush1.bf16.msra.mxu0 %v2197
    %3101 = vmatprep.subr.bf16.mxu0 %v2202
    %3102 = vmatpush1.bf16.msra.mxu0 %v2201
    %3103 = vmatprep.subr.bf16.mxu0 %v2206
    %3104 = vmatpush1.bf16.msra.mxu0 %v2205
    %3105 = vmatprep.subr.bf16.mxu0 %v2210
    %3106 = vmatpush1.bf16.msra.mxu0 %v2209
    %3107 = vmatprep.subr.bf16.mxu0 %v2214
    %3108 = vmatpush1.bf16.msra.mxu0 %v2213
    %3109 = vmatprep.subr.bf16.mxu0 0
    %3110 = vmatpush1.bf16.msra.mxu0 0
    %3111 = vmatprep.subr.bf16.mxu0 0
    %3112 = vmatpush1.bf16.msra.mxu0 0
    %3113 = vmatprep.subr.bf16.mxu0 0
    %3114 = vmatpush1.bf16.msra.mxu0 0
    %3115 = vmatprep.subr.bf16.mxu0 0
    %3116 = vmatpush1.bf16.msra.mxu0 0
    %3117 = vmatprep.subr.bf16.mxu0 0
    %3118 = vmatpush1.bf16.msra.mxu0 0
    %3119 = vmatprep.subr.bf16.mxu0 0
    %3120 = vmatpush1.bf16.msra.mxu0 0
    %3121 = vmatprep.subr.bf16.mxu0 0
    %3122 = vmatpush1.bf16.msra.mxu0 0
    %3123 = vmatprep.subr.bf16.mxu0 0
    %3124 = vmatpush1.bf16.msra.mxu0 0
    %3125 = vmatprep.mubr.bf16.mxu0 0
    %3126 = vmatmul.mubr.bf16.gmra.mrb[0].mxu0 %v3051
    %v3127 = vpop.f32.mrb[0].mxu0
    %v3128 = vadd.f32 0.0, %v3127
    %v3129 = vpop.f32.mrb[0].mxu0
    %v3130 = vadd.f32 0.0, %v3129
    %v3131 = vpop.f32.mrb[0].mxu0
    %v3132 = vpop.f32.mrb[0].mxu0
    %3133 = vdwg.mxu0
    %v3134 = vadd.f32 %v3047, %v3087
    %v3135 = vadd.f32 %v3048, %v3089
    %v3136 = vadd.f32 %v3049, %v3128
    %v3137 = vadd.f32 %v3050, %v3130
    %v3138 = vxor.u32 %v3134, 2147483648
    %v3139 = vmul.f32 %v3138, 1.442695
    %v3140 = vpow.pop %v3139
    %v3141 = vadd.f32 %v3140, 1.0
    %v3142 = vrcp.pop %v3141
    %v3143 = vmul.f32 1.0, %v3142
    %v3144 = vxor.u32 %v3135, 2147483648
    %v3145 = vmul.f32 %v3144, 1.442695
    %v3146 = vpow.pop %v3145
    %v3147 = vadd.f32 %v3146, 1.0
    %v3148 = vrcp.pop %v3147
    %v3149 = vmul.f32 1.0, %v3148
    %v3150 = vtanh.pop %v3136
    %v3151 = vxor.u32 %v3137, 2147483648
    %v3152 = vmul.f32 %v3151, 1.442695
    %v3153 = vpow.pop %v3152
    %v3154 = vadd.f32 %v3153, 1.0
    %v3155 = vrcp.pop %v3154
    %v3156 = vmul.f32 1.0, %v3155
    %v3157 = vmul.f32 %v3149, %v3044
    %v3158 = vmul.f32 %v3143, %v3150
    %v3159 = vadd.f32 %v3157, %v3158
    %v3160 = vtanh.pop %v3159
    %v3161 = vmul.f32 %v3156, %v3160
    %3162 = vst [vmem:[%s2078] sm:$0xff] %v3161
    %3163 = vst [vmem:[%s2080] sm:$0xff] %v3159
    // Predicated region
    $region30: #{lstm_language_model_forward.2} parent=1 // pred_check
      %p3164 = pneg %p48
    $region31: #{lstm_language_model_forward.2} parent=1 // pred_check_branch
      %3166 = sbr.rel (%p3164) target = $region33
    $region32: #{lstm_language_model_forward.2} parent=1 // pred_region
      %v3167 = vld [vmem:[#allocation2] sm:$0xff]
      %v3168 = vld [vmem:[#allocation2 + $0x8] sm:$0xff]
      %3169 = vst [vmem:[%s4] sm:$0xff] %v3167
      %3170 = vst [vmem:[%s4 + $0x8] sm:$0xff] %v3168
      %v3171 = vld [vmem:[#allocation3] sm:$0xff]
      %v3172 = vld [vmem:[#allocation3 + $0x8] sm:$0xff]
      %3173 = vst [vmem:[%s5] sm:$0xff] %v3171
      %3174 = vst [vmem:[%s5 + $0x8] sm:$0xff] %v3172
    $region33: #{lstm_language_model_forward.2} parent=1 // pred_fallthru
      _
    // Predicated region
    $region34: #{lstm_language_model_forward.2} parent=1 // pred_check
      _
    $region35: #{lstm_language_model_forward.2} parent=1 // pred_check_branch
      %3176 = sbr.rel (0) target = $region37
    $region36: #{lstm_language_model_forward.2} parent=1 // pred_region
      _
    $region37: #{lstm_language_model_forward.2} parent=1 // pred_fallthru
      _
    // Predicated region
    $region38: #{lstm_language_model_forward.2} parent=1 // pred_check
      _
    $region39: #{lstm_language_model_forward.2} parent=1 // pred_check_branch
      %3178 = sbr.rel (0) target = $region41
    $region40: #{lstm_language_model_forward.2} parent=1 // pred_region
      _
    $region41: #{lstm_language_model_forward.2} parent=1 // pred_fallthru
      _
    // Predicated region
    $region42: #{lstm_language_model_forward.2} parent=1 // pred_check
      _
    $region43: #{lstm_language_model_forward.2} parent=1 // pred_check_branch
      %3180 = sbr.rel (0) target = $region45
    $region44: #{lstm_language_model_forward.2} parent=1 // pred_region
      _
    $region45: #{lstm_language_model_forward.2} parent=1 // pred_fallthru
      _
    // Predicated region
    $region46: #{lstm_language_model_forward.2} parent=1 // pred_check
      _
    $region47: #{lstm_language_model_forward.2} parent=1 // pred_check_branch
      %3182 = sbr.rel (0) target = $region49
    $region48: #{lstm_language_model_forward.2} parent=1 // pred_region
      _
    $region49: #{lstm_language_model_forward.2} parent=1 // pred_fallthru
      _
    %3183 = vsyncpa [#allocation7], 1
    %3184 = vsyncpa [#allocation9], 1

</llo_original>
